<compile_context>
chip_gen: v7x
topology: tpu7x:2x2x1
jax: 0.10.0
libtpu: 0.0.40
codegen_flags: <defaults>
</compile_context>

<pallas_src>
import functools

import jax
import jax.numpy as jnp
from jax.experimental import pallas as pl
from jax.experimental.pallas import tpu as pltpu

# ---- scaled-down config consistent with the module structure ----
# (original spec: n_embed=384, n_head=6, n_layer=6, block_size=256, vocab=len(chars))
VOCAB_SIZE = 65
N_EMBED = 64
N_HEAD = 4
HEAD_SIZE = N_EMBED // N_HEAD
N_LAYER = 2
BLOCK_SIZE = 16
LN_EPS = 1e-5
VOCAB_PAD = 128          # lane-dense LM head (65 -> 128, zero-padded)
NEG_INF = -1e30          # finite large-negative mask bias (robust softmax)
# TODO(synk): dropout (p=0.2) is stochastic in train mode; implemented as identity (eval).


def _layer_norm(x, g, b):
    mean = jnp.mean(x, axis=-1, keepdims=True)
    var = jnp.mean(jnp.square(x - mean), axis=-1, keepdims=True)
    return (x - mean) * jax.lax.rsqrt(var + LN_EPS) * g + b


def _fused_forward_kernel(
    x_ref,
    ln1_g_ref, ln1_b_ref, wqkv_ref, proj_w_ref, proj_b_ref,
    ln2_g_ref, ln2_b_ref, fc1_w_ref, fc1_b_ref, fc2_w_ref, fc2_b_ref,
    lnf_g_ref, lnf_b_ref, lm_w_ref, lm_b_ref,
    o_ref, *, n_layer, n_head, head_size, scale,
):
    x = x_ref[...]                      # (T, C) rows of the current batch element
    T = x.shape[0]
    hd = n_head * head_size

    # Causal additive bias, built in-kernel (tiny VPU work; saves one input DMA).
    row = jax.lax.broadcasted_iota(jnp.int32, (T, T), 0)
    col = jax.lax.broadcasted_iota(jnp.int32, (T, T), 1)
    mask = jnp.where(col <= row, 0.0, NEG_INF).astype(jnp.float32)

    for l in range(n_layer):            # static unroll over layers (L=2)
        # ---- self-attention sub-block: x = x + proj(attn(ln1(x))) ----
        xl = _layer_norm(x, ln1_g_ref[l], ln1_b_ref[l])
        qkv = jnp.dot(xl, wqkv_ref[l], preferred_element_type=jnp.float32)  # (T, 3*H*Dh)
        q = qkv[:, 0 * hd:1 * hd]
        k = qkv[:, 1 * hd:2 * hd]
        v = qkv[:, 2 * hd:3 * hd]

        head_outs = []
        for h in range(n_head):         # static unroll, tiny 2-D dots (no 3-D reshapes)
            qh = q[:, h * head_size:(h + 1) * head_size]
            kh = k[:, h * head_size:(h + 1) * head_size]
            vh = v[:, h * head_size:(h + 1) * head_size]
            # wei = q @ k^T * n_embed**-0.5 (matches the reference: C = n_embed)
            wei = jax.lax.dot_general(
                qh, kh, (((1,), (1,)), ((), ())),
                preferred_element_type=jnp.float32) * scale + mask
            wei = wei - jnp.max(wei, axis=-1, keepdims=True)
            p = jnp.exp(wei)
            p = p / jnp.sum(p, axis=-1, keepdims=True)
            head_outs.append(jnp.dot(p, vh, preferred_element_type=jnp.float32))
        sa = jnp.concatenate(head_outs, axis=-1)                       # (T, C)
        sa = jnp.dot(sa, proj_w_ref[l],
                     preferred_element_type=jnp.float32) + proj_b_ref[l]
        x = x + sa

        # ---- feed-forward sub-block: x = x + fc2(relu(fc1(ln2(x)))) ----
        xl2 = _layer_norm(x, ln2_g_ref[l], ln2_b_ref[l])
        h1 = jnp.dot(xl2, fc1_w_ref[l],
                     preferred_element_type=jnp.float32) + fc1_b_ref[l]
        h1 = jnp.maximum(h1, 0.0)
        ff = jnp.dot(h1, fc2_w_ref[l],
                     preferred_element_type=jnp.float32) + fc2_b_ref[l]
        x = x + ff

    # ---- final LayerNorm + LM head (padded to 128 lanes, unmasked stores) ----
    xf = _layer_norm(x, lnf_g_ref[...], lnf_b_ref[...])
    logits = jnp.dot(xf, lm_w_ref[...],
                     preferred_element_type=jnp.float32) + lm_b_ref[...]
    o_ref[...] = logits.astype(o_ref.dtype)


def bigram_forward(idx, params):
    """idx: (B, T) int32 tokens -> logits (B, T, VOCAB_SIZE). (targets=None path)"""
    B, T = idx.shape
    C = N_EMBED

    # Embedding gather + positional add (data-dependent gather; small XLA glue).
    tok = jnp.take(params['tok_emb'], idx.reshape(-1), axis=0).reshape(B, T, C)
    pos = params['pos_emb'][:T]
    x = (tok + pos[None, :, :]).reshape(B * T, C)

    kern = functools.partial(
        _fused_forward_kernel,
        n_layer=N_LAYER, n_head=N_HEAD, head_size=HEAD_SIZE,
        scale=C ** (-0.5))

    full3 = lambda b: (0, 0, 0)
    full2 = lambda b: (0, 0)

    logits_pad = pl.pallas_call(
        kern,
        out_shape=jax.ShapeDtypeStruct((B * T, VOCAB_PAD), jnp.float32),
        grid=(B,),
        in_specs=[
            pl.BlockSpec((T, C), lambda b: (b, 0)),            # x rows for this batch
            pl.BlockSpec((N_LAYER, 1, C), full3),              # ln1_g
            pl.BlockSpec((N_LAYER, 1, C), full3),              # ln1_b
            pl.BlockSpec((N_LAYER, C, 3 * C), full3),          # wqkv (q|k|v, heads packed)
            pl.BlockSpec((N_LAYER, C, C), full3),              # proj_w
            pl.BlockSpec((N_LAYER, 1, C), full3),              # proj_b
            pl.BlockSpec((N_LAYER, 1, C), full3),              # ln2_g
            pl.BlockSpec((N_LAYER, 1, C), full3),              # ln2_b
            pl.BlockSpec((N_LAYER, C, 4 * C), full3),          # fc1_w
            pl.BlockSpec((N_LAYER, 1, 4 * C), full3),          # fc1_b
            pl.BlockSpec((N_LAYER, 4 * C, C), full3),          # fc2_w
            pl.BlockSpec((N_LAYER, 1, C), full3),              # fc2_b
            pl.BlockSpec((1, C), full2),                       # lnf_g
            pl.BlockSpec((1, C), full2),                       # lnf_b
            pl.BlockSpec((C, VOCAB_PAD), full2),               # lm_w (128-padded)
            pl.BlockSpec((1, VOCAB_PAD), full2),               # lm_b (128-padded)
        ],
        out_specs=pl.BlockSpec((T, VOCAB_PAD), lambda b: (b, 0)),
        compiler_params=pltpu.CompilerParams(
            dimension_semantics=("parallel",),                 # batch across TCs on v7x
            vmem_limit_bytes=8 * 1024 * 1024),
    )(x,
      params['ln1_g'], params['ln1_b'], params['wqkv'],
      params['proj_w'], params['proj_b'],
      params['ln2_g'], params['ln2_b'],
      params['fc1_w'], params['fc1_b'], params['fc2_w'], params['fc2_b'],
      params['lnf_g'], params['lnf_b'], params['lm_w_pad'], params['lm_b_pad'])

    return logits_pad[:, :VOCAB_SIZE].reshape(B, T, VOCAB_SIZE)


def init_params(key):
    def nrm(k, shape, s=0.02):
        return (s * jax.random.normal(k, shape)).astype(jnp.float32)

    C = N_EMBED
    keys = jax.random.split(key, 4)
    lkeys = jax.random.split(keys[3], N_LAYER)

    wqkv, proj_w, proj_b = [], [], []
    fc1_w, fc1_b, fc2_w, fc2_b = [], [], [], []
    for li in range(N_LAYER):
        lk = jax.random.split(lkeys[li], 6)
        # Per-head q/k/v weights (C, Dh), packed as one (C, 3*H*Dh) matrix:
        # columns = [q_h0..q_h3 | k_h0..k_h3 | v_h0..v_h3]
        wq = nrm(lk[0], (N_HEAD, C, HEAD_SIZE))
        wk = nrm(lk[1], (N_HEAD, C, HEAD_SIZE))
        wv = nrm(lk[2], (N_HEAD, C, HEAD_SIZE))
        pack = lambda w: jnp.concatenate([w[h] for h in range(N_HEAD)], axis=-1)
        wqkv.append(jnp.concatenate([pack(wq), pack(wk), pack(wv)], axis=-1))
        proj_w.append(nrm(lk[3], (C, C)))
        proj_b.append(jnp.zeros((1, C), jnp.float32))
        fc1_w.append(nrm(lk[4], (C, 4 * C)))
        fc1_b.append(jnp.zeros((1, 4 * C), jnp.float32))
        fc2_w.append(nrm(lk[5], (4 * C, C)))
        fc2_b.append(jnp.zeros((1, C), jnp.float32))

    lm_w = nrm(keys[2], (C, VOCAB_SIZE))
    lm_w_pad = jnp.zeros((C, VOCAB_PAD), jnp.float32).at[:, :VOCAB_SIZE].set(lm_w)
    lm_b_pad = jnp.zeros((1, VOCAB_PAD), jnp.float32)

    params = dict(
        tok_emb=nrm(keys[0], (VOCAB_SIZE, C)),
        pos_emb=nrm(keys[1], (BLOCK_SIZE, C)),
        ln1_g=jnp.ones((N_LAYER, 1, C), jnp.float32),
        ln1_b=jnp.zeros((N_LAYER, 1, C), jnp.float32),
        ln2_g=jnp.ones((N_LAYER, 1, C), jnp.float32),
        ln2_b=jnp.zeros((N_LAYER, 1, C), jnp.float32),
        lnf_g=jnp.ones((1, C), jnp.float32),
        lnf_b=jnp.zeros((1, C), jnp.float32),
        wqkv=jnp.stack(wqkv),
        proj_w=jnp.stack(proj_w), proj_b=jnp.stack(proj_b),
        fc1_w=jnp.stack(fc1_w), fc1_b=jnp.stack(fc1_b),
        fc2_w=jnp.stack(fc2_w), fc2_b=jnp.stack(fc2_b),
        lm_w_pad=lm_w_pad, lm_b_pad=lm_b_pad,
    )
    return params


if __name__ == "__main__":
    key = jax.random.PRNGKey(0)
    pkey, ikey = jax.random.split(key)
    params = init_params(pkey)

    B, T = 2, 16                                          # T <= BLOCK_SIZE, multiple of 8
    idx = jax.random.randint(ikey, (B, T), 0, VOCAB_SIZE, dtype=jnp.int32)

    logits = jax.jit(bigram_forward)(idx, params)
    logits = jax.block_until_ready(logits)

    assert logits.shape == (B, T, VOCAB_SIZE), logits.shape
    assert bool(jnp.all(jnp.isfinite(logits)))
    print("KERNEL_OK")
</pallas_src>

<mosaic_0001>
module attributes {stable_mosaic.version = 11 : i64} {
  func.func @_fused_forward_kernel(%arg0: i32, %arg1: memref<16x64xf32, #tpu.memory_space<vmem>>, %arg2: memref<2x1x64xf32, #tpu.memory_space<vmem>>, %arg3: memref<2x1x64xf32, #tpu.memory_space<vmem>>, %arg4: memref<2x64x192xf32, #tpu.memory_space<vmem>>, %arg5: memref<2x64x64xf32, #tpu.memory_space<vmem>>, %arg6: memref<2x1x64xf32, #tpu.memory_space<vmem>>, %arg7: memref<2x1x64xf32, #tpu.memory_space<vmem>>, %arg8: memref<2x1x64xf32, #tpu.memory_space<vmem>>, %arg9: memref<2x64x256xf32, #tpu.memory_space<vmem>>, %arg10: memref<2x1x256xf32, #tpu.memory_space<vmem>>, %arg11: memref<2x256x64xf32, #tpu.memory_space<vmem>>, %arg12: memref<2x1x64xf32, #tpu.memory_space<vmem>>, %arg13: memref<1x64xf32, #tpu.memory_space<vmem>>, %arg14: memref<1x64xf32, #tpu.memory_space<vmem>>, %arg15: memref<64x128xf32, #tpu.memory_space<vmem>>, %arg16: memref<1x128xf32, #tpu.memory_space<vmem>>, %arg17: memref<16x128xf32, #tpu.memory_space<vmem>>) attributes {dimension_semantics = [#tpu.dimension_semantics<parallel>], iteration_bounds = array<i64: 2>, scalar_prefetch = 0 : i64, scratch_operands = 0 : i64, tpu.core_type = #tpu.core_type<tc>, window_params = [{transform_indices = @transform_0, window_bounds = array<i64: 16, 64>}, {pipeline_mode = #tpu.pipeline_mode<synchronous>, transform_indices = @transform_1, window_bounds = array<i64: 2, 1, 64>}, {pipeline_mode = #tpu.pipeline_mode<synchronous>, transform_indices = @transform_2, window_bounds = array<i64: 2, 1, 64>}, {pipeline_mode = #tpu.pipeline_mode<synchronous>, transform_indices = @transform_3, window_bounds = array<i64: 2, 64, 192>}, {pipeline_mode = #tpu.pipeline_mode<synchronous>, transform_indices = @transform_4, window_bounds = array<i64: 2, 64, 64>}, {pipeline_mode = #tpu.pipeline_mode<synchronous>, transform_indices = @transform_5, window_bounds = array<i64: 2, 1, 64>}, {pipeline_mode = #tpu.pipeline_mode<synchronous>, transform_indices = @transform_6, window_bounds = array<i64: 2, 1, 64>}, {pipeline_mode = #tpu.pipeline_mode<synchronous>, transform_indices = @transform_7, window_bounds = array<i64: 2, 1, 64>}, {pipeline_mode = #tpu.pipeline_mode<synchronous>, transform_indices = @transform_8, window_bounds = array<i64: 2, 64, 256>}, {pipeline_mode = #tpu.pipeline_mode<synchronous>, transform_indices = @transform_9, window_bounds = array<i64: 2, 1, 256>}, {pipeline_mode = #tpu.pipeline_mode<synchronous>, transform_indices = @transform_10, window_bounds = array<i64: 2, 256, 64>}, {pipeline_mode = #tpu.pipeline_mode<synchronous>, transform_indices = @transform_11, window_bounds = array<i64: 2, 1, 64>}, {pipeline_mode = #tpu.pipeline_mode<synchronous>, transform_indices = @transform_12, window_bounds = array<i64: 1, 64>}, {pipeline_mode = #tpu.pipeline_mode<synchronous>, transform_indices = @transform_13, window_bounds = array<i64: 1, 64>}, {pipeline_mode = #tpu.pipeline_mode<synchronous>, transform_indices = @transform_14, window_bounds = array<i64: 64, 128>}, {pipeline_mode = #tpu.pipeline_mode<synchronous>, transform_indices = @transform_15, window_bounds = array<i64: 1, 128>}, {transform_indices = @transform_16, window_bounds = array<i64: 16, 128>}]} {
    %c0 = arith.constant 0 : index
    %c0_0 = arith.constant 0 : index
    %0 = vector.load %arg1[%c0, %c0_0] : memref<16x64xf32, #tpu.memory_space<vmem>>, vector<16x64xf32>
    %1 = tpu.iota {dimensions = array<i32: 0>} : vector<16x16xi32>
    %2 = tpu.iota {dimensions = array<i32: 1>} : vector<16x16xi32>
    %3 = arith.cmpi sle, %2, %1 : vector<16x16xi32>
    %cst = arith.constant 0.000000e+00 : f32
    %cst_1 = arith.constant -1.000000e+30 : f32
    %4 = vector.broadcast %cst : f32 to vector<16x16xf32>
    %5 = vector.broadcast %cst_1 : f32 to vector<16x16xf32>
    %6 = arith.select %3, %4, %5 : vector<16x16xi1>, vector<16x16xf32>
    %c0_2 = arith.constant 0 : index
    %c0_3 = arith.constant 0 : index
    %c0_4 = arith.constant 0 : index
    %7 = vector.load %arg2[%c0_2, %c0_3, %c0_4] : memref<2x1x64xf32, #tpu.memory_space<vmem>>, vector<1x1x64xf32>
    %8 = vector.shape_cast %7 : vector<1x1x64xf32> to vector<1x64xf32>
    %c0_5 = arith.constant 0 : index
    %c0_6 = arith.constant 0 : index
    %c0_7 = arith.constant 0 : index
    %9 = vector.load %arg3[%c0_5, %c0_6, %c0_7] : memref<2x1x64xf32, #tpu.memory_space<vmem>>, vector<1x1x64xf32>
    %10 = vector.shape_cast %9 : vector<1x1x64xf32> to vector<1x64xf32>
    %cst_8 = arith.constant dense<0.000000e+00> : vector<16xf32>
    %11 = vector.multi_reduction <add>, %0, %cst_8 [1] : vector<16x64xf32> to vector<16xf32>
    %12 = vector.shape_cast %11 : vector<16xf32> to vector<16x1xf32>
    %cst_9 = arith.constant 6.400000e+01 : f32
    %13 = vector.broadcast %cst_9 : f32 to vector<16x1xf32>
    %14 = arith.divf %12, %13 : vector<16x1xf32>
    %15 = vector.broadcast %14 : vector<16x1xf32> to vector<16x64xf32>
    %16 = arith.subf %0, %15 : vector<16x64xf32>
    %17 = arith.mulf %16, %16 : vector<16x64xf32>
    %cst_10 = arith.constant dense<0.000000e+00> : vector<16xf32>
    %18 = vector.multi_reduction <add>, %17, %cst_10 [1] : vector<16x64xf32> to vector<16xf32>
    %19 = vector.shape_cast %18 : vector<16xf32> to vector<16x1xf32>
    %cst_11 = arith.constant 6.400000e+01 : f32
    %20 = vector.broadcast %cst_11 : f32 to vector<16x1xf32>
    %21 = arith.divf %19, %20 : vector<16x1xf32>
    %22 = vector.broadcast %14 : vector<16x1xf32> to vector<16x64xf32>
    %23 = arith.subf %0, %22 : vector<16x64xf32>
    %cst_12 = arith.constant 9.99999974E-6 : f32
    %24 = vector.broadcast %cst_12 : f32 to vector<16x1xf32>
    %25 = arith.addf %21, %24 : vector<16x1xf32>
    %26 = math.rsqrt %25 : vector<16x1xf32>
    %27 = vector.broadcast %26 : vector<16x1xf32> to vector<16x64xf32>
    %28 = arith.mulf %23, %27 : vector<16x64xf32>
    %29 = vector.broadcast %8 : vector<1x64xf32> to vector<16x64xf32>
    %30 = arith.mulf %28, %29 : vector<16x64xf32>
    %31 = vector.broadcast %10 : vector<1x64xf32> to vector<16x64xf32>
    %32 = arith.addf %30, %31 : vector<16x64xf32>
    %c0_13 = arith.constant 0 : index
    %c0_14 = arith.constant 0 : index
    %c0_15 = arith.constant 0 : index
    %33 = vector.load %arg4[%c0_13, %c0_14, %c0_15] : memref<2x64x192xf32, #tpu.memory_space<vmem>>, vector<1x64x192xf32>
    %34 = vector.shape_cast %33 : vector<1x64x192xf32> to vector<64x192xf32>
    %cst_16 = arith.constant dense<0.000000e+00> : vector<16x192xf32>
    %35 = tpu.matmul %32, %34, %cst_16 {dimension_numbers = #tpu.dot_dimension_numbers<[1], [0], [0], [1], [0, 0, 1, 1], [], []>} : vector<16x64xf32>, vector<64x192xf32>, vector<16x192xf32> -> vector<16x192xf32>
    %36 = vector.extract_strided_slice %35 {offsets = [0, 0], sizes = [16, 64], strides = [1, 1]} : vector<16x192xf32> to vector<16x64xf32>
    %37 = vector.extract_strided_slice %35 {offsets = [0, 64], sizes = [16, 64], strides = [1, 1]} : vector<16x192xf32> to vector<16x64xf32>
    %38 = vector.extract_strided_slice %35 {offsets = [0, 128], sizes = [16, 64], strides = [1, 1]} : vector<16x192xf32> to vector<16x64xf32>
    %39 = vector.extract_strided_slice %36 {offsets = [0, 0], sizes = [16, 16], strides = [1, 1]} : vector<16x64xf32> to vector<16x16xf32>
    %40 = vector.extract_strided_slice %37 {offsets = [0, 0], sizes = [16, 16], strides = [1, 1]} : vector<16x64xf32> to vector<16x16xf32>
    %41 = vector.extract_strided_slice %38 {offsets = [0, 0], sizes = [16, 16], strides = [1, 1]} : vector<16x64xf32> to vector<16x16xf32>
    %cst_17 = arith.constant dense<0.000000e+00> : vector<16x16xf32>
    %42 = tpu.matmul %39, %40, %cst_17 {dimension_numbers = #tpu.dot_dimension_numbers<[1], [1], [0], [0], [0, 0, 1, 0], [], []>} : vector<16x16xf32>, vector<16x16xf32>, vector<16x16xf32> -> vector<16x16xf32>
    %cst_18 = arith.constant 1.250000e-01 : f32
    %43 = vector.broadcast %cst_18 : f32 to vector<16x16xf32>
    %44 = arith.mulf %42, %43 : vector<16x16xf32>
    %45 = arith.addf %44, %6 : vector<16x16xf32>
    %cst_19 = arith.constant dense<0xFF800000> : vector<16xf32>
    %46 = vector.multi_reduction <maximumf>, %45, %cst_19 [1] : vector<16x16xf32> to vector<16xf32>
    %47 = vector.shape_cast %46 : vector<16xf32> to vector<16x1xf32>
    %48 = vector.broadcast %47 : vector<16x1xf32> to vector<16x16xf32>
    %49 = arith.subf %45, %48 : vector<16x16xf32>
    %50 = math.exp %49 : vector<16x16xf32>
    %cst_20 = arith.constant dense<0.000000e+00> : vector<16xf32>
    %51 = vector.multi_reduction <add>, %50, %cst_20 [1] : vector<16x16xf32> to vector<16xf32>
    %52 = vector.shape_cast %51 : vector<16xf32> to vector<16x1xf32>
    %53 = vector.broadcast %52 : vector<16x1xf32> to vector<16x16xf32>
    %54 = arith.divf %50, %53 : vector<16x16xf32>
    %cst_21 = arith.constant dense<0.000000e+00> : vector<16x16xf32>
    %55 = tpu.matmul %54, %41, %cst_21 {dimension_numbers = #tpu.dot_dimension_numbers<[1], [0], [0], [1], [0, 0, 1, 1], [], []>} : vector<16x16xf32>, vector<16x16xf32>, vector<16x16xf32> -> vector<16x16xf32>
    %56 = vector.extract_strided_slice %36 {offsets = [0, 16], sizes = [16, 16], strides = [1, 1]} : vector<16x64xf32> to vector<16x16xf32>
    %57 = vector.extract_strided_slice %37 {offsets = [0, 16], sizes = [16, 16], strides = [1, 1]} : vector<16x64xf32> to vector<16x16xf32>
    %58 = vector.extract_strided_slice %38 {offsets = [0, 16], sizes = [16, 16], strides = [1, 1]} : vector<16x64xf32> to vector<16x16xf32>
    %cst_22 = arith.constant dense<0.000000e+00> : vector<16x16xf32>
    %59 = tpu.matmul %56, %57, %cst_22 {dimension_numbers = #tpu.dot_dimension_numbers<[1], [1], [0], [0], [0, 0, 1, 0], [], []>} : vector<16x16xf32>, vector<16x16xf32>, vector<16x16xf32> -> vector<16x16xf32>
    %cst_23 = arith.constant 1.250000e-01 : f32
    %60 = vector.broadcast %cst_23 : f32 to vector<16x16xf32>
    %61 = arith.mulf %59, %60 : vector<16x16xf32>
    %62 = arith.addf %61, %6 : vector<16x16xf32>
    %cst_24 = arith.constant dense<0xFF800000> : vector<16xf32>
    %63 = vector.multi_reduction <maximumf>, %62, %cst_24 [1] : vector<16x16xf32> to vector<16xf32>
    %64 = vector.shape_cast %63 : vector<16xf32> to vector<16x1xf32>
    %65 = vector.broadcast %64 : vector<16x1xf32> to vector<16x16xf32>
    %66 = arith.subf %62, %65 : vector<16x16xf32>
    %67 = math.exp %66 : vector<16x16xf32>
    %cst_25 = arith.constant dense<0.000000e+00> : vector<16xf32>
    %68 = vector.multi_reduction <add>, %67, %cst_25 [1] : vector<16x16xf32> to vector<16xf32>
    %69 = vector.shape_cast %68 : vector<16xf32> to vector<16x1xf32>
    %70 = vector.broadcast %69 : vector<16x1xf32> to vector<16x16xf32>
    %71 = arith.divf %67, %70 : vector<16x16xf32>
    %cst_26 = arith.constant dense<0.000000e+00> : vector<16x16xf32>
    %72 = tpu.matmul %71, %58, %cst_26 {dimension_numbers = #tpu.dot_dimension_numbers<[1], [0], [0], [1], [0, 0, 1, 1], [], []>} : vector<16x16xf32>, vector<16x16xf32>, vector<16x16xf32> -> vector<16x16xf32>
    %73 = vector.extract_strided_slice %36 {offsets = [0, 32], sizes = [16, 16], strides = [1, 1]} : vector<16x64xf32> to vector<16x16xf32>
    %74 = vector.extract_strided_slice %37 {offsets = [0, 32], sizes = [16, 16], strides = [1, 1]} : vector<16x64xf32> to vector<16x16xf32>
    %75 = vector.extract_strided_slice %38 {offsets = [0, 32], sizes = [16, 16], strides = [1, 1]} : vector<16x64xf32> to vector<16x16xf32>
    %cst_27 = arith.constant dense<0.000000e+00> : vector<16x16xf32>
    %76 = tpu.matmul %73, %74, %cst_27 {dimension_numbers = #tpu.dot_dimension_numbers<[1], [1], [0], [0], [0, 0, 1, 0], [], []>} : vector<16x16xf32>, vector<16x16xf32>, vector<16x16xf32> -> vector<16x16xf32>
    %cst_28 = arith.constant 1.250000e-01 : f32
    %77 = vector.broadcast %cst_28 : f32 to vector<16x16xf32>
    %78 = arith.mulf %76, %77 : vector<16x16xf32>
    %79 = arith.addf %78, %6 : vector<16x16xf32>
    %cst_29 = arith.constant dense<0xFF800000> : vector<16xf32>
    %80 = vector.multi_reduction <maximumf>, %79, %cst_29 [1] : vector<16x16xf32> to vector<16xf32>
    %81 = vector.shape_cast %80 : vector<16xf32> to vector<16x1xf32>
    %82 = vector.broadcast %81 : vector<16x1xf32> to vector<16x16xf32>
    %83 = arith.subf %79, %82 : vector<16x16xf32>
    %84 = math.exp %83 : vector<16x16xf32>
    %cst_30 = arith.constant dense<0.000000e+00> : vector<16xf32>
    %85 = vector.multi_reduction <add>, %84, %cst_30 [1] : vector<16x16xf32> to vector<16xf32>
    %86 = vector.shape_cast %85 : vector<16xf32> to vector<16x1xf32>
    %87 = vector.broadcast %86 : vector<16x1xf32> to vector<16x16xf32>
    %88 = arith.divf %84, %87 : vector<16x16xf32>
    %cst_31 = arith.constant dense<0.000000e+00> : vector<16x16xf32>
    %89 = tpu.matmul %88, %75, %cst_31 {dimension_numbers = #tpu.dot_dimension_numbers<[1], [0], [0], [1], [0, 0, 1, 1], [], []>} : vector<16x16xf32>, vector<16x16xf32>, vector<16x16xf32> -> vector<16x16xf32>
    %90 = vector.extract_strided_slice %36 {offsets = [0, 48], sizes = [16, 16], strides = [1, 1]} : vector<16x64xf32> to vector<16x16xf32>
    %91 = vector.extract_strided_slice %37 {offsets = [0, 48], sizes = [16, 16], strides = [1, 1]} : vector<16x64xf32> to vector<16x16xf32>
    %92 = vector.extract_strided_slice %38 {offsets = [0, 48], sizes = [16, 16], strides = [1, 1]} : vector<16x64xf32> to vector<16x16xf32>
    %cst_32 = arith.constant dense<0.000000e+00> : vector<16x16xf32>
    %93 = tpu.matmul %90, %91, %cst_32 {dimension_numbers = #tpu.dot_dimension_numbers<[1], [1], [0], [0], [0, 0, 1, 0], [], []>} : vector<16x16xf32>, vector<16x16xf32>, vector<16x16xf32> -> vector<16x16xf32>
    %cst_33 = arith.constant 1.250000e-01 : f32
    %94 = vector.broadcast %cst_33 : f32 to vector<16x16xf32>
    %95 = arith.mulf %93, %94 : vector<16x16xf32>
    %96 = arith.addf %95, %6 : vector<16x16xf32>
    %cst_34 = arith.constant dense<0xFF800000> : vector<16xf32>
    %97 = vector.multi_reduction <maximumf>, %96, %cst_34 [1] : vector<16x16xf32> to vector<16xf32>
    %98 = vector.shape_cast %97 : vector<16xf32> to vector<16x1xf32>
    %99 = vector.broadcast %98 : vector<16x1xf32> to vector<16x16xf32>
    %100 = arith.subf %96, %99 : vector<16x16xf32>
    %101 = math.exp %100 : vector<16x16xf32>
    %cst_35 = arith.constant dense<0.000000e+00> : vector<16xf32>
    %102 = vector.multi_reduction <add>, %101, %cst_35 [1] : vector<16x16xf32> to vector<16xf32>
    %103 = vector.shape_cast %102 : vector<16xf32> to vector<16x1xf32>
    %104 = vector.broadcast %103 : vector<16x1xf32> to vector<16x16xf32>
    %105 = arith.divf %101, %104 : vector<16x16xf32>
    %cst_36 = arith.constant dense<0.000000e+00> : vector<16x16xf32>
    %106 = tpu.matmul %105, %92, %cst_36 {dimension_numbers = #tpu.dot_dimension_numbers<[1], [0], [0], [1], [0, 0, 1, 1], [], []>} : vector<16x16xf32>, vector<16x16xf32>, vector<16x16xf32> -> vector<16x16xf32>
    %107 = tpu.concatenate %55, %72, %89, %106 in 1 : vector<16x16xf32>, vector<16x16xf32>, vector<16x16xf32>, vector<16x16xf32> -> vector<16x64xf32>
    %c0_37 = arith.constant 0 : index
    %c0_38 = arith.constant 0 : index
    %c0_39 = arith.constant 0 : index
    %108 = vector.load %arg5[%c0_37, %c0_38, %c0_39] : memref<2x64x64xf32, #tpu.memory_space<vmem>>, vector<1x64x64xf32>
    %109 = vector.shape_cast %108 : vector<1x64x64xf32> to vector<64x64xf32>
    %cst_40 = arith.constant dense<0.000000e+00> : vector<16x64xf32>
    %110 = tpu.matmul %107, %109, %cst_40 {dimension_numbers = #tpu.dot_dimension_numbers<[1], [0], [0], [1], [0, 0, 1, 1], [], []>} : vector<16x64xf32>, vector<64x64xf32>, vector<16x64xf32> -> vector<16x64xf32>
    %c0_41 = arith.constant 0 : index
    %c0_42 = arith.constant 0 : index
    %c0_43 = arith.constant 0 : index
    %111 = vector.load %arg6[%c0_41, %c0_42, %c0_43] : memref<2x1x64xf32, #tpu.memory_space<vmem>>, vector<1x1x64xf32>
    %112 = vector.shape_cast %111 : vector<1x1x64xf32> to vector<1x64xf32>
    %113 = vector.broadcast %112 : vector<1x64xf32> to vector<16x64xf32>
    %114 = arith.addf %110, %113 : vector<16x64xf32>
    %115 = arith.addf %0, %114 : vector<16x64xf32>
    %c0_44 = arith.constant 0 : index
    %c0_45 = arith.constant 0 : index
    %c0_46 = arith.constant 0 : index
    %116 = vector.load %arg7[%c0_44, %c0_45, %c0_46] : memref<2x1x64xf32, #tpu.memory_space<vmem>>, vector<1x1x64xf32>
    %117 = vector.shape_cast %116 : vector<1x1x64xf32> to vector<1x64xf32>
    %c0_47 = arith.constant 0 : index
    %c0_48 = arith.constant 0 : index
    %c0_49 = arith.constant 0 : index
    %118 = vector.load %arg8[%c0_47, %c0_48, %c0_49] : memref<2x1x64xf32, #tpu.memory_space<vmem>>, vector<1x1x64xf32>
    %119 = vector.shape_cast %118 : vector<1x1x64xf32> to vector<1x64xf32>
    %cst_50 = arith.constant dense<0.000000e+00> : vector<16xf32>
    %120 = vector.multi_reduction <add>, %115, %cst_50 [1] : vector<16x64xf32> to vector<16xf32>
    %121 = vector.shape_cast %120 : vector<16xf32> to vector<16x1xf32>
    %cst_51 = arith.constant 6.400000e+01 : f32
    %122 = vector.broadcast %cst_51 : f32 to vector<16x1xf32>
    %123 = arith.divf %121, %122 : vector<16x1xf32>
    %124 = vector.broadcast %123 : vector<16x1xf32> to vector<16x64xf32>
    %125 = arith.subf %115, %124 : vector<16x64xf32>
    %126 = arith.mulf %125, %125 : vector<16x64xf32>
    %cst_52 = arith.constant dense<0.000000e+00> : vector<16xf32>
    %127 = vector.multi_reduction <add>, %126, %cst_52 [1] : vector<16x64xf32> to vector<16xf32>
    %128 = vector.shape_cast %127 : vector<16xf32> to vector<16x1xf32>
    %cst_53 = arith.constant 6.400000e+01 : f32
    %129 = vector.broadcast %cst_53 : f32 to vector<16x1xf32>
    %130 = arith.divf %128, %129 : vector<16x1xf32>
    %131 = vector.broadcast %123 : vector<16x1xf32> to vector<16x64xf32>
    %132 = arith.subf %115, %131 : vector<16x64xf32>
    %cst_54 = arith.constant 9.99999974E-6 : f32
    %133 = vector.broadcast %cst_54 : f32 to vector<16x1xf32>
    %134 = arith.addf %130, %133 : vector<16x1xf32>
    %135 = math.rsqrt %134 : vector<16x1xf32>
    %136 = vector.broadcast %135 : vector<16x1xf32> to vector<16x64xf32>
    %137 = arith.mulf %132, %136 : vector<16x64xf32>
    %138 = vector.broadcast %117 : vector<1x64xf32> to vector<16x64xf32>
    %139 = arith.mulf %137, %138 : vector<16x64xf32>
    %140 = vector.broadcast %119 : vector<1x64xf32> to vector<16x64xf32>
    %141 = arith.addf %139, %140 : vector<16x64xf32>
    %c0_55 = arith.constant 0 : index
    %c0_56 = arith.constant 0 : index
    %c0_57 = arith.constant 0 : index
    %142 = vector.load %arg9[%c0_55, %c0_56, %c0_57] : memref<2x64x256xf32, #tpu.memory_space<vmem>>, vector<1x64x256xf32>
    %143 = vector.shape_cast %142 : vector<1x64x256xf32> to vector<64x256xf32>
    %cst_58 = arith.constant dense<0.000000e+00> : vector<16x256xf32>
    %144 = tpu.matmul %141, %143, %cst_58 {dimension_numbers = #tpu.dot_dimension_numbers<[1], [0], [0], [1], [0, 0, 1, 1], [], []>} : vector<16x64xf32>, vector<64x256xf32>, vector<16x256xf32> -> vector<16x256xf32>
    %c0_59 = arith.constant 0 : index
    %c0_60 = arith.constant 0 : index
    %c0_61 = arith.constant 0 : index
    %145 = vector.load %arg10[%c0_59, %c0_60, %c0_61] : memref<2x1x256xf32, #tpu.memory_space<vmem>>, vector<1x1x256xf32>
    %146 = vector.shape_cast %145 : vector<1x1x256xf32> to vector<1x256xf32>
    %147 = vector.broadcast %146 : vector<1x256xf32> to vector<16x256xf32>
    %148 = arith.addf %144, %147 : vector<16x256xf32>
    %cst_62 = arith.constant 0.000000e+00 : f32
    %149 = vector.broadcast %cst_62 : f32 to vector<16x256xf32>
    %150 = arith.maximumf %148, %149 : vector<16x256xf32>
    %c0_63 = arith.constant 0 : index
    %c0_64 = arith.constant 0 : index
    %c0_65 = arith.constant 0 : index
    %151 = vector.load %arg11[%c0_63, %c0_64, %c0_65] : memref<2x256x64xf32, #tpu.memory_space<vmem>>, vector<1x256x64xf32>
    %152 = vector.shape_cast %151 : vector<1x256x64xf32> to vector<256x64xf32>
    %cst_66 = arith.constant dense<0.000000e+00> : vector<16x64xf32>
    %153 = tpu.matmul %150, %152, %cst_66 {dimension_numbers = #tpu.dot_dimension_numbers<[1], [0], [0], [1], [0, 0, 1, 1], [], []>} : vector<16x256xf32>, vector<256x64xf32>, vector<16x64xf32> -> vector<16x64xf32>
    %c0_67 = arith.constant 0 : index
    %c0_68 = arith.constant 0 : index
    %c0_69 = arith.constant 0 : index
    %154 = vector.load %arg12[%c0_67, %c0_68, %c0_69] : memref<2x1x64xf32, #tpu.memory_space<vmem>>, vector<1x1x64xf32>
    %155 = vector.shape_cast %154 : vector<1x1x64xf32> to vector<1x64xf32>
    %156 = vector.broadcast %155 : vector<1x64xf32> to vector<16x64xf32>
    %157 = arith.addf %153, %156 : vector<16x64xf32>
    %158 = arith.addf %115, %157 : vector<16x64xf32>
    %c1 = arith.constant 1 : index
    %c0_70 = arith.constant 0 : index
    %c0_71 = arith.constant 0 : index
    %159 = vector.load %arg2[%c1, %c0_70, %c0_71] : memref<2x1x64xf32, #tpu.memory_space<vmem>>, vector<1x1x64xf32>
    %160 = vector.shape_cast %159 : vector<1x1x64xf32> to vector<1x64xf32>
    %c1_72 = arith.constant 1 : index
    %c0_73 = arith.constant 0 : index
    %c0_74 = arith.constant 0 : index
    %161 = vector.load %arg3[%c1_72, %c0_73, %c0_74] : memref<2x1x64xf32, #tpu.memory_space<vmem>>, vector<1x1x64xf32>
    %162 = vector.shape_cast %161 : vector<1x1x64xf32> to vector<1x64xf32>
    %cst_75 = arith.constant dense<0.000000e+00> : vector<16xf32>
    %163 = vector.multi_reduction <add>, %158, %cst_75 [1] : vector<16x64xf32> to vector<16xf32>
    %164 = vector.shape_cast %163 : vector<16xf32> to vector<16x1xf32>
    %cst_76 = arith.constant 6.400000e+01 : f32
    %165 = vector.broadcast %cst_76 : f32 to vector<16x1xf32>
    %166 = arith.divf %164, %165 : vector<16x1xf32>
    %167 = vector.broadcast %166 : vector<16x1xf32> to vector<16x64xf32>
    %168 = arith.subf %158, %167 : vector<16x64xf32>
    %169 = arith.mulf %168, %168 : vector<16x64xf32>
    %cst_77 = arith.constant dense<0.000000e+00> : vector<16xf32>
    %170 = vector.multi_reduction <add>, %169, %cst_77 [1] : vector<16x64xf32> to vector<16xf32>
    %171 = vector.shape_cast %170 : vector<16xf32> to vector<16x1xf32>
    %cst_78 = arith.constant 6.400000e+01 : f32
    %172 = vector.broadcast %cst_78 : f32 to vector<16x1xf32>
    %173 = arith.divf %171, %172 : vector<16x1xf32>
    %174 = vector.broadcast %166 : vector<16x1xf32> to vector<16x64xf32>
    %175 = arith.subf %158, %174 : vector<16x64xf32>
    %cst_79 = arith.constant 9.99999974E-6 : f32
    %176 = vector.broadcast %cst_79 : f32 to vector<16x1xf32>
    %177 = arith.addf %173, %176 : vector<16x1xf32>
    %178 = math.rsqrt %177 : vector<16x1xf32>
    %179 = vector.broadcast %178 : vector<16x1xf32> to vector<16x64xf32>
    %180 = arith.mulf %175, %179 : vector<16x64xf32>
    %181 = vector.broadcast %160 : vector<1x64xf32> to vector<16x64xf32>
    %182 = arith.mulf %180, %181 : vector<16x64xf32>
    %183 = vector.broadcast %162 : vector<1x64xf32> to vector<16x64xf32>
    %184 = arith.addf %182, %183 : vector<16x64xf32>
    %c1_80 = arith.constant 1 : index
    %c0_81 = arith.constant 0 : index
    %c0_82 = arith.constant 0 : index
    %185 = vector.load %arg4[%c1_80, %c0_81, %c0_82] : memref<2x64x192xf32, #tpu.memory_space<vmem>>, vector<1x64x192xf32>
    %186 = vector.shape_cast %185 : vector<1x64x192xf32> to vector<64x192xf32>
    %cst_83 = arith.constant dense<0.000000e+00> : vector<16x192xf32>
    %187 = tpu.matmul %184, %186, %cst_83 {dimension_numbers = #tpu.dot_dimension_numbers<[1], [0], [0], [1], [0, 0, 1, 1], [], []>} : vector<16x64xf32>, vector<64x192xf32>, vector<16x192xf32> -> vector<16x192xf32>
    %188 = vector.extract_strided_slice %187 {offsets = [0, 0], sizes = [16, 64], strides = [1, 1]} : vector<16x192xf32> to vector<16x64xf32>
    %189 = vector.extract_strided_slice %187 {offsets = [0, 64], sizes = [16, 64], strides = [1, 1]} : vector<16x192xf32> to vector<16x64xf32>
    %190 = vector.extract_strided_slice %187 {offsets = [0, 128], sizes = [16, 64], strides = [1, 1]} : vector<16x192xf32> to vector<16x64xf32>
    %191 = vector.extract_strided_slice %188 {offsets = [0, 0], sizes = [16, 16], strides = [1, 1]} : vector<16x64xf32> to vector<16x16xf32>
    %192 = vector.extract_strided_slice %189 {offsets = [0, 0], sizes = [16, 16], strides = [1, 1]} : vector<16x64xf32> to vector<16x16xf32>
    %193 = vector.extract_strided_slice %190 {offsets = [0, 0], sizes = [16, 16], strides = [1, 1]} : vector<16x64xf32> to vector<16x16xf32>
    %cst_84 = arith.constant dense<0.000000e+00> : vector<16x16xf32>
    %194 = tpu.matmul %191, %192, %cst_84 {dimension_numbers = #tpu.dot_dimension_numbers<[1], [1], [0], [0], [0, 0, 1, 0], [], []>} : vector<16x16xf32>, vector<16x16xf32>, vector<16x16xf32> -> vector<16x16xf32>
    %cst_85 = arith.constant 1.250000e-01 : f32
    %195 = vector.broadcast %cst_85 : f32 to vector<16x16xf32>
    %196 = arith.mulf %194, %195 : vector<16x16xf32>
    %197 = arith.addf %196, %6 : vector<16x16xf32>
    %cst_86 = arith.constant dense<0xFF800000> : vector<16xf32>
    %198 = vector.multi_reduction <maximumf>, %197, %cst_86 [1] : vector<16x16xf32> to vector<16xf32>
    %199 = vector.shape_cast %198 : vector<16xf32> to vector<16x1xf32>
    %200 = vector.broadcast %199 : vector<16x1xf32> to vector<16x16xf32>
    %201 = arith.subf %197, %200 : vector<16x16xf32>
    %202 = math.exp %201 : vector<16x16xf32>
    %cst_87 = arith.constant dense<0.000000e+00> : vector<16xf32>
    %203 = vector.multi_reduction <add>, %202, %cst_87 [1] : vector<16x16xf32> to vector<16xf32>
    %204 = vector.shape_cast %203 : vector<16xf32> to vector<16x1xf32>
    %205 = vector.broadcast %204 : vector<16x1xf32> to vector<16x16xf32>
    %206 = arith.divf %202, %205 : vector<16x16xf32>
    %cst_88 = arith.constant dense<0.000000e+00> : vector<16x16xf32>
    %207 = tpu.matmul %206, %193, %cst_88 {dimension_numbers = #tpu.dot_dimension_numbers<[1], [0], [0], [1], [0, 0, 1, 1], [], []>} : vector<16x16xf32>, vector<16x16xf32>, vector<16x16xf32> -> vector<16x16xf32>
    %208 = vector.extract_strided_slice %188 {offsets = [0, 16], sizes = [16, 16], strides = [1, 1]} : vector<16x64xf32> to vector<16x16xf32>
    %209 = vector.extract_strided_slice %189 {offsets = [0, 16], sizes = [16, 16], strides = [1, 1]} : vector<16x64xf32> to vector<16x16xf32>
    %210 = vector.extract_strided_slice %190 {offsets = [0, 16], sizes = [16, 16], strides = [1, 1]} : vector<16x64xf32> to vector<16x16xf32>
    %cst_89 = arith.constant dense<0.000000e+00> : vector<16x16xf32>
    %211 = tpu.matmul %208, %209, %cst_89 {dimension_numbers = #tpu.dot_dimension_numbers<[1], [1], [0], [0], [0, 0, 1, 0], [], []>} : vector<16x16xf32>, vector<16x16xf32>, vector<16x16xf32> -> vector<16x16xf32>
    %cst_90 = arith.constant 1.250000e-01 : f32
    %212 = vector.broadcast %cst_90 : f32 to vector<16x16xf32>
    %213 = arith.mulf %211, %212 : vector<16x16xf32>
    %214 = arith.addf %213, %6 : vector<16x16xf32>
    %cst_91 = arith.constant dense<0xFF800000> : vector<16xf32>
    %215 = vector.multi_reduction <maximumf>, %214, %cst_91 [1] : vector<16x16xf32> to vector<16xf32>
    %216 = vector.shape_cast %215 : vector<16xf32> to vector<16x1xf32>
    %217 = vector.broadcast %216 : vector<16x1xf32> to vector<16x16xf32>
    %218 = arith.subf %214, %217 : vector<16x16xf32>
    %219 = math.exp %218 : vector<16x16xf32>
    %cst_92 = arith.constant dense<0.000000e+00> : vector<16xf32>
    %220 = vector.multi_reduction <add>, %219, %cst_92 [1] : vector<16x16xf32> to vector<16xf32>
    %221 = vector.shape_cast %220 : vector<16xf32> to vector<16x1xf32>
    %222 = vector.broadcast %221 : vector<16x1xf32> to vector<16x16xf32>
    %223 = arith.divf %219, %222 : vector<16x16xf32>
    %cst_93 = arith.constant dense<0.000000e+00> : vector<16x16xf32>
    %224 = tpu.matmul %223, %210, %cst_93 {dimension_numbers = #tpu.dot_dimension_numbers<[1], [0], [0], [1], [0, 0, 1, 1], [], []>} : vector<16x16xf32>, vector<16x16xf32>, vector<16x16xf32> -> vector<16x16xf32>
    %225 = vector.extract_strided_slice %188 {offsets = [0, 32], sizes = [16, 16], strides = [1, 1]} : vector<16x64xf32> to vector<16x16xf32>
    %226 = vector.extract_strided_slice %189 {offsets = [0, 32], sizes = [16, 16], strides = [1, 1]} : vector<16x64xf32> to vector<16x16xf32>
    %227 = vector.extract_strided_slice %190 {offsets = [0, 32], sizes = [16, 16], strides = [1, 1]} : vector<16x64xf32> to vector<16x16xf32>
    %cst_94 = arith.constant dense<0.000000e+00> : vector<16x16xf32>
    %228 = tpu.matmul %225, %226, %cst_94 {dimension_numbers = #tpu.dot_dimension_numbers<[1], [1], [0], [0], [0, 0, 1, 0], [], []>} : vector<16x16xf32>, vector<16x16xf32>, vector<16x16xf32> -> vector<16x16xf32>
    %cst_95 = arith.constant 1.250000e-01 : f32
    %229 = vector.broadcast %cst_95 : f32 to vector<16x16xf32>
    %230 = arith.mulf %228, %229 : vector<16x16xf32>
    %231 = arith.addf %230, %6 : vector<16x16xf32>
    %cst_96 = arith.constant dense<0xFF800000> : vector<16xf32>
    %232 = vector.multi_reduction <maximumf>, %231, %cst_96 [1] : vector<16x16xf32> to vector<16xf32>
    %233 = vector.shape_cast %232 : vector<16xf32> to vector<16x1xf32>
    %234 = vector.broadcast %233 : vector<16x1xf32> to vector<16x16xf32>
    %235 = arith.subf %231, %234 : vector<16x16xf32>
    %236 = math.exp %235 : vector<16x16xf32>
    %cst_97 = arith.constant dense<0.000000e+00> : vector<16xf32>
    %237 = vector.multi_reduction <add>, %236, %cst_97 [1] : vector<16x16xf32> to vector<16xf32>
    %238 = vector.shape_cast %237 : vector<16xf32> to vector<16x1xf32>
    %239 = vector.broadcast %238 : vector<16x1xf32> to vector<16x16xf32>
    %240 = arith.divf %236, %239 : vector<16x16xf32>
    %cst_98 = arith.constant dense<0.000000e+00> : vector<16x16xf32>
    %241 = tpu.matmul %240, %227, %cst_98 {dimension_numbers = #tpu.dot_dimension_numbers<[1], [0], [0], [1], [0, 0, 1, 1], [], []>} : vector<16x16xf32>, vector<16x16xf32>, vector<16x16xf32> -> vector<16x16xf32>
    %242 = vector.extract_strided_slice %188 {offsets = [0, 48], sizes = [16, 16], strides = [1, 1]} : vector<16x64xf32> to vector<16x16xf32>
    %243 = vector.extract_strided_slice %189 {offsets = [0, 48], sizes = [16, 16], strides = [1, 1]} : vector<16x64xf32> to vector<16x16xf32>
    %244 = vector.extract_strided_slice %190 {offsets = [0, 48], sizes = [16, 16], strides = [1, 1]} : vector<16x64xf32> to vector<16x16xf32>
    %cst_99 = arith.constant dense<0.000000e+00> : vector<16x16xf32>
    %245 = tpu.matmul %242, %243, %cst_99 {dimension_numbers = #tpu.dot_dimension_numbers<[1], [1], [0], [0], [0, 0, 1, 0], [], []>} : vector<16x16xf32>, vector<16x16xf32>, vector<16x16xf32> -> vector<16x16xf32>
    %cst_100 = arith.constant 1.250000e-01 : f32
    %246 = vector.broadcast %cst_100 : f32 to vector<16x16xf32>
    %247 = arith.mulf %245, %246 : vector<16x16xf32>
    %248 = arith.addf %247, %6 : vector<16x16xf32>
    %cst_101 = arith.constant dense<0xFF800000> : vector<16xf32>
    %249 = vector.multi_reduction <maximumf>, %248, %cst_101 [1] : vector<16x16xf32> to vector<16xf32>
    %250 = vector.shape_cast %249 : vector<16xf32> to vector<16x1xf32>
    %251 = vector.broadcast %250 : vector<16x1xf32> to vector<16x16xf32>
    %252 = arith.subf %248, %251 : vector<16x16xf32>
    %253 = math.exp %252 : vector<16x16xf32>
    %cst_102 = arith.constant dense<0.000000e+00> : vector<16xf32>
    %254 = vector.multi_reduction <add>, %253, %cst_102 [1] : vector<16x16xf32> to vector<16xf32>
    %255 = vector.shape_cast %254 : vector<16xf32> to vector<16x1xf32>
    %256 = vector.broadcast %255 : vector<16x1xf32> to vector<16x16xf32>
    %257 = arith.divf %253, %256 : vector<16x16xf32>
    %cst_103 = arith.constant dense<0.000000e+00> : vector<16x16xf32>
    %258 = tpu.matmul %257, %244, %cst_103 {dimension_numbers = #tpu.dot_dimension_numbers<[1], [0], [0], [1], [0, 0, 1, 1], [], []>} : vector<16x16xf32>, vector<16x16xf32>, vector<16x16xf32> -> vector<16x16xf32>
    %259 = tpu.concatenate %207, %224, %241, %258 in 1 : vector<16x16xf32>, vector<16x16xf32>, vector<16x16xf32>, vector<16x16xf32> -> vector<16x64xf32>
    %c1_104 = arith.constant 1 : index
    %c0_105 = arith.constant 0 : index
    %c0_106 = arith.constant 0 : index
    %260 = vector.load %arg5[%c1_104, %c0_105, %c0_106] : memref<2x64x64xf32, #tpu.memory_space<vmem>>, vector<1x64x64xf32>
    %261 = vector.shape_cast %260 : vector<1x64x64xf32> to vector<64x64xf32>
    %cst_107 = arith.constant dense<0.000000e+00> : vector<16x64xf32>
    %262 = tpu.matmul %259, %261, %cst_107 {dimension_numbers = #tpu.dot_dimension_numbers<[1], [0], [0], [1], [0, 0, 1, 1], [], []>} : vector<16x64xf32>, vector<64x64xf32>, vector<16x64xf32> -> vector<16x64xf32>
    %c1_108 = arith.constant 1 : index
    %c0_109 = arith.constant 0 : index
    %c0_110 = arith.constant 0 : index
    %263 = vector.load %arg6[%c1_108, %c0_109, %c0_110] : memref<2x1x64xf32, #tpu.memory_space<vmem>>, vector<1x1x64xf32>
    %264 = vector.shape_cast %263 : vector<1x1x64xf32> to vector<1x64xf32>
    %265 = vector.broadcast %264 : vector<1x64xf32> to vector<16x64xf32>
    %266 = arith.addf %262, %265 : vector<16x64xf32>
    %267 = arith.addf %158, %266 : vector<16x64xf32>
    %c1_111 = arith.constant 1 : index
    %c0_112 = arith.constant 0 : index
    %c0_113 = arith.constant 0 : index
    %268 = vector.load %arg7[%c1_111, %c0_112, %c0_113] : memref<2x1x64xf32, #tpu.memory_space<vmem>>, vector<1x1x64xf32>
    %269 = vector.shape_cast %268 : vector<1x1x64xf32> to vector<1x64xf32>
    %c1_114 = arith.constant 1 : index
    %c0_115 = arith.constant 0 : index
    %c0_116 = arith.constant 0 : index
    %270 = vector.load %arg8[%c1_114, %c0_115, %c0_116] : memref<2x1x64xf32, #tpu.memory_space<vmem>>, vector<1x1x64xf32>
    %271 = vector.shape_cast %270 : vector<1x1x64xf32> to vector<1x64xf32>
    %cst_117 = arith.constant dense<0.000000e+00> : vector<16xf32>
    %272 = vector.multi_reduction <add>, %267, %cst_117 [1] : vector<16x64xf32> to vector<16xf32>
    %273 = vector.shape_cast %272 : vector<16xf32> to vector<16x1xf32>
    %cst_118 = arith.constant 6.400000e+01 : f32
    %274 = vector.broadcast %cst_118 : f32 to vector<16x1xf32>
    %275 = arith.divf %273, %274 : vector<16x1xf32>
    %276 = vector.broadcast %275 : vector<16x1xf32> to vector<16x64xf32>
    %277 = arith.subf %267, %276 : vector<16x64xf32>
    %278 = arith.mulf %277, %277 : vector<16x64xf32>
    %cst_119 = arith.constant dense<0.000000e+00> : vector<16xf32>
    %279 = vector.multi_reduction <add>, %278, %cst_119 [1] : vector<16x64xf32> to vector<16xf32>
    %280 = vector.shape_cast %279 : vector<16xf32> to vector<16x1xf32>
    %cst_120 = arith.constant 6.400000e+01 : f32
    %281 = vector.broadcast %cst_120 : f32 to vector<16x1xf32>
    %282 = arith.divf %280, %281 : vector<16x1xf32>
    %283 = vector.broadcast %275 : vector<16x1xf32> to vector<16x64xf32>
    %284 = arith.subf %267, %283 : vector<16x64xf32>
    %cst_121 = arith.constant 9.99999974E-6 : f32
    %285 = vector.broadcast %cst_121 : f32 to vector<16x1xf32>
    %286 = arith.addf %282, %285 : vector<16x1xf32>
    %287 = math.rsqrt %286 : vector<16x1xf32>
    %288 = vector.broadcast %287 : vector<16x1xf32> to vector<16x64xf32>
    %289 = arith.mulf %284, %288 : vector<16x64xf32>
    %290 = vector.broadcast %269 : vector<1x64xf32> to vector<16x64xf32>
    %291 = arith.mulf %289, %290 : vector<16x64xf32>
    %292 = vector.broadcast %271 : vector<1x64xf32> to vector<16x64xf32>
    %293 = arith.addf %291, %292 : vector<16x64xf32>
    %c1_122 = arith.constant 1 : index
    %c0_123 = arith.constant 0 : index
    %c0_124 = arith.constant 0 : index
    %294 = vector.load %arg9[%c1_122, %c0_123, %c0_124] : memref<2x64x256xf32, #tpu.memory_space<vmem>>, vector<1x64x256xf32>
    %295 = vector.shape_cast %294 : vector<1x64x256xf32> to vector<64x256xf32>
    %cst_125 = arith.constant dense<0.000000e+00> : vector<16x256xf32>
    %296 = tpu.matmul %293, %295, %cst_125 {dimension_numbers = #tpu.dot_dimension_numbers<[1], [0], [0], [1], [0, 0, 1, 1], [], []>} : vector<16x64xf32>, vector<64x256xf32>, vector<16x256xf32> -> vector<16x256xf32>
    %c1_126 = arith.constant 1 : index
    %c0_127 = arith.constant 0 : index
    %c0_128 = arith.constant 0 : index
    %297 = vector.load %arg10[%c1_126, %c0_127, %c0_128] : memref<2x1x256xf32, #tpu.memory_space<vmem>>, vector<1x1x256xf32>
    %298 = vector.shape_cast %297 : vector<1x1x256xf32> to vector<1x256xf32>
    %299 = vector.broadcast %298 : vector<1x256xf32> to vector<16x256xf32>
    %300 = arith.addf %296, %299 : vector<16x256xf32>
    %cst_129 = arith.constant 0.000000e+00 : f32
    %301 = vector.broadcast %cst_129 : f32 to vector<16x256xf32>
    %302 = arith.maximumf %300, %301 : vector<16x256xf32>
    %c1_130 = arith.constant 1 : index
    %c0_131 = arith.constant 0 : index
    %c0_132 = arith.constant 0 : index
    %303 = vector.load %arg11[%c1_130, %c0_131, %c0_132] : memref<2x256x64xf32, #tpu.memory_space<vmem>>, vector<1x256x64xf32>
    %304 = vector.shape_cast %303 : vector<1x256x64xf32> to vector<256x64xf32>
    %cst_133 = arith.constant dense<0.000000e+00> : vector<16x64xf32>
    %305 = tpu.matmul %302, %304, %cst_133 {dimension_numbers = #tpu.dot_dimension_numbers<[1], [0], [0], [1], [0, 0, 1, 1], [], []>} : vector<16x256xf32>, vector<256x64xf32>, vector<16x64xf32> -> vector<16x64xf32>
    %c1_134 = arith.constant 1 : index
    %c0_135 = arith.constant 0 : index
    %c0_136 = arith.constant 0 : index
    %306 = vector.load %arg12[%c1_134, %c0_135, %c0_136] : memref<2x1x64xf32, #tpu.memory_space<vmem>>, vector<1x1x64xf32>
    %307 = vector.shape_cast %306 : vector<1x1x64xf32> to vector<1x64xf32>
    %308 = vector.broadcast %307 : vector<1x64xf32> to vector<16x64xf32>
    %309 = arith.addf %305, %308 : vector<16x64xf32>
    %310 = arith.addf %267, %309 : vector<16x64xf32>
    %c0_137 = arith.constant 0 : index
    %c0_138 = arith.constant 0 : index
    %311 = vector.load %arg13[%c0_137, %c0_138] : memref<1x64xf32, #tpu.memory_space<vmem>>, vector<1x64xf32>
    %c0_139 = arith.constant 0 : index
    %c0_140 = arith.constant 0 : index
    %312 = vector.load %arg14[%c0_139, %c0_140] : memref<1x64xf32, #tpu.memory_space<vmem>>, vector<1x64xf32>
    %cst_141 = arith.constant dense<0.000000e+00> : vector<16xf32>
    %313 = vector.multi_reduction <add>, %310, %cst_141 [1] : vector<16x64xf32> to vector<16xf32>
    %314 = vector.shape_cast %313 : vector<16xf32> to vector<16x1xf32>
    %cst_142 = arith.constant 6.400000e+01 : f32
    %315 = vector.broadcast %cst_142 : f32 to vector<16x1xf32>
    %316 = arith.divf %314, %315 : vector<16x1xf32>
    %317 = vector.broadcast %316 : vector<16x1xf32> to vector<16x64xf32>
    %318 = arith.subf %310, %317 : vector<16x64xf32>
    %319 = arith.mulf %318, %318 : vector<16x64xf32>
    %cst_143 = arith.constant dense<0.000000e+00> : vector<16xf32>
    %320 = vector.multi_reduction <add>, %319, %cst_143 [1] : vector<16x64xf32> to vector<16xf32>
    %321 = vector.shape_cast %320 : vector<16xf32> to vector<16x1xf32>
    %cst_144 = arith.constant 6.400000e+01 : f32
    %322 = vector.broadcast %cst_144 : f32 to vector<16x1xf32>
    %323 = arith.divf %321, %322 : vector<16x1xf32>
    %324 = vector.broadcast %316 : vector<16x1xf32> to vector<16x64xf32>
    %325 = arith.subf %310, %324 : vector<16x64xf32>
    %cst_145 = arith.constant 9.99999974E-6 : f32
    %326 = vector.broadcast %cst_145 : f32 to vector<16x1xf32>
    %327 = arith.addf %323, %326 : vector<16x1xf32>
    %328 = math.rsqrt %327 : vector<16x1xf32>
    %329 = vector.broadcast %328 : vector<16x1xf32> to vector<16x64xf32>
    %330 = arith.mulf %325, %329 : vector<16x64xf32>
    %331 = vector.broadcast %311 : vector<1x64xf32> to vector<16x64xf32>
    %332 = arith.mulf %330, %331 : vector<16x64xf32>
    %333 = vector.broadcast %312 : vector<1x64xf32> to vector<16x64xf32>
    %334 = arith.addf %332, %333 : vector<16x64xf32>
    %c0_146 = arith.constant 0 : index
    %c0_147 = arith.constant 0 : index
    %335 = vector.load %arg15[%c0_146, %c0_147] : memref<64x128xf32, #tpu.memory_space<vmem>>, vector<64x128xf32>
    %cst_148 = arith.constant dense<0.000000e+00> : vector<16x128xf32>
    %336 = tpu.matmul %334, %335, %cst_148 {dimension_numbers = #tpu.dot_dimension_numbers<[1], [0], [0], [1], [0, 0, 1, 1], [], []>} : vector<16x64xf32>, vector<64x128xf32>, vector<16x128xf32> -> vector<16x128xf32>
    %c0_149 = arith.constant 0 : index
    %c0_150 = arith.constant 0 : index
    %337 = vector.load %arg16[%c0_149, %c0_150] : memref<1x128xf32, #tpu.memory_space<vmem>>, vector<1x128xf32>
    %338 = vector.broadcast %337 : vector<1x128xf32> to vector<16x128xf32>
    %339 = arith.addf %336, %338 : vector<16x128xf32>
    %c0_151 = arith.constant 0 : index
    %c0_152 = arith.constant 0 : index
    %340 = vector.load %arg17[%c0_151, %c0_152] : memref<16x128xf32, #tpu.memory_space<vmem>>, vector<16x128xf32>
    tpu.vector_store %arg17[%c0_151, %c0_152], %339 {strides = array<i32>} : memref<16x128xf32, #tpu.memory_space<vmem>>, vector<16x128xf32>,
    return
  }
  func.func @transform_0(%arg0: i32) -> (i32, i32) {
    %c0_i32 = arith.constant 0 : i32
    %c0_i32_0 = arith.constant 0 : i32
    return %arg0, %c0_i32 : i32, i32
  }
  func.func @transform_1(%arg0: i32) -> (i32, i32, i32) {
    %c0_i32 = arith.constant 0 : i32
    %c0_i32_0 = arith.constant 0 : i32
    %c0_i32_1 = arith.constant 0 : i32
    %c0_i32_2 = arith.constant 0 : i32
    return %c0_i32, %c0_i32_0, %c0_i32_1 : i32, i32, i32
  }
  func.func @transform_2(%arg0: i32) -> (i32, i32, i32) {
    %c0_i32 = arith.constant 0 : i32
    %c0_i32_0 = arith.constant 0 : i32
    %c0_i32_1 = arith.constant 0 : i32
    %c0_i32_2 = arith.constant 0 : i32
    return %c0_i32, %c0_i32_0, %c0_i32_1 : i32, i32, i32
  }
  func.func @transform_3(%arg0: i32) -> (i32, i32, i32) {
    %c0_i32 = arith.constant 0 : i32
    %c0_i32_0 = arith.constant 0 : i32
    %c0_i32_1 = arith.constant 0 : i32
    %c0_i32_2 = arith.constant 0 : i32
    return %c0_i32, %c0_i32_0, %c0_i32_1 : i32, i32, i32
  }
  func.func @transform_4(%arg0: i32) -> (i32, i32, i32) {
    %c0_i32 = arith.constant 0 : i32
    %c0_i32_0 = arith.constant 0 : i32
    %c0_i32_1 = arith.constant 0 : i32
    %c0_i32_2 = arith.constant 0 : i32
    return %c0_i32, %c0_i32_0, %c0_i32_1 : i32, i32, i32
  }
  func.func @transform_5(%arg0: i32) -> (i32, i32, i32) {
    %c0_i32 = arith.constant 0 : i32
    %c0_i32_0 = arith.constant 0 : i32
    %c0_i32_1 = arith.constant 0 : i32
    %c0_i32_2 = arith.constant 0 : i32
    return %c0_i32, %c0_i32_0, %c0_i32_1 : i32, i32, i32
  }
  func.func @transform_6(%arg0: i32) -> (i32, i32, i32) {
    %c0_i32 = arith.constant 0 : i32
    %c0_i32_0 = arith.constant 0 : i32
    %c0_i32_1 = arith.constant 0 : i32
    %c0_i32_2 = arith.constant 0 : i32
    return %c0_i32, %c0_i32_0, %c0_i32_1 : i32, i32, i32
  }
  func.func @transform_7(%arg0: i32) -> (i32, i32, i32) {
    %c0_i32 = arith.constant 0 : i32
    %c0_i32_0 = arith.constant 0 : i32
    %c0_i32_1 = arith.constant 0 : i32
    %c0_i32_2 = arith.constant 0 : i32
    return %c0_i32, %c0_i32_0, %c0_i32_1 : i32, i32, i32
  }
  func.func @transform_8(%arg0: i32) -> (i32, i32, i32) {
    %c0_i32 = arith.constant 0 : i32
    %c0_i32_0 = arith.constant 0 : i32
    %c0_i32_1 = arith.constant 0 : i32
    %c0_i32_2 = arith.constant 0 : i32
    return %c0_i32, %c0_i32_0, %c0_i32_1 : i32, i32, i32
  }
  func.func @transform_9(%arg0: i32) -> (i32, i32, i32) {
    %c0_i32 = arith.constant 0 : i32
    %c0_i32_0 = arith.constant 0 : i32
    %c0_i32_1 = arith.constant 0 : i32
    %c0_i32_2 = arith.constant 0 : i32
    return %c0_i32, %c0_i32_0, %c0_i32_1 : i32, i32, i32
  }
  func.func @transform_10(%arg0: i32) -> (i32, i32, i32) {
    %c0_i32 = arith.constant 0 : i32
    %c0_i32_0 = arith.constant 0 : i32
    %c0_i32_1 = arith.constant 0 : i32
    %c0_i32_2 = arith.constant 0 : i32
    return %c0_i32, %c0_i32_0, %c0_i32_1 : i32, i32, i32
  }
  func.func @transform_11(%arg0: i32) -> (i32, i32, i32) {
    %c0_i32 = arith.constant 0 : i32
    %c0_i32_0 = arith.constant 0 : i32
    %c0_i32_1 = arith.constant 0 : i32
    %c0_i32_2 = arith.constant 0 : i32
    return %c0_i32, %c0_i32_0, %c0_i32_1 : i32, i32, i32
  }
  func.func @transform_12(%arg0: i32) -> (i32, i32) {
    %c0_i32 = arith.constant 0 : i32
    %c0_i32_0 = arith.constant 0 : i32
    %c0_i32_1 = arith.constant 0 : i32
    return %c0_i32, %c0_i32_0 : i32, i32
  }
  func.func @transform_13(%arg0: i32) -> (i32, i32) {
    %c0_i32 = arith.constant 0 : i32
    %c0_i32_0 = arith.constant 0 : i32
    %c0_i32_1 = arith.constant 0 : i32
    return %c0_i32, %c0_i32_0 : i32, i32
  }
  func.func @transform_14(%arg0: i32) -> (i32, i32) {
    %c0_i32 = arith.constant 0 : i32
    %c0_i32_0 = arith.constant 0 : i32
    %c0_i32_1 = arith.constant 0 : i32
    return %c0_i32, %c0_i32_0 : i32, i32
  }
  func.func @transform_15(%arg0: i32) -> (i32, i32) {
    %c0_i32 = arith.constant 0 : i32
    %c0_i32_0 = arith.constant 0 : i32
    %c0_i32_1 = arith.constant 0 : i32
    return %c0_i32, %c0_i32_0 : i32, i32
  }
  func.func @transform_16(%arg0: i32) -> (i32, i32) {
    %c0_i32 = arith.constant 0 : i32
    %c0_i32_0 = arith.constant 0 : i32
    return %arg0, %c0_i32 : i32, i32
  }
}

</mosaic_0001>

<llo_original>
// kernel: bigram_forward.1
$region0: #{bigram_forward.1}
  #allocation0 [shape = 'u32[]', space=smem, size = 0x4, offset = 0x4, fixed_abs, tag = 'smem constant byte address 0x4 - core index']
  #allocation1 [shape = 'u32[144,128]{1,0:T(1,128)}', space=vmem, size = 0x12000, scoped, tag = 'internal scratch']
  %s0 = inlined_call_operand.vmem [shape: f32[32,64], index: 0, kind: input, shape index: {}]
  %s1 = inlined_call_operand.vmem [shape: f32[2,1,64], index: 1, kind: input, shape index: {}]
  %s2 = inlined_call_operand.vmem [shape: f32[2,1,64], index: 2, kind: input, shape index: {}]
  %s3 = inlined_call_operand.vmem [shape: f32[2,64,192], index: 3, kind: input, shape index: {}]
  %s4 = inlined_call_operand.vmem [shape: f32[2,64,64], index: 4, kind: input, shape index: {}]
  %s5 = inlined_call_operand.vmem [shape: f32[2,1,64], index: 5, kind: input, shape index: {}]
  %s6 = inlined_call_operand.vmem [shape: f32[2,1,64], index: 6, kind: input, shape index: {}]
  %s7 = inlined_call_operand.vmem [shape: f32[2,1,64], index: 7, kind: input, shape index: {}]
  %s8 = inlined_call_operand.vmem [shape: f32[2,64,256], index: 8, kind: input, shape index: {}]
  %s9 = inlined_call_operand.vmem [shape: f32[2,1,256], index: 9, kind: input, shape index: {}]
  %s10 = inlined_call_operand.vmem [shape: f32[2,256,64], index: 10, kind: input, shape index: {}]
  %s11 = inlined_call_operand.vmem [shape: f32[2,1,64], index: 11, kind: input, shape index: {}]
  %s12 = inlined_call_operand.vmem [shape: f32[1,64], index: 12, kind: input, shape index: {}]
  %s13 = inlined_call_operand.vmem [shape: f32[1,64], index: 13, kind: input, shape index: {}]
  %s14 = inlined_call_operand.vmem [shape: f32[64,128], index: 14, kind: input, shape index: {}]
  %s15 = inlined_call_operand.vmem [shape: f32[1,128], index: 15, kind: input, shape index: {}]
  %s16 = inlined_call_operand.hbm [shape: f32[32,128], index: 16, kind: output, shape index: {}]
  %s17 = sld [smem:[#allocation0]]
  $region97: #{bigram_forward.1} parent=0
    _
  %s19 = ssub.s32 1, %s17
  %s20 = scalar_select 0, %s19, %s17
  $region1: #{bigram_forward.1} parent=0
    #allocation2 [shape = 'u8[16384]{0}', space=vmem, size = 0x4000, scoped, tag = 'output window, operand 0']
    #allocation3 [shape = 's32[2]{0}', space=sflag, size = 0x8, scoped, tag = 'scoped memory for bigram_forward.1']
    %21 = vsyncpa [#allocation3], 0
    %s22 = scalar_lea.sflag [#allocation3], 1
    %23 = vsyncpa %s22, 0
    loop: start=0, step=1, limit=4
    $region2: #{bigram_forward.1} parent=1 // loop_pre_header
      _
    $region3: #{bigram_forward.1} parent=1 // loop_header
      %s25 = sphi 0, %s29
      %p26 = scmp.ge.s32.totalorder %s25, 4
      %s35 = sphi 0, %s37
      %s38 = sphi 0, %s35
      %s39 = sphi 0, %s38
      %s55 = sphi 0, %s39
      %s59 = sphi 0, %s59
      %s61 = sphi 0, %s59
      %s62 = sphi 0, %s61
      %s76 = sphi 0, %s62
      %s80 = sphi 0, %s80
      %s82 = sphi 0, %s80
      %s83 = sphi 0, %s82
      %s97 = sphi 0, %s83
      %s101 = sphi 0, %s101
      %s103 = sphi 0, %s101
      %s104 = sphi 0, %s103
      %s118 = sphi 0, %s104
      %s122 = sphi 0, %s122
      %s124 = sphi 0, %s122
      %s125 = sphi 0, %s124
      %s139 = sphi 0, %s125
      %s143 = sphi 0, %s143
      %s145 = sphi 0, %s143
      %s146 = sphi 0, %s145
      %s160 = sphi 0, %s146
      %s164 = sphi 0, %s164
      %s166 = sphi 0, %s164
      %s167 = sphi 0, %s166
      %s181 = sphi 0, %s167
      %s185 = sphi 0, %s185
      %s187 = sphi 0, %s185
      %s188 = sphi 0, %s187
      %s202 = sphi 0, %s188
      %s206 = sphi 0, %s206
      %s208 = sphi 0, %s206
      %s209 = sphi 0, %s208
      %s223 = sphi 0, %s209
      %s227 = sphi 0, %s227
      %s229 = sphi 0, %s227
      %s230 = sphi 0, %s229
      %s244 = sphi 0, %s230
      %s248 = sphi 0, %s248
      %s250 = sphi 0, %s248
      %s251 = sphi 0, %s250
      %s265 = sphi 0, %s251
      %s269 = sphi 0, %s269
      %s271 = sphi 0, %s269
      %s272 = sphi 0, %s271
      %s286 = sphi 0, %s272
      %s290 = sphi 0, %s290
      %s292 = sphi 0, %s290
      %s293 = sphi 0, %s292
      %s307 = sphi 0, %s293
      %s311 = sphi 0, %s311
      %s313 = sphi 0, %s311
      %s314 = sphi 0, %s313
      %s328 = sphi 0, %s314
      %s332 = sphi 0, %s332
      %s334 = sphi 0, %s332
      %s335 = sphi 0, %s334
      %s349 = sphi 0, %s335
      %s353 = sphi 0, %s353
      %s355 = sphi 0, %s353
      %s356 = sphi 0, %s355
      %s370 = sphi 0, %s356
      %s376 = sphi 0, %s378
      %s379 = sphi 0, %s376
      %s380 = sphi 0, %s379
      %s396 = sphi 0, %s380
    $region4: #{bigram_forward.1} parent=1 // loop_header_branch
      %28 = sbr.rel (%p26) target = $region8
    $region5: #{bigram_forward.1} parent=1 // loop_body
      %s30 = ssub.s32 %s25, 1
      %s31 = ssub.s32 %s25, 2
      %s32 = sadd.s32 %s25, 1
      %s33 = ssub.s32 %s25, %s32
      %p34 = scmp.eq.s32.totalorder %s33, 0
      %s36 = sadd.s32 %s35, 1
      %s37 = scalar_select %p34, %s35, %s36
      %p40 = pneg %p34
      %p41 = scmp.eq.s32.totalorder %s25, 1
      %p42 = por %p40, %p41
      %p43 = scmp.ne.s32.totalorder %s35, %s38
      %p44 = scmp.eq.s32.totalorder %s25, 0
      %p45 = por %p43, %p44
      %p46 = scmp.ne.s32.totalorder %s35, %s38
      %p47 = scmp.eq.s32.totalorder %s30, 1
      %p48 = por %p46, %p47
      %p49 = scmp.ne.s32.totalorder %s38, %s39
      %p50 = scmp.eq.s32.totalorder %s30, 0
      %p51 = por %p49, %p50
      %p52 = scmp.ne.s32.totalorder %s38, %s39
      %p53 = scmp.eq.s32.totalorder %s31, 1
      %p54 = por %p52, %p53
      %p56 = scmp.ne.s32.totalorder %s39, %s55
      %p57 = scmp.eq.s32.totalorder %s31, 0
      %p58 = por %p56, %p57
      %s60 = sadd.s32 %s59, 1
      %p63 = scmp.eq.s32.totalorder %s25, 1
      %p64 = scmp.ne.s32.totalorder %s59, %s61
      %p65 = scmp.eq.s32.totalorder %s25, 0
      %p66 = por %p64, %p65
      %p67 = scmp.ne.s32.totalorder %s59, %s61
      %p68 = scmp.eq.s32.totalorder %s30, 1
      %p69 = por %p67, %p68
      %p70 = scmp.ne.s32.totalorder %s61, %s62
      %p71 = scmp.eq.s32.totalorder %s30, 0
      %p72 = por %p70, %p71
      %p73 = scmp.ne.s32.totalorder %s61, %s62
      %p74 = scmp.eq.s32.totalorder %s31, 1
      %p75 = por %p73, %p74
      %p77 = scmp.ne.s32.totalorder %s62, %s76
      %p78 = scmp.eq.s32.totalorder %s31, 0
      %p79 = por %p77, %p78
      %s81 = sadd.s32 %s80, 1
      %p84 = scmp.eq.s32.totalorder %s25, 1
      %p85 = scmp.ne.s32.totalorder %s80, %s82
      %p86 = scmp.eq.s32.totalorder %s25, 0
      %p87 = por %p85, %p86
      %p88 = scmp.ne.s32.totalorder %s80, %s82
      %p89 = scmp.eq.s32.totalorder %s30, 1
      %p90 = por %p88, %p89
      %p91 = scmp.ne.s32.totalorder %s82, %s83
      %p92 = scmp.eq.s32.totalorder %s30, 0
      %p93 = por %p91, %p92
      %p94 = scmp.ne.s32.totalorder %s82, %s83
      %p95 = scmp.eq.s32.totalorder %s31, 1
      %p96 = por %p94, %p95
      %p98 = scmp.ne.s32.totalorder %s83, %s97
      %p99 = scmp.eq.s32.totalorder %s31, 0
      %p100 = por %p98, %p99
      %s102 = sadd.s32 %s101, 1
      %p105 = scmp.eq.s32.totalorder %s25, 1
      %p106 = scmp.ne.s32.totalorder %s101, %s103
      %p107 = scmp.eq.s32.totalorder %s25, 0
      %p108 = por %p106, %p107
      %p109 = scmp.ne.s32.totalorder %s101, %s103
      %p110 = scmp.eq.s32.totalorder %s30, 1
      %p111 = por %p109, %p110
      %p112 = scmp.ne.s32.totalorder %s103, %s104
      %p113 = scmp.eq.s32.totalorder %s30, 0
      %p114 = por %p112, %p113
      %p115 = scmp.ne.s32.totalorder %s103, %s104
      %p116 = scmp.eq.s32.totalorder %s31, 1
      %p117 = por %p115, %p116
      %p119 = scmp.ne.s32.totalorder %s104, %s118
      %p120 = scmp.eq.s32.totalorder %s31, 0
      %p121 = por %p119, %p120
      %s123 = sadd.s32 %s122, 1
      %p126 = scmp.eq.s32.totalorder %s25, 1
      %p127 = scmp.ne.s32.totalorder %s122, %s124
      %p128 = scmp.eq.s32.totalorder %s25, 0
      %p129 = por %p127, %p128
      %p130 = scmp.ne.s32.totalorder %s122, %s124
      %p131 = scmp.eq.s32.totalorder %s30, 1
      %p132 = por %p130, %p131
      %p133 = scmp.ne.s32.totalorder %s124, %s125
      %p134 = scmp.eq.s32.totalorder %s30, 0
      %p135 = por %p133, %p134
      %p136 = scmp.ne.s32.totalorder %s124, %s125
      %p137 = scmp.eq.s32.totalorder %s31, 1
      %p138 = por %p136, %p137
      %p140 = scmp.ne.s32.totalorder %s125, %s139
      %p141 = scmp.eq.s32.totalorder %s31, 0
      %p142 = por %p140, %p141
      %s144 = sadd.s32 %s143, 1
      %p147 = scmp.eq.s32.totalorder %s25, 1
      %p148 = scmp.ne.s32.totalorder %s143, %s145
      %p149 = scmp.eq.s32.totalorder %s25, 0
      %p150 = por %p148, %p149
      %p151 = scmp.ne.s32.totalorder %s143, %s145
      %p152 = scmp.eq.s32.totalorder %s30, 1
      %p153 = por %p151, %p152
      %p154 = scmp.ne.s32.totalorder %s145, %s146
      %p155 = scmp.eq.s32.totalorder %s30, 0
      %p156 = por %p154, %p155
      %p157 = scmp.ne.s32.totalorder %s145, %s146
      %p158 = scmp.eq.s32.totalorder %s31, 1
      %p159 = por %p157, %p158
      %p161 = scmp.ne.s32.totalorder %s146, %s160
      %p162 = scmp.eq.s32.totalorder %s31, 0
      %p163 = por %p161, %p162
      %s165 = sadd.s32 %s164, 1
      %p168 = scmp.eq.s32.totalorder %s25, 1
      %p169 = scmp.ne.s32.totalorder %s164, %s166
      %p170 = scmp.eq.s32.totalorder %s25, 0
      %p171 = por %p169, %p170
      %p172 = scmp.ne.s32.totalorder %s164, %s166
      %p173 = scmp.eq.s32.totalorder %s30, 1
      %p174 = por %p172, %p173
      %p175 = scmp.ne.s32.totalorder %s166, %s167
      %p176 = scmp.eq.s32.totalorder %s30, 0
      %p177 = por %p175, %p176
      %p178 = scmp.ne.s32.totalorder %s166, %s167
      %p179 = scmp.eq.s32.totalorder %s31, 1
      %p180 = por %p178, %p179
      %p182 = scmp.ne.s32.totalorder %s167, %s181
      %p183 = scmp.eq.s32.totalorder %s31, 0
      %p184 = por %p182, %p183
      %s186 = sadd.s32 %s185, 1
      %p189 = scmp.eq.s32.totalorder %s25, 1
      %p190 = scmp.ne.s32.totalorder %s185, %s187
      %p191 = scmp.eq.s32.totalorder %s25, 0
      %p192 = por %p190, %p191
      %p193 = scmp.ne.s32.totalorder %s185, %s187
      %p194 = scmp.eq.s32.totalorder %s30, 1
      %p195 = por %p193, %p194
      %p196 = scmp.ne.s32.totalorder %s187, %s188
      %p197 = scmp.eq.s32.totalorder %s30, 0
      %p198 = por %p196, %p197
      %p199 = scmp.ne.s32.totalorder %s187, %s188
      %p200 = scmp.eq.s32.totalorder %s31, 1
      %p201 = por %p199, %p200
      %p203 = scmp.ne.s32.totalorder %s188, %s202
      %p204 = scmp.eq.s32.totalorder %s31, 0
      %p205 = por %p203, %p204
      %s207 = sadd.s32 %s206, 1
      %p210 = scmp.eq.s32.totalorder %s25, 1
      %p211 = scmp.ne.s32.totalorder %s206, %s208
      %p212 = scmp.eq.s32.totalorder %s25, 0
      %p213 = por %p211, %p212
      %p214 = scmp.ne.s32.totalorder %s206, %s208
      %p215 = scmp.eq.s32.totalorder %s30, 1
      %p216 = por %p214, %p215
      %p217 = scmp.ne.s32.totalorder %s208, %s209
      %p218 = scmp.eq.s32.totalorder %s30, 0
      %p219 = por %p217, %p218
      %p220 = scmp.ne.s32.totalorder %s208, %s209
      %p221 = scmp.eq.s32.totalorder %s31, 1
      %p222 = por %p220, %p221
      %p224 = scmp.ne.s32.totalorder %s209, %s223
      %p225 = scmp.eq.s32.totalorder %s31, 0
      %p226 = por %p224, %p225
      %s228 = sadd.s32 %s227, 1
      %p231 = scmp.eq.s32.totalorder %s25, 1
      %p232 = scmp.ne.s32.totalorder %s227, %s229
      %p233 = scmp.eq.s32.totalorder %s25, 0
      %p234 = por %p232, %p233
      %p235 = scmp.ne.s32.totalorder %s227, %s229
      %p236 = scmp.eq.s32.totalorder %s30, 1
      %p237 = por %p235, %p236
      %p238 = scmp.ne.s32.totalorder %s229, %s230
      %p239 = scmp.eq.s32.totalorder %s30, 0
      %p240 = por %p238, %p239
      %p241 = scmp.ne.s32.totalorder %s229, %s230
      %p242 = scmp.eq.s32.totalorder %s31, 1
      %p243 = por %p241, %p242
      %p245 = scmp.ne.s32.totalorder %s230, %s244
      %p246 = scmp.eq.s32.totalorder %s31, 0
      %p247 = por %p245, %p246
      %s249 = sadd.s32 %s248, 1
      %p252 = scmp.eq.s32.totalorder %s25, 1
      %p253 = scmp.ne.s32.totalorder %s248, %s250
      %p254 = scmp.eq.s32.totalorder %s25, 0
      %p255 = por %p253, %p254
      %p256 = scmp.ne.s32.totalorder %s248, %s250
      %p257 = scmp.eq.s32.totalorder %s30, 1
      %p258 = por %p256, %p257
      %p259 = scmp.ne.s32.totalorder %s250, %s251
      %p260 = scmp.eq.s32.totalorder %s30, 0
      %p261 = por %p259, %p260
      %p262 = scmp.ne.s32.totalorder %s250, %s251
      %p263 = scmp.eq.s32.totalorder %s31, 1
      %p264 = por %p262, %p263
      %p266 = scmp.ne.s32.totalorder %s251, %s265
      %p267 = scmp.eq.s32.totalorder %s31, 0
      %p268 = por %p266, %p267
      %s270 = sadd.s32 %s269, 1
      %p273 = scmp.eq.s32.totalorder %s25, 1
      %p274 = scmp.ne.s32.totalorder %s269, %s271
      %p275 = scmp.eq.s32.totalorder %s25, 0
      %p276 = por %p274, %p275
      %p277 = scmp.ne.s32.totalorder %s269, %s271
      %p278 = scmp.eq.s32.totalorder %s30, 1
      %p279 = por %p277, %p278
      %p280 = scmp.ne.s32.totalorder %s271, %s272
      %p281 = scmp.eq.s32.totalorder %s30, 0
      %p282 = por %p280, %p281
      %p283 = scmp.ne.s32.totalorder %s271, %s272
      %p284 = scmp.eq.s32.totalorder %s31, 1
      %p285 = por %p283, %p284
      %p287 = scmp.ne.s32.totalorder %s272, %s286
      %p288 = scmp.eq.s32.totalorder %s31, 0
      %p289 = por %p287, %p288
      %s291 = sadd.s32 %s290, 1
      %p294 = scmp.eq.s32.totalorder %s25, 1
      %p295 = scmp.ne.s32.totalorder %s290, %s292
      %p296 = scmp.eq.s32.totalorder %s25, 0
      %p297 = por %p295, %p296
      %p298 = scmp.ne.s32.totalorder %s290, %s292
      %p299 = scmp.eq.s32.totalorder %s30, 1
      %p300 = por %p298, %p299
      %p301 = scmp.ne.s32.totalorder %s292, %s293
      %p302 = scmp.eq.s32.totalorder %s30, 0
      %p303 = por %p301, %p302
      %p304 = scmp.ne.s32.totalorder %s292, %s293
      %p305 = scmp.eq.s32.totalorder %s31, 1
      %p306 = por %p304, %p305
      %p308 = scmp.ne.s32.totalorder %s293, %s307
      %p309 = scmp.eq.s32.totalorder %s31, 0
      %p310 = por %p308, %p309
      %s312 = sadd.s32 %s311, 1
      %p315 = scmp.eq.s32.totalorder %s25, 1
      %p316 = scmp.ne.s32.totalorder %s311, %s313
      %p317 = scmp.eq.s32.totalorder %s25, 0
      %p318 = por %p316, %p317
      %p319 = scmp.ne.s32.totalorder %s311, %s313
      %p320 = scmp.eq.s32.totalorder %s30, 1
      %p321 = por %p319, %p320
      %p322 = scmp.ne.s32.totalorder %s313, %s314
      %p323 = scmp.eq.s32.totalorder %s30, 0
      %p324 = por %p322, %p323
      %p325 = scmp.ne.s32.totalorder %s313, %s314
      %p326 = scmp.eq.s32.totalorder %s31, 1
      %p327 = por %p325, %p326
      %p329 = scmp.ne.s32.totalorder %s314, %s328
      %p330 = scmp.eq.s32.totalorder %s31, 0
      %p331 = por %p329, %p330
      %s333 = sadd.s32 %s332, 1
      %p336 = scmp.eq.s32.totalorder %s25, 1
      %p337 = scmp.ne.s32.totalorder %s332, %s334
      %p338 = scmp.eq.s32.totalorder %s25, 0
      %p339 = por %p337, %p338
      %p340 = scmp.ne.s32.totalorder %s332, %s334
      %p341 = scmp.eq.s32.totalorder %s30, 1
      %p342 = por %p340, %p341
      %p343 = scmp.ne.s32.totalorder %s334, %s335
      %p344 = scmp.eq.s32.totalorder %s30, 0
      %p345 = por %p343, %p344
      %p346 = scmp.ne.s32.totalorder %s334, %s335
      %p347 = scmp.eq.s32.totalorder %s31, 1
      %p348 = por %p346, %p347
      %p350 = scmp.ne.s32.totalorder %s335, %s349
      %p351 = scmp.eq.s32.totalorder %s31, 0
      %p352 = por %p350, %p351
      %s354 = sadd.s32 %s353, 1
      %p357 = scmp.eq.s32.totalorder %s25, 1
      %p358 = scmp.ne.s32.totalorder %s353, %s355
      %p359 = scmp.eq.s32.totalorder %s25, 0
      %p360 = por %p358, %p359
      %p361 = scmp.ne.s32.totalorder %s353, %s355
      %p362 = scmp.eq.s32.totalorder %s30, 1
      %p363 = por %p361, %p362
      %p364 = scmp.ne.s32.totalorder %s355, %s356
      %p365 = scmp.eq.s32.totalorder %s30, 0
      %p366 = por %p364, %p365
      %p367 = scmp.ne.s32.totalorder %s355, %s356
      %p368 = scmp.eq.s32.totalorder %s31, 1
      %p369 = por %p367, %p368
      %p371 = scmp.ne.s32.totalorder %s356, %s370
      %p372 = scmp.eq.s32.totalorder %s31, 0
      %p373 = por %p371, %p372
      %s374 = ssub.s32 %s25, %s32
      %p375 = scmp.eq.s32.totalorder %s374, 0
      %s377 = sadd.s32 %s376, 1
      %s378 = scalar_select %p375, %s376, %s377
      %p381 = pneg %p375
      %p382 = scmp.eq.s32.totalorder %s25, 1
      %p383 = por %p381, %p382
      %p384 = scmp.ne.s32.totalorder %s376, %s379
      %p385 = scmp.eq.s32.totalorder %s25, 0
      %p386 = por %p384, %p385
      %p387 = scmp.ne.s32.totalorder %s376, %s379
      %p388 = scmp.eq.s32.totalorder %s30, 1
      %p389 = por %p387, %p388
      %p390 = scmp.ne.s32.totalorder %s379, %s380
      %p391 = scmp.eq.s32.totalorder %s30, 0
      %p392 = por %p390, %p391
      %p393 = scmp.ne.s32.totalorder %s379, %s380
      %p394 = scmp.eq.s32.totalorder %s31, 1
      %p395 = por %p393, %p394
      %p397 = scmp.ne.s32.totalorder %s380, %s396
      %p398 = scmp.eq.s32.totalorder %s31, 0
      %p399 = por %p397, %p398
      %p400 = scmp.le.s32.totalorder 1, %s25
      %p401 = scmp.lt.s32.totalorder %s25, 3
      %p402 = pnand %p400, %p401
      %p403 = pneg %p402
      // Predicated region
      $region9: #{bigram_forward.1} parent=5 // pred_check
        _
      $region10: #{bigram_forward.1} parent=5 // pred_check_branch
        %405 = sbr.rel (%p402) target = $region12
      $region11: #{bigram_forward.1} parent=5 // pred_region
        %s406 = ssub.s32 %s25, 1
        // Predicated region
        $region13: #{bigram_forward.1} parent=11 // pred_check
          %p407 = pneg %p72
        $region14: #{bigram_forward.1} parent=11 // pred_check_branch
          %409 = sbr.rel (%p407) target = $region16
        $region15: #{bigram_forward.1} parent=11 // pred_region
          _
        $region16: #{bigram_forward.1} parent=11 // pred_fallthru
          _
        // Predicated region
        $region17: #{bigram_forward.1} parent=11 // pred_check
          %p410 = pneg %p93
        $region18: #{bigram_forward.1} parent=11 // pred_check_branch
          %412 = sbr.rel (%p410) target = $region20
        $region19: #{bigram_forward.1} parent=11 // pred_region
          _
        $region20: #{bigram_forward.1} parent=11 // pred_fallthru
          _
        // Predicated region
        $region21: #{bigram_forward.1} parent=11 // pred_check
          %p413 = pneg %p114
        $region22: #{bigram_forward.1} parent=11 // pred_check_branch
          %415 = sbr.rel (%p413) target = $region24
        $region23: #{bigram_forward.1} parent=11 // pred_region
          _
        $region24: #{bigram_forward.1} parent=11 // pred_fallthru
          _
        // Predicated region
        $region25: #{bigram_forward.1} parent=11 // pred_check
          %p416 = pneg %p135
        $region26: #{bigram_forward.1} parent=11 // pred_check_branch
          %418 = sbr.rel (%p416) target = $region28
        $region27: #{bigram_forward.1} parent=11 // pred_region
          _
        $region28: #{bigram_forward.1} parent=11 // pred_fallthru
          _
        // Predicated region
        $region29: #{bigram_forward.1} parent=11 // pred_check
          %p419 = pneg %p156
        $region30: #{bigram_forward.1} parent=11 // pred_check_branch
          %421 = sbr.rel (%p419) target = $region32
        $region31: #{bigram_forward.1} parent=11 // pred_region
          _
        $region32: #{bigram_forward.1} parent=11 // pred_fallthru
          _
        // Predicated region
        $region33: #{bigram_forward.1} parent=11 // pred_check
          %p422 = pneg %p177
        $region34: #{bigram_forward.1} parent=11 // pred_check_branch
          %424 = sbr.rel (%p422) target = $region36
        $region35: #{bigram_forward.1} parent=11 // pred_region
          _
        $region36: #{bigram_forward.1} parent=11 // pred_fallthru
          _
        // Predicated region
        $region37: #{bigram_forward.1} parent=11 // pred_check
          %p425 = pneg %p198
        $region38: #{bigram_forward.1} parent=11 // pred_check_branch
          %427 = sbr.rel (%p425) target = $region40
        $region39: #{bigram_forward.1} parent=11 // pred_region
          _
        $region40: #{bigram_forward.1} parent=11 // pred_fallthru
          _
        // Predicated region
        $region41: #{bigram_forward.1} parent=11 // pred_check
          %p428 = pneg %p219
        $region42: #{bigram_forward.1} parent=11 // pred_check_branch
          %430 = sbr.rel (%p428) target = $region44
        $region43: #{bigram_forward.1} parent=11 // pred_region
          _
        $region44: #{bigram_forward.1} parent=11 // pred_fallthru
          _
        // Predicated region
        $region45: #{bigram_forward.1} parent=11 // pred_check
          %p431 = pneg %p240
        $region46: #{bigram_forward.1} parent=11 // pred_check_branch
          %433 = sbr.rel (%p431) target = $region48
        $region47: #{bigram_forward.1} parent=11 // pred_region
          _
        $region48: #{bigram_forward.1} parent=11 // pred_fallthru
          _
        // Predicated region
        $region49: #{bigram_forward.1} parent=11 // pred_check
          %p434 = pneg %p261
        $region50: #{bigram_forward.1} parent=11 // pred_check_branch
          %436 = sbr.rel (%p434) target = $region52
        $region51: #{bigram_forward.1} parent=11 // pred_region
          _
        $region52: #{bigram_forward.1} parent=11 // pred_fallthru
          _
        // Predicated region
        $region53: #{bigram_forward.1} parent=11 // pred_check
          %p437 = pneg %p282
        $region54: #{bigram_forward.1} parent=11 // pred_check_branch
          %439 = sbr.rel (%p437) target = $region56
        $region55: #{bigram_forward.1} parent=11 // pred_region
          _
        $region56: #{bigram_forward.1} parent=11 // pred_fallthru
          _
        // Predicated region
        $region57: #{bigram_forward.1} parent=11 // pred_check
          %p440 = pneg %p303
        $region58: #{bigram_forward.1} parent=11 // pred_check_branch
          %442 = sbr.rel (%p440) target = $region60
        $region59: #{bigram_forward.1} parent=11 // pred_region
          _
        $region60: #{bigram_forward.1} parent=11 // pred_fallthru
          _
        // Predicated region
        $region61: #{bigram_forward.1} parent=11 // pred_check
          %p443 = pneg %p324
        $region62: #{bigram_forward.1} parent=11 // pred_check_branch
          %445 = sbr.rel (%p443) target = $region64
        $region63: #{bigram_forward.1} parent=11 // pred_region
          _
        $region64: #{bigram_forward.1} parent=11 // pred_fallthru
          _
        // Predicated region
        $region65: #{bigram_forward.1} parent=11 // pred_check
          %p446 = pneg %p345
        $region66: #{bigram_forward.1} parent=11 // pred_check_branch
          %448 = sbr.rel (%p446) target = $region68
        $region67: #{bigram_forward.1} parent=11 // pred_region
          _
        $region68: #{bigram_forward.1} parent=11 // pred_fallthru
          _
        // Predicated region
        $region69: #{bigram_forward.1} parent=11 // pred_check
          %p449 = pneg %p366
        $region70: #{bigram_forward.1} parent=11 // pred_check_branch
          %451 = sbr.rel (%p449) target = $region72
        $region71: #{bigram_forward.1} parent=11 // pred_region
          _
        $region72: #{bigram_forward.1} parent=11 // pred_fallthru
          _
      $region12: #{bigram_forward.1} parent=5 // pred_fallthru
        _
      %p452 = scmp.lt.s32.totalorder %s25, 2
      // Predicated region
      $region73: #{bigram_forward.1} parent=5 // pred_check
        %p453 = pneg %p452
      $region74: #{bigram_forward.1} parent=5 // pred_check_branch
        %455 = sbr.rel (%p453) target = $region76
      $region75: #{bigram_forward.1} parent=5 // pred_region
        // Predicated region
        $region77: #{bigram_forward.1} parent=75 // pred_check
          %p456 = pneg %p45
        $region78: #{bigram_forward.1} parent=75 // pred_check_branch
          %458 = sbr.rel (%p456) target = $region80
        $region79: #{bigram_forward.1} parent=75 // pred_region
          %s459 = smul.u32 2, %s25
          %p460 = scmp.lt.s32.totalorder %s459, 3
          %s461 = scalar_select %p460, %s459, 3
          %s462 = smul.addr %s461, 8
          %s463 = scalar_lea.vmem %s0, %s462
          %s464 = smul.u32 2, %s25
        $region80: #{bigram_forward.1} parent=75 // pred_fallthru
          _
      $region76: #{bigram_forward.1} parent=5 // pred_fallthru
        _
      %p465 = scmp.le.s32.totalorder 1, %s25
      %p466 = scmp.lt.s32.totalorder %s25, 3
      %p467 = pnand %p465, %p466
      %p468 = pneg %p467
      // Predicated region
      $region81: #{bigram_forward.1} parent=5 // pred_check
        _
      $region82: #{bigram_forward.1} parent=5 // pred_check_branch
        %470 = sbr.rel (%p467) target = $region84
      $region83: #{bigram_forward.1} parent=5 // pred_region
        %s471 = ssub.s32 %s25, 1
        %s472 = smul.u32 2, %s30
        %p473 = scmp.lt.s32.totalorder %s472, 3
        %s474 = scalar_select %p473, %s472, 3
        %s475 = smul.addr %s474, 8
        %s476 = scalar_lea.vmem %s0, %s475
        %p477 = pneg %p51
        %p478 = pneg %p48
        %p479 = pneg %p72
        %p480 = pneg %p69
        %p481 = pneg %p93
        %p482 = pneg %p90
        %p483 = pneg %p114
        %p484 = pneg %p111
        %p485 = pneg %p135
        %p486 = pneg %p132
        %p487 = pneg %p156
        %p488 = pneg %p153
        %p489 = pneg %p177
        %p490 = pneg %p174
        %p491 = pneg %p198
        %p492 = pneg %p195
        %p493 = pneg %p219
        %p494 = pneg %p216
        %p495 = pneg %p240
        %p496 = pneg %p237
        %p497 = pneg %p261
        %p498 = pneg %p258
        %p499 = pneg %p282
        %p500 = pneg %p279
        %p501 = pneg %p303
        %p502 = pneg %p300
        %p503 = pneg %p324
        %p504 = pneg %p321
        %p505 = pneg %p345
        %p506 = pneg %p342
        %p507 = pneg %p366
        %p508 = pneg %p363
        %p509 = pneg %p392
        %p510 = pneg %p389
        %s511 = sand.u32 %s379, 1
        %s512 = scalar_lea.sflag [#allocation3], %s511
        %s513 = sand.u32 %s379, 1
        %s514 = smul.addr %s513, 16
        %s515 = scalar_lea.vmem [#allocation2], %s514
        %s516 = smul.u32 2, %s30
        %p517 = scmp.lt.s32.totalorder %s516, 3
        %s518 = scalar_select %p517, %s516, 3
        %s519 = smul.addr %s518, 8
        %s520 = scalar_lea.vmem %s0, %s519
        %s521 = smul.u32 2, %s30
        %s522 = smul.u32 2, %s30
        %v523 = vld [vmem:[%s520] sm:$0xff]
        %v524 = vld [vmem:[%s520 + $0x8] sm:$0xff]
        %v525 = vlaneseq
        %v526 = vshrl.u32 %v525, 7
        %v527 = vadd.s32 %v526, 8
        %v528 = vlaneseq
        %v529 = vand.u32 %v528, 127
        %vm530 = vcmp.le.s32.totalorder %v529, %v526
        %vm531 = vcmp.le.s32.totalorder %v529, %v527
        %v532 = vsel %vm530, 0.0, -1e+30
        %v533 = vsel %vm531, 0.0, -1e+30
        %v534 = vld [vmem:[%s1] sm:$0x1]
        %v535 = vld [vmem:[%s2] sm:$0x1]
        %vm536 = vcmask 523264
        %v537 = vsel %vm536, %v523, 0.0
        %538 = vadd.xlane.f32.xlu0 %v537
        %v539 = vpop.xlane.xlu0 %538
        %v540 = vsel %vm536, %v524, 0.0
        %541 = vadd.xlane.f32.xlu0 %v540
        %v542 = vpop.xlane.xlu0 %541
        %v543 = vrcp.pop 64.0
        %v544 = vmul.f32 %v539, %v543
        %v545 = vmul.f32 %v542, %v543
        %v546 = vsub.f32 %v523, %v544
        %v547 = vsub.f32 %v524, %v545
        %v548 = vmul.f32 %v546, %v546
        %v549 = vmul.f32 %v547, %v547
        %v550 = vsel %vm536, %v548, 0.0
        %551 = vadd.xlane.f32.xlu0 %v550
        %v552 = vpop.xlane.xlu0 %551
        %v553 = vsel %vm536, %v549, 0.0
        %554 = vadd.xlane.f32.xlu0 %v553
        %v555 = vpop.xlane.xlu0 %554
        %v556 = vmul.f32 %v552, %v543
        %v557 = vmul.f32 %v555, %v543
        %v558 = vadd.f32 %v556, 1e-05
        %v559 = vadd.f32 %v557, 1e-05
        %v560 = vrsqrt.pop %v558
        %v561 = vrsqrt.pop %v559
        %v562 = vmul.f32 %v546, %v560
        %v563 = vmul.f32 %v547, %v561
        %v565 = vlaneseq
        %v566 = vshrl.u32 %v565, 7
        %v567 = vsub.s32 0, %v566
        %v568 = vrot.slane %v534, %v567
        %v570 = vmul.f32 %v562, %v568
        %v571 = vmul.f32 %v563, %v568
        %v573 = vlaneseq
        %v574 = vshrl.u32 %v573, 7
        %v575 = vsub.s32 0, %v574
        %v576 = vrot.slane %v535, %v575
        %v578 = vadd.f32 %v570, %v576
        %v579 = vadd.f32 %v571, %v576
        %v580 = vld [vmem:[%s3] sm:$0xff]
        %v581 = vld [vmem:[%s3 + $0x8] sm:$0xff]
        %v582 = vld [vmem:[%s3 + $0x10] sm:$0xff]
        %v583 = vld [vmem:[%s3 + $0x18] sm:$0xff]
        %v584 = vld [vmem:[%s3 + $0x20] sm:$0xff]
        %v585 = vld [vmem:[%s3 + $0x28] sm:$0xff]
        %v586 = vld [vmem:[%s3 + $0x30] sm:$0xff]
        %v587 = vld [vmem:[%s3 + $0x38] sm:$0xff]
        %v588 = vld [vmem:[%s3 + $0x40] sm:$0xff]
        %v589 = vld [vmem:[%s3 + $0x48] sm:$0xff]
        %v590 = vld [vmem:[%s3 + $0x50] sm:$0xff]
        %v591 = vld [vmem:[%s3 + $0x58] sm:$0xff]
        %v592 = vld [vmem:[%s3 + $0x60] sm:$0xff]
        %v593 = vld [vmem:[%s3 + $0x68] sm:$0xff]
        %v594 = vld [vmem:[%s3 + $0x70] sm:$0xff]
        %v595 = vld [vmem:[%s3 + $0x78] sm:$0xff]
        %v597 = vsel %vm536, %v578, 0
        %v600 = vsel %vm536, %v579, 0
        %602 = vmatprep.subr.mxu0 %v581
        %603 = vmatpush1.msra.mxu0 %v580
        %604 = vmatprep.subr.mxu0 %v583
        %605 = vmatpush1.msra.mxu0 %v582
        %606 = vmatprep.subr.mxu0 %v585
        %607 = vmatpush1.msra.mxu0 %v584
        %608 = vmatprep.subr.mxu0 %v587
        %609 = vmatpush1.msra.mxu0 %v586
        %610 = vmatprep.subr.mxu0 %v589
        %611 = vmatpush1.msra.mxu0 %v588
        %612 = vmatprep.subr.mxu0 %v591
        %613 = vmatpush1.msra.mxu0 %v590
        %614 = vmatprep.subr.mxu0 %v593
        %615 = vmatpush1.msra.mxu0 %v592
        %616 = vmatprep.subr.mxu0 %v595
        %617 = vmatpush1.msra.mxu0 %v594
        %618 = vmatprep.subr.mxu0 0.0
        %619 = vmatpush1.msra.mxu0 0.0
        %620 = vmatprep.subr.mxu0 0.0
        %621 = vmatpush1.msra.mxu0 0.0
        %622 = vmatprep.subr.mxu0 0.0
        %623 = vmatpush1.msra.mxu0 0.0
        %624 = vmatprep.subr.mxu0 0.0
        %625 = vmatpush1.msra.mxu0 0.0
        %626 = vmatprep.subr.mxu0 0.0
        %627 = vmatpush1.msra.mxu0 0.0
        %628 = vmatprep.subr.mxu0 0.0
        %629 = vmatpush1.msra.mxu0 0.0
        %630 = vmatprep.subr.mxu0 0.0
        %631 = vmatpush1.msra.mxu0 0.0
        %632 = vmatprep.subr.mxu0 0.0
        %633 = vmatpush1.msra.mxu0 0.0
        %634 = vmatprep.subr.mxu0 0.0
        %635 = vmatpush1.msra.mxu0 0.0
        %636 = vmatprep.subr.mxu0 0.0
        %637 = vmatpush1.msra.mxu0 0.0
        %638 = vmatprep.subr.mxu0 0.0
        %639 = vmatpush1.msra.mxu0 0.0
        %640 = vmatprep.subr.mxu0 0.0
        %641 = vmatpush1.msra.mxu0 0.0
        %642 = vmatprep.subr.mxu0 0.0
        %643 = vmatpush1.msra.mxu0 0.0
        %644 = vmatprep.subr.mxu0 0.0
        %645 = vmatpush1.msra.mxu0 0.0
        %646 = vmatprep.subr.mxu0 0.0
        %647 = vmatpush1.msra.mxu0 0.0
        %648 = vmatprep.subr.mxu0 0.0
        %649 = vmatpush1.msra.mxu0 0.0
        %650 = vmatprep.subr.mxu0 0.0
        %651 = vmatpush1.msra.mxu0 0.0
        %652 = vmatprep.subr.mxu0 0.0
        %653 = vmatpush1.msra.mxu0 0.0
        %654 = vmatprep.subr.mxu0 0.0
        %655 = vmatpush1.msra.mxu0 0.0
        %656 = vmatprep.subr.mxu0 0.0
        %657 = vmatpush1.msra.mxu0 0.0
        %658 = vmatprep.subr.mxu0 0.0
        %659 = vmatpush1.msra.mxu0 0.0
        %660 = vmatprep.subr.mxu0 0.0
        %661 = vmatpush1.msra.mxu0 0.0
        %662 = vmatprep.subr.mxu0 0.0
        %663 = vmatpush1.msra.mxu0 0.0
        %664 = vmatprep.subr.mxu0 0.0
        %665 = vmatpush1.msra.mxu0 0.0
        %666 = vmatprep.mubr.f32.mxu0 0.0
        %667 = vmatmul.mubr.f32.gmra.mrb[0].mxu0 %v597
        %v668 = vpop.f32.mrb[0].mxu0
        %v669 = vadd.f32 0.0, %v668
        %v670 = vpop.f32.mrb[0].mxu0
        %v671 = vadd.f32 0.0, %v670
        %672 = vmatprep.mubr.f32.mxu0 0.0
        %673 = vmatmul.mubr.f32.gmra.mrb[0].mxu0 %v600
        %v674 = vpop.f32.mrb[0].mxu0
        %v675 = vadd.f32 0.0, %v674
        %v676 = vpop.f32.mrb[0].mxu0
        %v677 = vadd.f32 0.0, %v676
        %678 = vdwg.mxu0
        %681 = vrot.lane.b32.xlu0 %v669, 64
        %v682 = vpop.permute.xlu0 %681
        %683 = vrot.lane.b32.xlu0 %v675, 64
        %v684 = vpop.permute.xlu0 %683
        %vm685 = vcmask 130048
        %v686 = vsel %vm685, %v669, 0
        %v688 = vsel %vm685, %v675, 0
        %v690 = vsel %vm685, %v682, 0
        %v692 = vsel %vm685, %v684, 0
        %694 = vmatprep.subr.mxu0 0.0
        %695 = vmatpush1.xpose.msra.mxu0 %v690
        %696 = vmatprep.subr.mxu0 0.0
        %697 = vmatpush1.xpose.msra.mxu0 %v692
        %698 = vmatprep.subr.mxu0 0.0
        %699 = vmatpush1.xpose.msra.mxu0 0.0
        %700 = vmatprep.subr.mxu0 0.0
        %701 = vmatpush1.xpose.msra.mxu0 0.0
        %702 = vmatprep.subr.mxu0 0.0
        %703 = vmatpush1.xpose.msra.mxu0 0.0
        %704 = vmatprep.subr.mxu0 0.0
        %705 = vmatpush1.xpose.msra.mxu0 0.0
        %706 = vmatprep.subr.mxu0 0.0
        %707 = vmatpush1.xpose.msra.mxu0 0.0
        %708 = vmatprep.subr.mxu0 0.0
        %709 = vmatpush1.xpose.msra.mxu0 0.0
        %710 = vmatprep.subr.mxu0 0.0
        %711 = vmatpush1.xpose.msra.mxu0 0.0
        %712 = vmatprep.subr.mxu0 0.0
        %713 = vmatpush1.xpose.msra.mxu0 0.0
        %714 = vmatprep.subr.mxu0 0.0
        %715 = vmatpush1.xpose.msra.mxu0 0.0
        %716 = vmatprep.subr.mxu0 0.0
        %717 = vmatpush1.xpose.msra.mxu0 0.0
        %718 = vmatprep.subr.mxu0 0.0
        %719 = vmatpush1.xpose.msra.mxu0 0.0
        %720 = vmatprep.subr.mxu0 0.0
        %721 = vmatpush1.xpose.msra.mxu0 0.0
        %722 = vmatprep.subr.mxu0 0.0
        %723 = vmatpush1.xpose.msra.mxu0 0.0
        %724 = vmatprep.subr.mxu0 0.0
        %725 = vmatpush1.xpose.msra.mxu0 0.0
        %726 = vmatprep.subr.mxu0 0.0
        %727 = vmatpush1.xpose.msra.mxu0 0.0
        %728 = vmatprep.subr.mxu0 0.0
        %729 = vmatpush1.xpose.msra.mxu0 0.0
        %730 = vmatprep.subr.mxu0 0.0
        %731 = vmatpush1.xpose.msra.mxu0 0.0
        %732 = vmatprep.subr.mxu0 0.0
        %733 = vmatpush1.xpose.msra.mxu0 0.0
        %734 = vmatprep.subr.mxu0 0.0
        %735 = vmatpush1.xpose.msra.mxu0 0.0
        %736 = vmatprep.subr.mxu0 0.0
        %737 = vmatpush1.xpose.msra.mxu0 0.0
        %738 = vmatprep.subr.mxu0 0.0
        %739 = vmatpush1.xpose.msra.mxu0 0.0
        %740 = vmatprep.subr.mxu0 0.0
        %741 = vmatpush1.xpose.msra.mxu0 0.0
        %742 = vmatprep.subr.mxu0 0.0
        %743 = vmatpush1.xpose.msra.mxu0 0.0
        %744 = vmatprep.subr.mxu0 0.0
        %745 = vmatpush1.xpose.msra.mxu0 0.0
        %746 = vmatprep.subr.mxu0 0.0
        %747 = vmatpush1.xpose.msra.mxu0 0.0
        %748 = vmatprep.subr.mxu0 0.0
        %749 = vmatpush1.xpose.msra.mxu0 0.0
        %750 = vmatprep.subr.mxu0 0.0
        %751 = vmatpush1.xpose.msra.mxu0 0.0
        %752 = vmatprep.subr.mxu0 0.0
        %753 = vmatpush1.xpose.msra.mxu0 0.0
        %754 = vmatprep.subr.mxu0 0.0
        %755 = vmatpush1.xpose.msra.mxu0 0.0
        %756 = vmatprep.subr.mxu0 0.0
        %757 = vmatpush1.xpose.msra.mxu0 0.0
        %758 = vmatprep.mubr.f32.mxu0 0.0
        %759 = vmatmul.mubr.f32.gmra.mrb[0].mxu0 %v686
        %v760 = vpop.f32.mrb[0].mxu0
        %v761 = vadd.f32 0.0, %v760
        %v762 = vpop.f32.mrb[0].mxu0
        %763 = vmatprep.mubr.f32.mxu0 0.0
        %764 = vmatmul.mubr.f32.gmra.mrb[0].mxu0 %v688
        %v765 = vpop.f32.mrb[0].mxu0
        %v766 = vadd.f32 0.0, %v765
        %v767 = vpop.f32.mrb[0].mxu0
        %768 = vdwg.mxu0
        %v769 = vmul.f32 %v761, 0.125
        %v770 = vmul.f32 %v766, 0.125
        %v771 = vadd.f32 %v769, %v532
        %v772 = vadd.f32 %v770, %v533
        %v773 = vsel %vm685, %v771, -inf
        %774 = vmax.xlane.f32.xlu0 %v773
        %v775 = vpop.xlane.xlu0 %774
        %v776 = vsel %vm685, %v772, -inf
        %777 = vmax.xlane.f32.xlu0 %v776
        %v778 = vpop.xlane.xlu0 %777
        %v779 = vsub.f32 %v771, %v775
        %v780 = vsub.f32 %v772, %v778
        %v781 = vmul.f32 %v779, 1.442695
        %v782 = vpow.pop %v781
        %v783 = vmul.f32 %v780, 1.442695
        %v784 = vpow.pop %v783
        %v785 = vsel %vm685, %v782, 0.0
        %786 = vadd.xlane.f32.xlu0 %v785
        %v787 = vpop.xlane.xlu0 %786
        %v788 = vsel %vm685, %v784, 0.0
        %789 = vadd.xlane.f32.xlu0 %v788
        %v790 = vpop.xlane.xlu0 %789
        %v791 = vrcp.pop %v787
        %v792 = vmul.f32 %v782, %v791
        %v793 = vrcp.pop %v790
        %v794 = vmul.f32 %v784, %v793
        %v796 = vsel %vm685, %v792, 0
        %v799 = vsel %vm685, %v794, 0
        %801 = vmatprep.subr.mxu0 0.0
        %802 = vmatpush1.msra.mxu0 %v671
        %803 = vmatprep.subr.mxu0 0.0
        %804 = vmatpush1.msra.mxu0 %v677
        %805 = vmatprep.subr.mxu0 0.0
        %806 = vmatpush1.msra.mxu0 0.0
        %807 = vmatprep.subr.mxu0 0.0
        %808 = vmatpush1.msra.mxu0 0.0
        %809 = vmatprep.subr.mxu0 0.0
        %810 = vmatpush1.msra.mxu0 0.0
        %811 = vmatprep.subr.mxu0 0.0
        %812 = vmatpush1.msra.mxu0 0.0
        %813 = vmatprep.subr.mxu0 0.0
        %814 = vmatpush1.msra.mxu0 0.0
        %815 = vmatprep.subr.mxu0 0.0
        %816 = vmatpush1.msra.mxu0 0.0
        %817 = vmatprep.subr.mxu0 0.0
        %818 = vmatpush1.msra.mxu0 0.0
        %819 = vmatprep.subr.mxu0 0.0
        %820 = vmatpush1.msra.mxu0 0.0
        %821 = vmatprep.subr.mxu0 0.0
        %822 = vmatpush1.msra.mxu0 0.0
        %823 = vmatprep.subr.mxu0 0.0
        %824 = vmatpush1.msra.mxu0 0.0
        %825 = vmatprep.subr.mxu0 0.0
        %826 = vmatpush1.msra.mxu0 0.0
        %827 = vmatprep.subr.mxu0 0.0
        %828 = vmatpush1.msra.mxu0 0.0
        %829 = vmatprep.subr.mxu0 0.0
        %830 = vmatpush1.msra.mxu0 0.0
        %831 = vmatprep.subr.mxu0 0.0
        %832 = vmatpush1.msra.mxu0 0.0
        %833 = vmatprep.subr.mxu0 0.0
        %834 = vmatpush1.msra.mxu0 0.0
        %835 = vmatprep.subr.mxu0 0.0
        %836 = vmatpush1.msra.mxu0 0.0
        %837 = vmatprep.subr.mxu0 0.0
        %838 = vmatpush1.msra.mxu0 0.0
        %839 = vmatprep.subr.mxu0 0.0
        %840 = vmatpush1.msra.mxu0 0.0
        %841 = vmatprep.subr.mxu0 0.0
        %842 = vmatpush1.msra.mxu0 0.0
        %843 = vmatprep.subr.mxu0 0.0
        %844 = vmatpush1.msra.mxu0 0.0
        %845 = vmatprep.subr.mxu0 0.0
        %846 = vmatpush1.msra.mxu0 0.0
        %847 = vmatprep.subr.mxu0 0.0
        %848 = vmatpush1.msra.mxu0 0.0
        %849 = vmatprep.subr.mxu0 0.0
        %850 = vmatpush1.msra.mxu0 0.0
        %851 = vmatprep.subr.mxu0 0.0
        %852 = vmatpush1.msra.mxu0 0.0
        %853 = vmatprep.subr.mxu0 0.0
        %854 = vmatpush1.msra.mxu0 0.0
        %855 = vmatprep.subr.mxu0 0.0
        %856 = vmatpush1.msra.mxu0 0.0
        %857 = vmatprep.subr.mxu0 0.0
        %858 = vmatpush1.msra.mxu0 0.0
        %859 = vmatprep.subr.mxu0 0.0
        %860 = vmatpush1.msra.mxu0 0.0
        %861 = vmatprep.subr.mxu0 0.0
        %862 = vmatpush1.msra.mxu0 0.0
        %863 = vmatprep.subr.mxu0 0.0
        %864 = vmatpush1.msra.mxu0 0.0
        %865 = vmatprep.mubr.f32.mxu0 0.0
        %866 = vmatmul.mubr.f32.gmra.mrb[0].mxu0 %v796
        %v867 = vpop.f32.mrb[0].mxu0
        %v868 = vadd.f32 0.0, %v867
        %v869 = vpop.f32.mrb[0].mxu0
        %870 = vmatprep.mubr.f32.mxu0 0.0
        %871 = vmatmul.mubr.f32.gmra.mrb[0].mxu0 %v799
        %v872 = vpop.f32.mrb[0].mxu0
        %v873 = vadd.f32 0.0, %v872
        %v874 = vpop.f32.mrb[0].mxu0
        %875 = vdwg.mxu0
        %876 = vrot.lane.b32.xlu0 %v669, 112
        %v877 = vpop.permute.xlu0 %876
        %878 = vrot.lane.b32.xlu0 %v675, 112
        %v879 = vpop.permute.xlu0 %878
        %880 = vrot.lane.b32.xlu0 %v669, 48
        %v881 = vpop.permute.xlu0 %880
        %882 = vrot.lane.b32.xlu0 %v675, 48
        %v883 = vpop.permute.xlu0 %882
        %v884 = vsel %vm685, %v877, 0
        %v886 = vsel %vm685, %v879, 0
        %v888 = vsel %vm685, %v881, 0
        %v890 = vsel %vm685, %v883, 0
        %892 = vmatprep.subr.mxu0 0.0
        %893 = vmatpush1.xpose.msra.mxu0 %v888
        %894 = vmatprep.subr.mxu0 0.0
        %895 = vmatpush1.xpose.msra.mxu0 %v890
        %896 = vmatprep.subr.mxu0 0.0
        %897 = vmatpush1.xpose.msra.mxu0 0.0
        %898 = vmatprep.subr.mxu0 0.0
        %899 = vmatpush1.xpose.msra.mxu0 0.0
        %900 = vmatprep.subr.mxu0 0.0
        %901 = vmatpush1.xpose.msra.mxu0 0.0
        %902 = vmatprep.subr.mxu0 0.0
        %903 = vmatpush1.xpose.msra.mxu0 0.0
        %904 = vmatprep.subr.mxu0 0.0
        %905 = vmatpush1.xpose.msra.mxu0 0.0
        %906 = vmatprep.subr.mxu0 0.0
        %907 = vmatpush1.xpose.msra.mxu0 0.0
        %908 = vmatprep.subr.mxu0 0.0
        %909 = vmatpush1.xpose.msra.mxu0 0.0
        %910 = vmatprep.subr.mxu0 0.0
        %911 = vmatpush1.xpose.msra.mxu0 0.0
        %912 = vmatprep.subr.mxu0 0.0
        %913 = vmatpush1.xpose.msra.mxu0 0.0
        %914 = vmatprep.subr.mxu0 0.0
        %915 = vmatpush1.xpose.msra.mxu0 0.0
        %916 = vmatprep.subr.mxu0 0.0
        %917 = vmatpush1.xpose.msra.mxu0 0.0
        %918 = vmatprep.subr.mxu0 0.0
        %919 = vmatpush1.xpose.msra.mxu0 0.0
        %920 = vmatprep.subr.mxu0 0.0
        %921 = vmatpush1.xpose.msra.mxu0 0.0
        %922 = vmatprep.subr.mxu0 0.0
        %923 = vmatpush1.xpose.msra.mxu0 0.0
        %924 = vmatprep.subr.mxu0 0.0
        %925 = vmatpush1.xpose.msra.mxu0 0.0
        %926 = vmatprep.subr.mxu0 0.0
        %927 = vmatpush1.xpose.msra.mxu0 0.0
        %928 = vmatprep.subr.mxu0 0.0
        %929 = vmatpush1.xpose.msra.mxu0 0.0
        %930 = vmatprep.subr.mxu0 0.0
        %931 = vmatpush1.xpose.msra.mxu0 0.0
        %932 = vmatprep.subr.mxu0 0.0
        %933 = vmatpush1.xpose.msra.mxu0 0.0
        %934 = vmatprep.subr.mxu0 0.0
        %935 = vmatpush1.xpose.msra.mxu0 0.0
        %936 = vmatprep.subr.mxu0 0.0
        %937 = vmatpush1.xpose.msra.mxu0 0.0
        %938 = vmatprep.subr.mxu0 0.0
        %939 = vmatpush1.xpose.msra.mxu0 0.0
        %940 = vmatprep.subr.mxu0 0.0
        %941 = vmatpush1.xpose.msra.mxu0 0.0
        %942 = vmatprep.subr.mxu0 0.0
        %943 = vmatpush1.xpose.msra.mxu0 0.0
        %944 = vmatprep.subr.mxu0 0.0
        %945 = vmatpush1.xpose.msra.mxu0 0.0
        %946 = vmatprep.subr.mxu0 0.0
        %947 = vmatpush1.xpose.msra.mxu0 0.0
        %948 = vmatprep.subr.mxu0 0.0
        %949 = vmatpush1.xpose.msra.mxu0 0.0
        %950 = vmatprep.subr.mxu0 0.0
        %951 = vmatpush1.xpose.msra.mxu0 0.0
        %952 = vmatprep.subr.mxu0 0.0
        %953 = vmatpush1.xpose.msra.mxu0 0.0
        %954 = vmatprep.subr.mxu0 0.0
        %955 = vmatpush1.xpose.msra.mxu0 0.0
        %956 = vmatprep.mubr.f32.mxu0 0.0
        %957 = vmatmul.mubr.f32.gmra.mrb[0].mxu0 %v884
        %v958 = vpop.f32.mrb[0].mxu0
        %v959 = vadd.f32 0.0, %v958
        %v960 = vpop.f32.mrb[0].mxu0
        %961 = vmatprep.mubr.f32.mxu0 0.0
        %962 = vmatmul.mubr.f32.gmra.mrb[0].mxu0 %v886
        %v963 = vpop.f32.mrb[0].mxu0
        %v964 = vadd.f32 0.0, %v963
        %v965 = vpop.f32.mrb[0].mxu0
        %966 = vdwg.mxu0
        %v967 = vmul.f32 %v959, 0.125
        %v968 = vmul.f32 %v964, 0.125
        %v969 = vadd.f32 %v967, %v532
        %v970 = vadd.f32 %v968, %v533
        %v971 = vsel %vm685, %v969, -inf
        %972 = vmax.xlane.f32.xlu0 %v971
        %v973 = vpop.xlane.xlu0 %972
        %v974 = vsel %vm685, %v970, -inf
        %975 = vmax.xlane.f32.xlu0 %v974
        %v976 = vpop.xlane.xlu0 %975
        %v977 = vsub.f32 %v969, %v973
        %v978 = vsub.f32 %v970, %v976
        %v979 = vmul.f32 %v977, 1.442695
        %v980 = vpow.pop %v979
        %v981 = vmul.f32 %v978, 1.442695
        %v982 = vpow.pop %v981
        %v983 = vsel %vm685, %v980, 0.0
        %984 = vadd.xlane.f32.xlu0 %v983
        %v985 = vpop.xlane.xlu0 %984
        %v986 = vsel %vm685, %v982, 0.0
        %987 = vadd.xlane.f32.xlu0 %v986
        %v988 = vpop.xlane.xlu0 %987
        %v989 = vrcp.pop %v985
        %v990 = vmul.f32 %v980, %v989
        %v991 = vrcp.pop %v988
        %v992 = vmul.f32 %v982, %v991
        %995 = vrot.lane.b32.xlu0 %v671, 112
        %v996 = vpop.permute.xlu0 %995
        %997 = vrot.lane.b32.xlu0 %v677, 112
        %v998 = vpop.permute.xlu0 %997
        %v1002 = vsel %vm685, %v990, 0
        %v1005 = vsel %vm685, %v992, 0
        %1007 = vmatprep.subr.mxu0 0.0
        %1008 = vmatpush1.msra.mxu0 %v996
        %1009 = vmatprep.subr.mxu0 0.0
        %1010 = vmatpush1.msra.mxu0 %v998
        %1011 = vmatprep.subr.mxu0 0.0
        %1012 = vmatpush1.msra.mxu0 0.0
        %1013 = vmatprep.subr.mxu0 0.0
        %1014 = vmatpush1.msra.mxu0 0.0
        %1015 = vmatprep.subr.mxu0 0.0
        %1016 = vmatpush1.msra.mxu0 0.0
        %1017 = vmatprep.subr.mxu0 0.0
        %1018 = vmatpush1.msra.mxu0 0.0
        %1019 = vmatprep.subr.mxu0 0.0
        %1020 = vmatpush1.msra.mxu0 0.0
        %1021 = vmatprep.subr.mxu0 0.0
        %1022 = vmatpush1.msra.mxu0 0.0
        %1023 = vmatprep.subr.mxu0 0.0
        %1024 = vmatpush1.msra.mxu0 0.0
        %1025 = vmatprep.subr.mxu0 0.0
        %1026 = vmatpush1.msra.mxu0 0.0
        %1027 = vmatprep.subr.mxu0 0.0
        %1028 = vmatpush1.msra.mxu0 0.0
        %1029 = vmatprep.subr.mxu0 0.0
        %1030 = vmatpush1.msra.mxu0 0.0
        %1031 = vmatprep.subr.mxu0 0.0
        %1032 = vmatpush1.msra.mxu0 0.0
        %1033 = vmatprep.subr.mxu0 0.0
        %1034 = vmatpush1.msra.mxu0 0.0
        %1035 = vmatprep.subr.mxu0 0.0
        %1036 = vmatpush1.msra.mxu0 0.0
        %1037 = vmatprep.subr.mxu0 0.0
        %1038 = vmatpush1.msra.mxu0 0.0
        %1039 = vmatprep.subr.mxu0 0.0
        %1040 = vmatpush1.msra.mxu0 0.0
        %1041 = vmatprep.subr.mxu0 0.0
        %1042 = vmatpush1.msra.mxu0 0.0
        %1043 = vmatprep.subr.mxu0 0.0
        %1044 = vmatpush1.msra.mxu0 0.0
        %1045 = vmatprep.subr.mxu0 0.0
        %1046 = vmatpush1.msra.mxu0 0.0
        %1047 = vmatprep.subr.mxu0 0.0
        %1048 = vmatpush1.msra.mxu0 0.0
        %1049 = vmatprep.subr.mxu0 0.0
        %1050 = vmatpush1.msra.mxu0 0.0
        %1051 = vmatprep.subr.mxu0 0.0
        %1052 = vmatpush1.msra.mxu0 0.0
        %1053 = vmatprep.subr.mxu0 0.0
        %1054 = vmatpush1.msra.mxu0 0.0
        %1055 = vmatprep.subr.mxu0 0.0
        %1056 = vmatpush1.msra.mxu0 0.0
        %1057 = vmatprep.subr.mxu0 0.0
        %1058 = vmatpush1.msra.mxu0 0.0
        %1059 = vmatprep.subr.mxu0 0.0
        %1060 = vmatpush1.msra.mxu0 0.0
        %1061 = vmatprep.subr.mxu0 0.0
        %1062 = vmatpush1.msra.mxu0 0.0
        %1063 = vmatprep.subr.mxu0 0.0
        %1064 = vmatpush1.msra.mxu0 0.0
        %1065 = vmatprep.subr.mxu0 0.0
        %1066 = vmatpush1.msra.mxu0 0.0
        %1067 = vmatprep.subr.mxu0 0.0
        %1068 = vmatpush1.msra.mxu0 0.0
        %1069 = vmatprep.subr.mxu0 0.0
        %1070 = vmatpush1.msra.mxu0 0.0
        %1071 = vmatprep.mubr.f32.mxu0 0.0
        %1072 = vmatmul.mubr.f32.gmra.mrb[0].mxu0 %v1002
        %v1073 = vpop.f32.mrb[0].mxu0
        %v1074 = vadd.f32 0.0, %v1073
        %v1075 = vpop.f32.mrb[0].mxu0
        %1076 = vmatprep.mubr.f32.mxu0 0.0
        %1077 = vmatmul.mubr.f32.gmra.mrb[0].mxu0 %v1005
        %v1078 = vpop.f32.mrb[0].mxu0
        %v1079 = vadd.f32 0.0, %v1078
        %v1080 = vpop.f32.mrb[0].mxu0
        %1081 = vdwg.mxu0
        %1082 = vrot.lane.b32.xlu0 %v669, 96
        %v1083 = vpop.permute.xlu0 %1082
        %1084 = vrot.lane.b32.xlu0 %v675, 96
        %v1085 = vpop.permute.xlu0 %1084
        %1086 = vrot.lane.b32.xlu0 %v669, 32
        %v1087 = vpop.permute.xlu0 %1086
        %1088 = vrot.lane.b32.xlu0 %v675, 32
        %v1089 = vpop.permute.xlu0 %1088
        %v1090 = vsel %vm685, %v1083, 0
        %v1092 = vsel %vm685, %v1085, 0
        %v1094 = vsel %vm685, %v1087, 0
        %v1096 = vsel %vm685, %v1089, 0
        %1098 = vmatprep.subr.mxu0 0.0
        %1099 = vmatpush1.xpose.msra.mxu0 %v1094
        %1100 = vmatprep.subr.mxu0 0.0
        %1101 = vmatpush1.xpose.msra.mxu0 %v1096
        %1102 = vmatprep.subr.mxu0 0.0
        %1103 = vmatpush1.xpose.msra.mxu0 0.0
        %1104 = vmatprep.subr.mxu0 0.0
        %1105 = vmatpush1.xpose.msra.mxu0 0.0
        %1106 = vmatprep.subr.mxu0 0.0
        %1107 = vmatpush1.xpose.msra.mxu0 0.0
        %1108 = vmatprep.subr.mxu0 0.0
        %1109 = vmatpush1.xpose.msra.mxu0 0.0
        %1110 = vmatprep.subr.mxu0 0.0
        %1111 = vmatpush1.xpose.msra.mxu0 0.0
        %1112 = vmatprep.subr.mxu0 0.0
        %1113 = vmatpush1.xpose.msra.mxu0 0.0
        %1114 = vmatprep.subr.mxu0 0.0
        %1115 = vmatpush1.xpose.msra.mxu0 0.0
        %1116 = vmatprep.subr.mxu0 0.0
        %1117 = vmatpush1.xpose.msra.mxu0 0.0
        %1118 = vmatprep.subr.mxu0 0.0
        %1119 = vmatpush1.xpose.msra.mxu0 0.0
        %1120 = vmatprep.subr.mxu0 0.0
        %1121 = vmatpush1.xpose.msra.mxu0 0.0
        %1122 = vmatprep.subr.mxu0 0.0
        %1123 = vmatpush1.xpose.msra.mxu0 0.0
        %1124 = vmatprep.subr.mxu0 0.0
        %1125 = vmatpush1.xpose.msra.mxu0 0.0
        %1126 = vmatprep.subr.mxu0 0.0
        %1127 = vmatpush1.xpose.msra.mxu0 0.0
        %1128 = vmatprep.subr.mxu0 0.0
        %1129 = vmatpush1.xpose.msra.mxu0 0.0
        %1130 = vmatprep.subr.mxu0 0.0
        %1131 = vmatpush1.xpose.msra.mxu0 0.0
        %1132 = vmatprep.subr.mxu0 0.0
        %1133 = vmatpush1.xpose.msra.mxu0 0.0
        %1134 = vmatprep.subr.mxu0 0.0
        %1135 = vmatpush1.xpose.msra.mxu0 0.0
        %1136 = vmatprep.subr.mxu0 0.0
        %1137 = vmatpush1.xpose.msra.mxu0 0.0
        %1138 = vmatprep.subr.mxu0 0.0
        %1139 = vmatpush1.xpose.msra.mxu0 0.0
        %1140 = vmatprep.subr.mxu0 0.0
        %1141 = vmatpush1.xpose.msra.mxu0 0.0
        %1142 = vmatprep.subr.mxu0 0.0
        %1143 = vmatpush1.xpose.msra.mxu0 0.0
        %1144 = vmatprep.subr.mxu0 0.0
        %1145 = vmatpush1.xpose.msra.mxu0 0.0
        %1146 = vmatprep.subr.mxu0 0.0
        %1147 = vmatpush1.xpose.msra.mxu0 0.0
        %1148 = vmatprep.subr.mxu0 0.0
        %1149 = vmatpush1.xpose.msra.mxu0 0.0
        %1150 = vmatprep.subr.mxu0 0.0
        %1151 = vmatpush1.xpose.msra.mxu0 0.0
        %1152 = vmatprep.subr.mxu0 0.0
        %1153 = vmatpush1.xpose.msra.mxu0 0.0
        %1154 = vmatprep.subr.mxu0 0.0
        %1155 = vmatpush1.xpose.msra.mxu0 0.0
        %1156 = vmatprep.subr.mxu0 0.0
        %1157 = vmatpush1.xpose.msra.mxu0 0.0
        %1158 = vmatprep.subr.mxu0 0.0
        %1159 = vmatpush1.xpose.msra.mxu0 0.0
        %1160 = vmatprep.subr.mxu0 0.0
        %1161 = vmatpush1.xpose.msra.mxu0 0.0
        %1162 = vmatprep.mubr.f32.mxu0 0.0
        %1163 = vmatmul.mubr.f32.gmra.mrb[0].mxu0 %v1090
        %v1164 = vpop.f32.mrb[0].mxu0
        %v1165 = vadd.f32 0.0, %v1164
        %v1166 = vpop.f32.mrb[0].mxu0
        %1167 = vmatprep.mubr.f32.mxu0 0.0
        %1168 = vmatmul.mubr.f32.gmra.mrb[0].mxu0 %v1092
        %v1169 = vpop.f32.mrb[0].mxu0
        %v1170 = vadd.f32 0.0, %v1169
        %v1171 = vpop.f32.mrb[0].mxu0
        %1172 = vdwg.mxu0
        %v1173 = vmul.f32 %v1165, 0.125
        %v1174 = vmul.f32 %v1170, 0.125
        %v1175 = vadd.f32 %v1173, %v532
        %v1176 = vadd.f32 %v1174, %v533
        %v1177 = vsel %vm685, %v1175, -inf
        %1178 = vmax.xlane.f32.xlu0 %v1177
        %v1179 = vpop.xlane.xlu0 %1178
        %v1180 = vsel %vm685, %v1176, -inf
        %1181 = vmax.xlane.f32.xlu0 %v1180
        %v1182 = vpop.xlane.xlu0 %1181
        %v1183 = vsub.f32 %v1175, %v1179
        %v1184 = vsub.f32 %v1176, %v1182
        %v1185 = vmul.f32 %v1183, 1.442695
        %v1186 = vpow.pop %v1185
        %v1187 = vmul.f32 %v1184, 1.442695
        %v1188 = vpow.pop %v1187
        %v1189 = vsel %vm685, %v1186, 0.0
        %1190 = vadd.xlane.f32.xlu0 %v1189
        %v1191 = vpop.xlane.xlu0 %1190
        %v1192 = vsel %vm685, %v1188, 0.0
        %1193 = vadd.xlane.f32.xlu0 %v1192
        %v1194 = vpop.xlane.xlu0 %1193
        %v1195 = vrcp.pop %v1191
        %v1196 = vmul.f32 %v1186, %v1195
        %v1197 = vrcp.pop %v1194
        %v1198 = vmul.f32 %v1188, %v1197
        %1199 = vrot.lane.b32.xlu0 %v671, 96
        %v1200 = vpop.permute.xlu0 %1199
        %1201 = vrot.lane.b32.xlu0 %v677, 96
        %v1202 = vpop.permute.xlu0 %1201
        %v1206 = vsel %vm685, %v1196, 0
        %v1209 = vsel %vm685, %v1198, 0
        %1211 = vmatprep.subr.mxu0 0.0
        %1212 = vmatpush1.msra.mxu0 %v1200
        %1213 = vmatprep.subr.mxu0 0.0
        %1214 = vmatpush1.msra.mxu0 %v1202
        %1215 = vmatprep.subr.mxu0 0.0
        %1216 = vmatpush1.msra.mxu0 0.0
        %1217 = vmatprep.subr.mxu0 0.0
        %1218 = vmatpush1.msra.mxu0 0.0
        %1219 = vmatprep.subr.mxu0 0.0
        %1220 = vmatpush1.msra.mxu0 0.0
        %1221 = vmatprep.subr.mxu0 0.0
        %1222 = vmatpush1.msra.mxu0 0.0
        %1223 = vmatprep.subr.mxu0 0.0
        %1224 = vmatpush1.msra.mxu0 0.0
        %1225 = vmatprep.subr.mxu0 0.0
        %1226 = vmatpush1.msra.mxu0 0.0
        %1227 = vmatprep.subr.mxu0 0.0
        %1228 = vmatpush1.msra.mxu0 0.0
        %1229 = vmatprep.subr.mxu0 0.0
        %1230 = vmatpush1.msra.mxu0 0.0
        %1231 = vmatprep.subr.mxu0 0.0
        %1232 = vmatpush1.msra.mxu0 0.0
        %1233 = vmatprep.subr.mxu0 0.0
        %1234 = vmatpush1.msra.mxu0 0.0
        %1235 = vmatprep.subr.mxu0 0.0
        %1236 = vmatpush1.msra.mxu0 0.0
        %1237 = vmatprep.subr.mxu0 0.0
        %1238 = vmatpush1.msra.mxu0 0.0
        %1239 = vmatprep.subr.mxu0 0.0
        %1240 = vmatpush1.msra.mxu0 0.0
        %1241 = vmatprep.subr.mxu0 0.0
        %1242 = vmatpush1.msra.mxu0 0.0
        %1243 = vmatprep.subr.mxu0 0.0
        %1244 = vmatpush1.msra.mxu0 0.0
        %1245 = vmatprep.subr.mxu0 0.0
        %1246 = vmatpush1.msra.mxu0 0.0
        %1247 = vmatprep.subr.mxu0 0.0
        %1248 = vmatpush1.msra.mxu0 0.0
        %1249 = vmatprep.subr.mxu0 0.0
        %1250 = vmatpush1.msra.mxu0 0.0
        %1251 = vmatprep.subr.mxu0 0.0
        %1252 = vmatpush1.msra.mxu0 0.0
        %1253 = vmatprep.subr.mxu0 0.0
        %1254 = vmatpush1.msra.mxu0 0.0
        %1255 = vmatprep.subr.mxu0 0.0
        %1256 = vmatpush1.msra.mxu0 0.0
        %1257 = vmatprep.subr.mxu0 0.0
        %1258 = vmatpush1.msra.mxu0 0.0
        %1259 = vmatprep.subr.mxu0 0.0
        %1260 = vmatpush1.msra.mxu0 0.0
        %1261 = vmatprep.subr.mxu0 0.0
        %1262 = vmatpush1.msra.mxu0 0.0
        %1263 = vmatprep.subr.mxu0 0.0
        %1264 = vmatpush1.msra.mxu0 0.0
        %1265 = vmatprep.subr.mxu0 0.0
        %1266 = vmatpush1.msra.mxu0 0.0
        %1267 = vmatprep.subr.mxu0 0.0
        %1268 = vmatpush1.msra.mxu0 0.0
        %1269 = vmatprep.subr.mxu0 0.0
        %1270 = vmatpush1.msra.mxu0 0.0
        %1271 = vmatprep.subr.mxu0 0.0
        %1272 = vmatpush1.msra.mxu0 0.0
        %1273 = vmatprep.subr.mxu0 0.0
        %1274 = vmatpush1.msra.mxu0 0.0
        %1275 = vmatprep.mubr.f32.mxu0 0.0
        %1276 = vmatmul.mubr.f32.gmra.mrb[0].mxu0 %v1206
        %v1277 = vpop.f32.mrb[0].mxu0
        %v1278 = vadd.f32 0.0, %v1277
        %v1279 = vpop.f32.mrb[0].mxu0
        %1280 = vmatprep.mubr.f32.mxu0 0.0
        %1281 = vmatmul.mubr.f32.gmra.mrb[0].mxu0 %v1209
        %v1282 = vpop.f32.mrb[0].mxu0
        %v1283 = vadd.f32 0.0, %v1282
        %v1284 = vpop.f32.mrb[0].mxu0
        %1285 = vdwg.mxu0
        %1286 = vrot.lane.b32.xlu0 %v669, 80
        %v1287 = vpop.permute.xlu0 %1286
        %1288 = vrot.lane.b32.xlu0 %v675, 80
        %v1289 = vpop.permute.xlu0 %1288
        %1290 = vrot.lane.b32.xlu0 %v669, 16
        %v1291 = vpop.permute.xlu0 %1290
        %1292 = vrot.lane.b32.xlu0 %v675, 16
        %v1293 = vpop.permute.xlu0 %1292
        %v1294 = vsel %vm685, %v1287, 0
        %v1296 = vsel %vm685, %v1289, 0
        %v1298 = vsel %vm685, %v1291, 0
        %v1300 = vsel %vm685, %v1293, 0
        %1302 = vmatprep.subr.mxu0 0.0
        %1303 = vmatpush1.xpose.msra.mxu0 %v1298
        %1304 = vmatprep.subr.mxu0 0.0
        %1305 = vmatpush1.xpose.msra.mxu0 %v1300
        %1306 = vmatprep.subr.mxu0 0.0
        %1307 = vmatpush1.xpose.msra.mxu0 0.0
        %1308 = vmatprep.subr.mxu0 0.0
        %1309 = vmatpush1.xpose.msra.mxu0 0.0
        %1310 = vmatprep.subr.mxu0 0.0
        %1311 = vmatpush1.xpose.msra.mxu0 0.0
        %1312 = vmatprep.subr.mxu0 0.0
        %1313 = vmatpush1.xpose.msra.mxu0 0.0
        %1314 = vmatprep.subr.mxu0 0.0
        %1315 = vmatpush1.xpose.msra.mxu0 0.0
        %1316 = vmatprep.subr.mxu0 0.0
        %1317 = vmatpush1.xpose.msra.mxu0 0.0
        %1318 = vmatprep.subr.mxu0 0.0
        %1319 = vmatpush1.xpose.msra.mxu0 0.0
        %1320 = vmatprep.subr.mxu0 0.0
        %1321 = vmatpush1.xpose.msra.mxu0 0.0
        %1322 = vmatprep.subr.mxu0 0.0
        %1323 = vmatpush1.xpose.msra.mxu0 0.0
        %1324 = vmatprep.subr.mxu0 0.0
        %1325 = vmatpush1.xpose.msra.mxu0 0.0
        %1326 = vmatprep.subr.mxu0 0.0
        %1327 = vmatpush1.xpose.msra.mxu0 0.0
        %1328 = vmatprep.subr.mxu0 0.0
        %1329 = vmatpush1.xpose.msra.mxu0 0.0
        %1330 = vmatprep.subr.mxu0 0.0
        %1331 = vmatpush1.xpose.msra.mxu0 0.0
        %1332 = vmatprep.subr.mxu0 0.0
        %1333 = vmatpush1.xpose.msra.mxu0 0.0
        %1334 = vmatprep.subr.mxu0 0.0
        %1335 = vmatpush1.xpose.msra.mxu0 0.0
        %1336 = vmatprep.subr.mxu0 0.0
        %1337 = vmatpush1.xpose.msra.mxu0 0.0
        %1338 = vmatprep.subr.mxu0 0.0
        %1339 = vmatpush1.xpose.msra.mxu0 0.0
        %1340 = vmatprep.subr.mxu0 0.0
        %1341 = vmatpush1.xpose.msra.mxu0 0.0
        %1342 = vmatprep.subr.mxu0 0.0
        %1343 = vmatpush1.xpose.msra.mxu0 0.0
        %1344 = vmatprep.subr.mxu0 0.0
        %1345 = vmatpush1.xpose.msra.mxu0 0.0
        %1346 = vmatprep.subr.mxu0 0.0
        %1347 = vmatpush1.xpose.msra.mxu0 0.0
        %1348 = vmatprep.subr.mxu0 0.0
        %1349 = vmatpush1.xpose.msra.mxu0 0.0
        %1350 = vmatprep.subr.mxu0 0.0
        %1351 = vmatpush1.xpose.msra.mxu0 0.0
        %1352 = vmatprep.subr.mxu0 0.0
        %1353 = vmatpush1.xpose.msra.mxu0 0.0
        %1354 = vmatprep.subr.mxu0 0.0
        %1355 = vmatpush1.xpose.msra.mxu0 0.0
        %1356 = vmatprep.subr.mxu0 0.0
        %1357 = vmatpush1.xpose.msra.mxu0 0.0
        %1358 = vmatprep.subr.mxu0 0.0
        %1359 = vmatpush1.xpose.msra.mxu0 0.0
        %1360 = vmatprep.subr.mxu0 0.0
        %1361 = vmatpush1.xpose.msra.mxu0 0.0
        %1362 = vmatprep.subr.mxu0 0.0
        %1363 = vmatpush1.xpose.msra.mxu0 0.0
        %1364 = vmatprep.subr.mxu0 0.0
        %1365 = vmatpush1.xpose.msra.mxu0 0.0
        %1366 = vmatprep.mubr.f32.mxu0 0.0
        %1367 = vmatmul.mubr.f32.gmra.mrb[0].mxu0 %v1294
        %v1368 = vpop.f32.mrb[0].mxu0
        %v1369 = vadd.f32 0.0, %v1368
        %v1370 = vpop.f32.mrb[0].mxu0
        %1371 = vmatprep.mubr.f32.mxu0 0.0
        %1372 = vmatmul.mubr.f32.gmra.mrb[0].mxu0 %v1296
        %v1373 = vpop.f32.mrb[0].mxu0
        %v1374 = vadd.f32 0.0, %v1373
        %v1375 = vpop.f32.mrb[0].mxu0
        %1376 = vdwg.mxu0
        %v1377 = vmul.f32 %v1369, 0.125
        %v1378 = vmul.f32 %v1374, 0.125
        %v1379 = vadd.f32 %v1377, %v532
        %v1380 = vadd.f32 %v1378, %v533
        %v1381 = vsel %vm685, %v1379, -inf
        %1382 = vmax.xlane.f32.xlu0 %v1381
        %v1383 = vpop.xlane.xlu0 %1382
        %v1384 = vsel %vm685, %v1380, -inf
        %1385 = vmax.xlane.f32.xlu0 %v1384
        %v1386 = vpop.xlane.xlu0 %1385
        %v1387 = vsub.f32 %v1379, %v1383
        %v1388 = vsub.f32 %v1380, %v1386
        %v1389 = vmul.f32 %v1387, 1.442695
        %v1390 = vpow.pop %v1389
        %v1391 = vmul.f32 %v1388, 1.442695
        %v1392 = vpow.pop %v1391
        %v1393 = vsel %vm685, %v1390, 0.0
        %1394 = vadd.xlane.f32.xlu0 %v1393
        %v1395 = vpop.xlane.xlu0 %1394
        %v1396 = vsel %vm685, %v1392, 0.0
        %1397 = vadd.xlane.f32.xlu0 %v1396
        %v1398 = vpop.xlane.xlu0 %1397
        %v1399 = vrcp.pop %v1395
        %v1400 = vmul.f32 %v1390, %v1399
        %v1401 = vrcp.pop %v1398
        %v1402 = vmul.f32 %v1392, %v1401
        %1403 = vrot.lane.b32.xlu0 %v671, 80
        %v1404 = vpop.permute.xlu0 %1403
        %1405 = vrot.lane.b32.xlu0 %v677, 80
        %v1406 = vpop.permute.xlu0 %1405
        %v1410 = vsel %vm685, %v1400, 0
        %v1413 = vsel %vm685, %v1402, 0
        %1415 = vmatprep.subr.mxu0 0.0
        %1416 = vmatpush1.msra.mxu0 %v1404
        %1417 = vmatprep.subr.mxu0 0.0
        %1418 = vmatpush1.msra.mxu0 %v1406
        %1419 = vmatprep.subr.mxu0 0.0
        %1420 = vmatpush1.msra.mxu0 0.0
        %1421 = vmatprep.subr.mxu0 0.0
        %1422 = vmatpush1.msra.mxu0 0.0
        %1423 = vmatprep.subr.mxu0 0.0
        %1424 = vmatpush1.msra.mxu0 0.0
        %1425 = vmatprep.subr.mxu0 0.0
        %1426 = vmatpush1.msra.mxu0 0.0
        %1427 = vmatprep.subr.mxu0 0.0
        %1428 = vmatpush1.msra.mxu0 0.0
        %1429 = vmatprep.subr.mxu0 0.0
        %1430 = vmatpush1.msra.mxu0 0.0
        %1431 = vmatprep.subr.mxu0 0.0
        %1432 = vmatpush1.msra.mxu0 0.0
        %1433 = vmatprep.subr.mxu0 0.0
        %1434 = vmatpush1.msra.mxu0 0.0
        %1435 = vmatprep.subr.mxu0 0.0
        %1436 = vmatpush1.msra.mxu0 0.0
        %1437 = vmatprep.subr.mxu0 0.0
        %1438 = vmatpush1.msra.mxu0 0.0
        %1439 = vmatprep.subr.mxu0 0.0
        %1440 = vmatpush1.msra.mxu0 0.0
        %1441 = vmatprep.subr.mxu0 0.0
        %1442 = vmatpush1.msra.mxu0 0.0
        %1443 = vmatprep.subr.mxu0 0.0
        %1444 = vmatpush1.msra.mxu0 0.0
        %1445 = vmatprep.subr.mxu0 0.0
        %1446 = vmatpush1.msra.mxu0 0.0
        %1447 = vmatprep.subr.mxu0 0.0
        %1448 = vmatpush1.msra.mxu0 0.0
        %1449 = vmatprep.subr.mxu0 0.0
        %1450 = vmatpush1.msra.mxu0 0.0
        %1451 = vmatprep.subr.mxu0 0.0
        %1452 = vmatpush1.msra.mxu0 0.0
        %1453 = vmatprep.subr.mxu0 0.0
        %1454 = vmatpush1.msra.mxu0 0.0
        %1455 = vmatprep.subr.mxu0 0.0
        %1456 = vmatpush1.msra.mxu0 0.0
        %1457 = vmatprep.subr.mxu0 0.0
        %1458 = vmatpush1.msra.mxu0 0.0
        %1459 = vmatprep.subr.mxu0 0.0
        %1460 = vmatpush1.msra.mxu0 0.0
        %1461 = vmatprep.subr.mxu0 0.0
        %1462 = vmatpush1.msra.mxu0 0.0
        %1463 = vmatprep.subr.mxu0 0.0
        %1464 = vmatpush1.msra.mxu0 0.0
        %1465 = vmatprep.subr.mxu0 0.0
        %1466 = vmatpush1.msra.mxu0 0.0
        %1467 = vmatprep.subr.mxu0 0.0
        %1468 = vmatpush1.msra.mxu0 0.0
        %1469 = vmatprep.subr.mxu0 0.0
        %1470 = vmatpush1.msra.mxu0 0.0
        %1471 = vmatprep.subr.mxu0 0.0
        %1472 = vmatpush1.msra.mxu0 0.0
        %1473 = vmatprep.subr.mxu0 0.0
        %1474 = vmatpush1.msra.mxu0 0.0
        %1475 = vmatprep.subr.mxu0 0.0
        %1476 = vmatpush1.msra.mxu0 0.0
        %1477 = vmatprep.subr.mxu0 0.0
        %1478 = vmatpush1.msra.mxu0 0.0
        %1479 = vmatprep.mubr.f32.mxu0 0.0
        %1480 = vmatmul.mubr.f32.gmra.mrb[0].mxu0 %v1410
        %v1481 = vpop.f32.mrb[0].mxu0
        %v1482 = vadd.f32 0.0, %v1481
        %v1483 = vpop.f32.mrb[0].mxu0
        %1484 = vmatprep.mubr.f32.mxu0 0.0
        %1485 = vmatmul.mubr.f32.gmra.mrb[0].mxu0 %v1413
        %v1486 = vpop.f32.mrb[0].mxu0
        %v1487 = vadd.f32 0.0, %v1486
        %v1488 = vpop.f32.mrb[0].mxu0
        %1489 = vdwg.mxu0
        %1492 = vrot.lane.b32.xlu0 %v1074, 16
        %v1493 = vpop.permute.xlu0 %1492
        %1494 = vrot.lane.b32.xlu0 %v1079, 16
        %v1495 = vpop.permute.xlu0 %1494
        %1500 = vrot.lane.b32.xlu0 %v1278, 32
        %v1501 = vpop.permute.xlu0 %1500
        %1502 = vrot.lane.b32.xlu0 %v1283, 32
        %v1503 = vpop.permute.xlu0 %1502
        %1508 = vrot.lane.b32.xlu0 %v1482, 48
        %v1509 = vpop.permute.xlu0 %1508
        %1510 = vrot.lane.b32.xlu0 %v1487, 48
        %v1511 = vpop.permute.xlu0 %1510
        %v1514 = vsel %vm685, %v868, %v1493
        %v1515 = vsel %vm685, %v873, %v1495
        %vm1516 = vcmask 261120
        %v1517 = vsel %vm1516, %v1514, %v1501
        %v1518 = vsel %vm1516, %v1515, %v1503
        %vm1519 = vcmask 392192
        %v1520 = vsel %vm1519, %v1517, %v1509
        %v1521 = vsel %vm1519, %v1518, %v1511
        %v1522 = vld [vmem:[%s4] sm:$0xff]
        %v1523 = vld [vmem:[%s4 + $0x8] sm:$0xff]
        %v1524 = vld [vmem:[%s4 + $0x10] sm:$0xff]
        %v1525 = vld [vmem:[%s4 + $0x18] sm:$0xff]
        %v1526 = vld [vmem:[%s4 + $0x20] sm:$0xff]
        %v1527 = vld [vmem:[%s4 + $0x28] sm:$0xff]
        %v1528 = vld [vmem:[%s4 + $0x30] sm:$0xff]
        %v1529 = vld [vmem:[%s4 + $0x38] sm:$0xff]
        %v1530 = vld [vmem:[%s5] sm:$0x1]
        %v1532 = vlaneseq
        %v1533 = vshrl.u32 %v1532, 7
        %v1534 = vsub.s32 0, %v1533
        %v1535 = vrot.slane %v1530, %v1534
        %v1538 = vsel %vm536, %v1520, 0
        %v1541 = vsel %vm536, %v1521, 0
        %1543 = vmatprep.subr.mxu0 0.0
        %1544 = vmatpush1.msra.mxu0 %v1522
        %1545 = vmatprep.subr.mxu0 0.0
        %1546 = vmatpush1.msra.mxu0 %v1523
        %1547 = vmatprep.subr.mxu0 0.0
        %1548 = vmatpush1.msra.mxu0 %v1524
        %1549 = vmatprep.subr.mxu0 0.0
        %1550 = vmatpush1.msra.mxu0 %v1525
        %1551 = vmatprep.subr.mxu0 0.0
        %1552 = vmatpush1.msra.mxu0 %v1526
        %1553 = vmatprep.subr.mxu0 0.0
        %1554 = vmatpush1.msra.mxu0 %v1527
        %1555 = vmatprep.subr.mxu0 0.0
        %1556 = vmatpush1.msra.mxu0 %v1528
        %1557 = vmatprep.subr.mxu0 0.0
        %1558 = vmatpush1.msra.mxu0 %v1529
        %1559 = vmatprep.subr.mxu0 0.0
        %1560 = vmatpush1.msra.mxu0 0.0
        %1561 = vmatprep.subr.mxu0 0.0
        %1562 = vmatpush1.msra.mxu0 0.0
        %1563 = vmatprep.subr.mxu0 0.0
        %1564 = vmatpush1.msra.mxu0 0.0
        %1565 = vmatprep.subr.mxu0 0.0
        %1566 = vmatpush1.msra.mxu0 0.0
        %1567 = vmatprep.subr.mxu0 0.0
        %1568 = vmatpush1.msra.mxu0 0.0
        %1569 = vmatprep.subr.mxu0 0.0
        %1570 = vmatpush1.msra.mxu0 0.0
        %1571 = vmatprep.subr.mxu0 0.0
        %1572 = vmatpush1.msra.mxu0 0.0
        %1573 = vmatprep.subr.mxu0 0.0
        %1574 = vmatpush1.msra.mxu0 0.0
        %1575 = vmatprep.subr.mxu0 0.0
        %1576 = vmatpush1.msra.mxu0 0.0
        %1577 = vmatprep.subr.mxu0 0.0
        %1578 = vmatpush1.msra.mxu0 0.0
        %1579 = vmatprep.subr.mxu0 0.0
        %1580 = vmatpush1.msra.mxu0 0.0
        %1581 = vmatprep.subr.mxu0 0.0
        %1582 = vmatpush1.msra.mxu0 0.0
        %1583 = vmatprep.subr.mxu0 0.0
        %1584 = vmatpush1.msra.mxu0 0.0
        %1585 = vmatprep.subr.mxu0 0.0
        %1586 = vmatpush1.msra.mxu0 0.0
        %1587 = vmatprep.subr.mxu0 0.0
        %1588 = vmatpush1.msra.mxu0 0.0
        %1589 = vmatprep.subr.mxu0 0.0
        %1590 = vmatpush1.msra.mxu0 0.0
        %1591 = vmatprep.subr.mxu0 0.0
        %1592 = vmatpush1.msra.mxu0 0.0
        %1593 = vmatprep.subr.mxu0 0.0
        %1594 = vmatpush1.msra.mxu0 0.0
        %1595 = vmatprep.subr.mxu0 0.0
        %1596 = vmatpush1.msra.mxu0 0.0
        %1597 = vmatprep.subr.mxu0 0.0
        %1598 = vmatpush1.msra.mxu0 0.0
        %1599 = vmatprep.subr.mxu0 0.0
        %1600 = vmatpush1.msra.mxu0 0.0
        %1601 = vmatprep.subr.mxu0 0.0
        %1602 = vmatpush1.msra.mxu0 0.0
        %1603 = vmatprep.subr.mxu0 0.0
        %1604 = vmatpush1.msra.mxu0 0.0
        %1605 = vmatprep.subr.mxu0 0.0
        %1606 = vmatpush1.msra.mxu0 0.0
        %1607 = vmatprep.mubr.f32.mxu0 0.0
        %1608 = vmatmul.mubr.f32.gmra.mrb[0].mxu0 %v1538
        %v1609 = vpop.f32.mrb[0].mxu0
        %v1610 = vadd.f32 %v1535, %v1609
        %v1611 = vpop.f32.mrb[0].mxu0
        %1612 = vmatprep.mubr.f32.mxu0 0.0
        %1613 = vmatmul.mubr.f32.gmra.mrb[0].mxu0 %v1541
        %v1614 = vpop.f32.mrb[0].mxu0
        %v1615 = vadd.f32 %v1535, %v1614
        %v1616 = vpop.f32.mrb[0].mxu0
        %1617 = vdwg.mxu0
        %v1618 = vadd.f32 %v523, %v1610
        %v1619 = vadd.f32 %v524, %v1615
        %v1620 = vld [vmem:[%s6] sm:$0x1]
        %v1621 = vld [vmem:[%s7] sm:$0x1]
        %v1622 = vsel %vm536, %v1618, 0.0
        %1623 = vadd.xlane.f32.xlu0 %v1622
        %v1624 = vpop.xlane.xlu0 %1623
        %v1625 = vsel %vm536, %v1619, 0.0
        %1626 = vadd.xlane.f32.xlu0 %v1625
        %v1627 = vpop.xlane.xlu0 %1626
        %v1628 = vmul.f32 %v1624, %v543
        %v1629 = vmul.f32 %v1627, %v543
        %v1630 = vsub.f32 %v1618, %v1628
        %v1631 = vsub.f32 %v1619, %v1629
        %v1632 = vmul.f32 %v1630, %v1630
        %v1633 = vmul.f32 %v1631, %v1631
        %v1634 = vsel %vm536, %v1632, 0.0
        %1635 = vadd.xlane.f32.xlu0 %v1634
        %v1636 = vpop.xlane.xlu0 %1635
        %v1637 = vsel %vm536, %v1633, 0.0
        %1638 = vadd.xlane.f32.xlu0 %v1637
        %v1639 = vpop.xlane.xlu0 %1638
        %v1640 = vmul.f32 %v1636, %v543
        %v1641 = vmul.f32 %v1639, %v543
        %v1642 = vadd.f32 %v1640, 1e-05
        %v1643 = vadd.f32 %v1641, 1e-05
        %v1644 = vrsqrt.pop %v1642
        %v1645 = vrsqrt.pop %v1643
        %v1646 = vmul.f32 %v1630, %v1644
        %v1647 = vmul.f32 %v1631, %v1645
        %v1649 = vlaneseq
        %v1650 = vshrl.u32 %v1649, 7
        %v1651 = vsub.s32 0, %v1650
        %v1652 = vrot.slane %v1620, %v1651
        %v1654 = vmul.f32 %v1646, %v1652
        %v1655 = vmul.f32 %v1647, %v1652
        %v1657 = vlaneseq
        %v1658 = vshrl.u32 %v1657, 7
        %v1659 = vsub.s32 0, %v1658
        %v1660 = vrot.slane %v1621, %v1659
        %v1662 = vadd.f32 %v1654, %v1660
        %v1663 = vadd.f32 %v1655, %v1660
        %v1664 = vld [vmem:[%s8] sm:$0xff]
        %v1665 = vld [vmem:[%s8 + $0x8] sm:$0xff]
        %v1666 = vld [vmem:[%s8 + $0x10] sm:$0xff]
        %v1667 = vld [vmem:[%s8 + $0x18] sm:$0xff]
        %v1668 = vld [vmem:[%s8 + $0x20] sm:$0xff]
        %v1669 = vld [vmem:[%s8 + $0x28] sm:$0xff]
        %v1670 = vld [vmem:[%s8 + $0x30] sm:$0xff]
        %v1671 = vld [vmem:[%s8 + $0x38] sm:$0xff]
        %v1672 = vld [vmem:[%s8 + $0x40] sm:$0xff]
        %v1673 = vld [vmem:[%s8 + $0x48] sm:$0xff]
        %v1674 = vld [vmem:[%s8 + $0x50] sm:$0xff]
        %v1675 = vld [vmem:[%s8 + $0x58] sm:$0xff]
        %v1676 = vld [vmem:[%s8 + $0x60] sm:$0xff]
        %v1677 = vld [vmem:[%s8 + $0x68] sm:$0xff]
        %v1678 = vld [vmem:[%s8 + $0x70] sm:$0xff]
        %v1679 = vld [vmem:[%s8 + $0x78] sm:$0xff]
        %v1680 = vld [vmem:[%s9] sm:$0x3]
        %v1682 = vlaneseq
        %v1683 = vshrl.u32 %v1682, 7
        %v1684 = vsub.s32 0, %v1683
        %v1685 = vrot.slane %v1680, %v1684
        %v1686 = vlaneseq
        %v1687 = vshrl.u32 %v1686, 7
        %v1688 = vsub.s32 1, %v1687
        %v1689 = vrot.slane %v1680, %v1688
        %v1693 = vsel %vm536, %v1662, 0
        %v1696 = vsel %vm536, %v1663, 0
        %1698 = vmatprep.subr.mxu0 %v1665
        %1699 = vmatpush1.msra.mxu0 %v1664
        %1700 = vmatprep.subr.mxu0 %v1667
        %1701 = vmatpush1.msra.mxu0 %v1666
        %1702 = vmatprep.subr.mxu0 %v1669
        %1703 = vmatpush1.msra.mxu0 %v1668
        %1704 = vmatprep.subr.mxu0 %v1671
        %1705 = vmatpush1.msra.mxu0 %v1670
        %1706 = vmatprep.subr.mxu0 %v1673
        %1707 = vmatpush1.msra.mxu0 %v1672
        %1708 = vmatprep.subr.mxu0 %v1675
        %1709 = vmatpush1.msra.mxu0 %v1674
        %1710 = vmatprep.subr.mxu0 %v1677
        %1711 = vmatpush1.msra.mxu0 %v1676
        %1712 = vmatprep.subr.mxu0 %v1679
        %1713 = vmatpush1.msra.mxu0 %v1678
        %1714 = vmatprep.subr.mxu0 0.0
        %1715 = vmatpush1.msra.mxu0 0.0
        %1716 = vmatprep.subr.mxu0 0.0
        %1717 = vmatpush1.msra.mxu0 0.0
        %1718 = vmatprep.subr.mxu0 0.0
        %1719 = vmatpush1.msra.mxu0 0.0
        %1720 = vmatprep.subr.mxu0 0.0
        %1721 = vmatpush1.msra.mxu0 0.0
        %1722 = vmatprep.subr.mxu0 0.0
        %1723 = vmatpush1.msra.mxu0 0.0
        %1724 = vmatprep.subr.mxu0 0.0
        %1725 = vmatpush1.msra.mxu0 0.0
        %1726 = vmatprep.subr.mxu0 0.0
        %1727 = vmatpush1.msra.mxu0 0.0
        %1728 = vmatprep.subr.mxu0 0.0
        %1729 = vmatpush1.msra.mxu0 0.0
        %1730 = vmatprep.subr.mxu0 0.0
        %1731 = vmatpush1.msra.mxu0 0.0
        %1732 = vmatprep.subr.mxu0 0.0
        %1733 = vmatpush1.msra.mxu0 0.0
        %1734 = vmatprep.subr.mxu0 0.0
        %1735 = vmatpush1.msra.mxu0 0.0
        %1736 = vmatprep.subr.mxu0 0.0
        %1737 = vmatpush1.msra.mxu0 0.0
        %1738 = vmatprep.subr.mxu0 0.0
        %1739 = vmatpush1.msra.mxu0 0.0
        %1740 = vmatprep.subr.mxu0 0.0
        %1741 = vmatpush1.msra.mxu0 0.0
        %1742 = vmatprep.subr.mxu0 0.0
        %1743 = vmatpush1.msra.mxu0 0.0
        %1744 = vmatprep.subr.mxu0 0.0
        %1745 = vmatpush1.msra.mxu0 0.0
        %1746 = vmatprep.subr.mxu0 0.0
        %1747 = vmatpush1.msra.mxu0 0.0
        %1748 = vmatprep.subr.mxu0 0.0
        %1749 = vmatpush1.msra.mxu0 0.0
        %1750 = vmatprep.subr.mxu0 0.0
        %1751 = vmatpush1.msra.mxu0 0.0
        %1752 = vmatprep.subr.mxu0 0.0
        %1753 = vmatpush1.msra.mxu0 0.0
        %1754 = vmatprep.subr.mxu0 0.0
        %1755 = vmatpush1.msra.mxu0 0.0
        %1756 = vmatprep.subr.mxu0 0.0
        %1757 = vmatpush1.msra.mxu0 0.0
        %1758 = vmatprep.subr.mxu0 0.0
        %1759 = vmatpush1.msra.mxu0 0.0
        %1760 = vmatprep.subr.mxu0 0.0
        %1761 = vmatpush1.msra.mxu0 0.0
        %1762 = vmatprep.mubr.f32.mxu0 0.0
        %1763 = vmatmul.mubr.f32.gmra.mrb[0].mxu0 %v1693
        %v1764 = vpop.f32.mrb[0].mxu0
        %v1765 = vadd.f32 %v1685, %v1764
        %v1766 = vpop.f32.mrb[0].mxu0
        %v1767 = vadd.f32 %v1689, %v1766
        %1768 = vmatprep.mubr.f32.mxu0 0.0
        %1769 = vmatmul.mubr.f32.gmra.mrb[0].mxu0 %v1696
        %v1770 = vpop.f32.mrb[0].mxu0
        %v1771 = vadd.f32 %v1685, %v1770
        %v1772 = vpop.f32.mrb[0].mxu0
        %v1773 = vadd.f32 %v1689, %v1772
        %1774 = vdwg.mxu0
        %v1775 = vmax.f32 %v1765, 0.0
        %v1776 = vmax.f32 %v1767, 0.0
        %v1777 = vmax.f32 %v1771, 0.0
        %v1778 = vmax.f32 %v1773, 0.0
        %v1779 = vld [vmem:[%s10] sm:$0xff]
        %v1780 = vld [vmem:[%s10 + $0x8] sm:$0xff]
        %v1781 = vld [vmem:[%s10 + $0x10] sm:$0xff]
        %v1782 = vld [vmem:[%s10 + $0x18] sm:$0xff]
        %v1783 = vld [vmem:[%s10 + $0x20] sm:$0xff]
        %v1784 = vld [vmem:[%s10 + $0x28] sm:$0xff]
        %v1785 = vld [vmem:[%s10 + $0x30] sm:$0xff]
        %v1786 = vld [vmem:[%s10 + $0x38] sm:$0xff]
        %v1787 = vld [vmem:[%s10 + $0x40] sm:$0xff]
        %v1788 = vld [vmem:[%s10 + $0x48] sm:$0xff]
        %v1789 = vld [vmem:[%s10 + $0x50] sm:$0xff]
        %v1790 = vld [vmem:[%s10 + $0x58] sm:$0xff]
        %v1791 = vld [vmem:[%s10 + $0x60] sm:$0xff]
        %v1792 = vld [vmem:[%s10 + $0x68] sm:$0xff]
        %v1793 = vld [vmem:[%s10 + $0x70] sm:$0xff]
        %v1794 = vld [vmem:[%s10 + $0x78] sm:$0xff]
        %v1795 = vld [vmem:[%s10 + $0x80] sm:$0xff]
        %v1796 = vld [vmem:[%s10 + $0x88] sm:$0xff]
        %v1797 = vld [vmem:[%s10 + $0x90] sm:$0xff]
        %v1798 = vld [vmem:[%s10 + $0x98] sm:$0xff]
        %v1799 = vld [vmem:[%s10 + $0xa0] sm:$0xff]
        %v1800 = vld [vmem:[%s10 + $0xa8] sm:$0xff]
        %v1801 = vld [vmem:[%s10 + $0xb0] sm:$0xff]
        %v1802 = vld [vmem:[%s10 + $0xb8] sm:$0xff]
        %v1803 = vld [vmem:[%s10 + $0xc0] sm:$0xff]
        %v1804 = vld [vmem:[%s10 + $0xc8] sm:$0xff]
        %v1805 = vld [vmem:[%s10 + $0xd0] sm:$0xff]
        %v1806 = vld [vmem:[%s10 + $0xd8] sm:$0xff]
        %v1807 = vld [vmem:[%s10 + $0xe0] sm:$0xff]
        %v1808 = vld [vmem:[%s10 + $0xe8] sm:$0xff]
        %v1809 = vld [vmem:[%s10 + $0xf0] sm:$0xff]
        %v1810 = vld [vmem:[%s10 + $0xf8] sm:$0xff]
        %v1811 = vld [vmem:[%s11] sm:$0x1]
        %v1813 = vlaneseq
        %v1814 = vshrl.u32 %v1813, 7
        %v1815 = vsub.s32 0, %v1814
        %v1816 = vrot.slane %v1811, %v1815
        %1818 = vmatprep.subr.mxu0 0.0
        %1819 = vmatpush1.msra.mxu0 %v1779
        %1820 = vmatprep.subr.mxu0 0.0
        %1821 = vmatpush1.msra.mxu0 %v1780
        %1822 = vmatprep.subr.mxu0 0.0
        %1823 = vmatpush1.msra.mxu0 %v1781
        %1824 = vmatprep.subr.mxu0 0.0
        %1825 = vmatpush1.msra.mxu0 %v1782
        %1826 = vmatprep.subr.mxu0 0.0
        %1827 = vmatpush1.msra.mxu0 %v1783
        %1828 = vmatprep.subr.mxu0 0.0
        %1829 = vmatpush1.msra.mxu0 %v1784
        %1830 = vmatprep.subr.mxu0 0.0
        %1831 = vmatpush1.msra.mxu0 %v1785
        %1832 = vmatprep.subr.mxu0 0.0
        %1833 = vmatpush1.msra.mxu0 %v1786
        %1834 = vmatprep.subr.mxu0 0.0
        %1835 = vmatpush1.msra.mxu0 %v1787
        %1836 = vmatprep.subr.mxu0 0.0
        %1837 = vmatpush1.msra.mxu0 %v1788
        %1838 = vmatprep.subr.mxu0 0.0
        %1839 = vmatpush1.msra.mxu0 %v1789
        %1840 = vmatprep.subr.mxu0 0.0
        %1841 = vmatpush1.msra.mxu0 %v1790
        %1842 = vmatprep.subr.mxu0 0.0
        %1843 = vmatpush1.msra.mxu0 %v1791
        %1844 = vmatprep.subr.mxu0 0.0
        %1845 = vmatpush1.msra.mxu0 %v1792
        %1846 = vmatprep.subr.mxu0 0.0
        %1847 = vmatpush1.msra.mxu0 %v1793
        %1848 = vmatprep.subr.mxu0 0.0
        %1849 = vmatpush1.msra.mxu0 %v1794
        %1850 = vmatprep.subr.mxu0 0.0
        %1851 = vmatpush1.msra.mxu0 %v1795
        %1852 = vmatprep.subr.mxu0 0.0
        %1853 = vmatpush1.msra.mxu0 %v1796
        %1854 = vmatprep.subr.mxu0 0.0
        %1855 = vmatpush1.msra.mxu0 %v1797
        %1856 = vmatprep.subr.mxu0 0.0
        %1857 = vmatpush1.msra.mxu0 %v1798
        %1858 = vmatprep.subr.mxu0 0.0
        %1859 = vmatpush1.msra.mxu0 %v1799
        %1860 = vmatprep.subr.mxu0 0.0
        %1861 = vmatpush1.msra.mxu0 %v1800
        %1862 = vmatprep.subr.mxu0 0.0
        %1863 = vmatpush1.msra.mxu0 %v1801
        %1864 = vmatprep.subr.mxu0 0.0
        %1865 = vmatpush1.msra.mxu0 %v1802
        %1866 = vmatprep.subr.mxu0 0.0
        %1867 = vmatpush1.msra.mxu0 %v1803
        %1868 = vmatprep.subr.mxu0 0.0
        %1869 = vmatpush1.msra.mxu0 %v1804
        %1870 = vmatprep.subr.mxu0 0.0
        %1871 = vmatpush1.msra.mxu0 %v1805
        %1872 = vmatprep.subr.mxu0 0.0
        %1873 = vmatpush1.msra.mxu0 %v1806
        %1874 = vmatprep.subr.mxu0 0.0
        %1875 = vmatpush1.msra.mxu0 %v1807
        %1876 = vmatprep.subr.mxu0 0.0
        %1877 = vmatpush1.msra.mxu0 %v1808
        %1878 = vmatprep.subr.mxu0 0.0
        %1879 = vmatpush1.msra.mxu0 %v1809
        %1880 = vmatprep.subr.mxu0 0.0
        %1881 = vmatpush1.msra.mxu0 %v1810
        %1882 = vmatprep.mubr.f32.mxu0 %v1776
        %1883 = vmatmul.mubr.f32.gmra.mrb[0].mxu0 %v1775
        %v1884 = vpop.f32.mrb[0].mxu0
        %v1885 = vadd.f32 %v1816, %v1884
        %v1886 = vpop.f32.mrb[0].mxu0
        %1887 = vmatprep.mubr.f32.mxu0 %v1778
        %1888 = vmatmul.mubr.f32.gmra.mrb[0].mxu0 %v1777
        %v1889 = vpop.f32.mrb[0].mxu0
        %v1890 = vadd.f32 %v1816, %v1889
        %v1891 = vpop.f32.mrb[0].mxu0
        %1892 = vdwg.mxu0
        %v1893 = vadd.f32 %v1618, %v1885
        %v1894 = vadd.f32 %v1619, %v1890
        %s1895 = scalar_lea.vmem %s1, 1
        %v1896 = vld [vmem:[%s1895] sm:$0x1]
        %s1897 = scalar_lea.vmem %s2, 1
        %v1898 = vld [vmem:[%s1897] sm:$0x1]
        %v1899 = vsel %vm536, %v1893, 0.0
        %1900 = vadd.xlane.f32.xlu0 %v1899
        %v1901 = vpop.xlane.xlu0 %1900
        %v1902 = vsel %vm536, %v1894, 0.0
        %1903 = vadd.xlane.f32.xlu0 %v1902
        %v1904 = vpop.xlane.xlu0 %1903
        %v1905 = vmul.f32 %v1901, %v543
        %v1906 = vmul.f32 %v1904, %v543
        %v1907 = vsub.f32 %v1893, %v1905
        %v1908 = vsub.f32 %v1894, %v1906
        %v1909 = vmul.f32 %v1907, %v1907
        %v1910 = vmul.f32 %v1908, %v1908
        %v1911 = vsel %vm536, %v1909, 0.0
        %1912 = vadd.xlane.f32.xlu0 %v1911
        %v1913 = vpop.xlane.xlu0 %1912
        %v1914 = vsel %vm536, %v1910, 0.0
        %1915 = vadd.xlane.f32.xlu0 %v1914
        %v1916 = vpop.xlane.xlu0 %1915
        %v1917 = vmul.f32 %v1913, %v543
        %v1918 = vmul.f32 %v1916, %v543
        %v1919 = vadd.f32 %v1917, 1e-05
        %v1920 = vadd.f32 %v1918, 1e-05
        %v1921 = vrsqrt.pop %v1919
        %v1922 = vrsqrt.pop %v1920
        %v1923 = vmul.f32 %v1907, %v1921
        %v1924 = vmul.f32 %v1908, %v1922
        %v1926 = vlaneseq
        %v1927 = vshrl.u32 %v1926, 7
        %v1928 = vsub.s32 0, %v1927
        %v1929 = vrot.slane %v1896, %v1928
        %v1931 = vmul.f32 %v1923, %v1929
        %v1932 = vmul.f32 %v1924, %v1929
        %v1934 = vlaneseq
        %v1935 = vshrl.u32 %v1934, 7
        %v1936 = vsub.s32 0, %v1935
        %v1937 = vrot.slane %v1898, %v1936
        %v1939 = vadd.f32 %v1931, %v1937
        %v1940 = vadd.f32 %v1932, %v1937
        %s1941 = scalar_lea.vmem %s3, 128
        %v1942 = vld [vmem:[%s1941] sm:$0xff]
        %v1943 = vld [vmem:[%s1941 + $0x8] sm:$0xff]
        %v1944 = vld [vmem:[%s1941 + $0x10] sm:$0xff]
        %v1945 = vld [vmem:[%s1941 + $0x18] sm:$0xff]
        %v1946 = vld [vmem:[%s1941 + $0x20] sm:$0xff]
        %v1947 = vld [vmem:[%s1941 + $0x28] sm:$0xff]
        %v1948 = vld [vmem:[%s1941 + $0x30] sm:$0xff]
        %v1949 = vld [vmem:[%s1941 + $0x38] sm:$0xff]
        %v1950 = vld [vmem:[%s1941 + $0x40] sm:$0xff]
        %v1951 = vld [vmem:[%s1941 + $0x48] sm:$0xff]
        %v1952 = vld [vmem:[%s1941 + $0x50] sm:$0xff]
        %v1953 = vld [vmem:[%s1941 + $0x58] sm:$0xff]
        %v1954 = vld [vmem:[%s1941 + $0x60] sm:$0xff]
        %v1955 = vld [vmem:[%s1941 + $0x68] sm:$0xff]
        %v1956 = vld [vmem:[%s1941 + $0x70] sm:$0xff]
        %v1957 = vld [vmem:[%s1941 + $0x78] sm:$0xff]
        %v1959 = vsel %vm536, %v1939, 0
        %v1962 = vsel %vm536, %v1940, 0
        %1964 = vmatprep.subr.mxu0 %v1943
        %1965 = vmatpush1.msra.mxu0 %v1942
        %1966 = vmatprep.subr.mxu0 %v1945
        %1967 = vmatpush1.msra.mxu0 %v1944
        %1968 = vmatprep.subr.mxu0 %v1947
        %1969 = vmatpush1.msra.mxu0 %v1946
        %1970 = vmatprep.subr.mxu0 %v1949
        %1971 = vmatpush1.msra.mxu0 %v1948
        %1972 = vmatprep.subr.mxu0 %v1951
        %1973 = vmatpush1.msra.mxu0 %v1950
        %1974 = vmatprep.subr.mxu0 %v1953
        %1975 = vmatpush1.msra.mxu0 %v1952
        %1976 = vmatprep.subr.mxu0 %v1955
        %1977 = vmatpush1.msra.mxu0 %v1954
        %1978 = vmatprep.subr.mxu0 %v1957
        %1979 = vmatpush1.msra.mxu0 %v1956
        %1980 = vmatprep.subr.mxu0 0.0
        %1981 = vmatpush1.msra.mxu0 0.0
        %1982 = vmatprep.subr.mxu0 0.0
        %1983 = vmatpush1.msra.mxu0 0.0
        %1984 = vmatprep.subr.mxu0 0.0
        %1985 = vmatpush1.msra.mxu0 0.0
        %1986 = vmatprep.subr.mxu0 0.0
        %1987 = vmatpush1.msra.mxu0 0.0
        %1988 = vmatprep.subr.mxu0 0.0
        %1989 = vmatpush1.msra.mxu0 0.0
        %1990 = vmatprep.subr.mxu0 0.0
        %1991 = vmatpush1.msra.mxu0 0.0
        %1992 = vmatprep.subr.mxu0 0.0
        %1993 = vmatpush1.msra.mxu0 0.0
        %1994 = vmatprep.subr.mxu0 0.0
        %1995 = vmatpush1.msra.mxu0 0.0
        %1996 = vmatprep.subr.mxu0 0.0
        %1997 = vmatpush1.msra.mxu0 0.0
        %1998 = vmatprep.subr.mxu0 0.0
        %1999 = vmatpush1.msra.mxu0 0.0
        %2000 = vmatprep.subr.mxu0 0.0
        %2001 = vmatpush1.msra.mxu0 0.0
        %2002 = vmatprep.subr.mxu0 0.0
        %2003 = vmatpush1.msra.mxu0 0.0
        %2004 = vmatprep.subr.mxu0 0.0
        %2005 = vmatpush1.msra.mxu0 0.0
        %2006 = vmatprep.subr.mxu0 0.0
        %2007 = vmatpush1.msra.mxu0 0.0
        %2008 = vmatprep.subr.mxu0 0.0
        %2009 = vmatpush1.msra.mxu0 0.0
        %2010 = vmatprep.subr.mxu0 0.0
        %2011 = vmatpush1.msra.mxu0 0.0
        %2012 = vmatprep.subr.mxu0 0.0
        %2013 = vmatpush1.msra.mxu0 0.0
        %2014 = vmatprep.subr.mxu0 0.0
        %2015 = vmatpush1.msra.mxu0 0.0
        %2016 = vmatprep.subr.mxu0 0.0
        %2017 = vmatpush1.msra.mxu0 0.0
        %2018 = vmatprep.subr.mxu0 0.0
        %2019 = vmatpush1.msra.mxu0 0.0
        %2020 = vmatprep.subr.mxu0 0.0
        %2021 = vmatpush1.msra.mxu0 0.0
        %2022 = vmatprep.subr.mxu0 0.0
        %2023 = vmatpush1.msra.mxu0 0.0
        %2024 = vmatprep.subr.mxu0 0.0
        %2025 = vmatpush1.msra.mxu0 0.0
        %2026 = vmatprep.subr.mxu0 0.0
        %2027 = vmatpush1.msra.mxu0 0.0
        %2028 = vmatprep.mubr.f32.mxu0 0.0
        %2029 = vmatmul.mubr.f32.gmra.mrb[0].mxu0 %v1959
        %v2030 = vpop.f32.mrb[0].mxu0
        %v2031 = vadd.f32 0.0, %v2030
        %v2032 = vpop.f32.mrb[0].mxu0
        %v2033 = vadd.f32 0.0, %v2032
        %2034 = vmatprep.mubr.f32.mxu0 0.0
        %2035 = vmatmul.mubr.f32.gmra.mrb[0].mxu0 %v1962
        %v2036 = vpop.f32.mrb[0].mxu0
        %v2037 = vadd.f32 0.0, %v2036
        %v2038 = vpop.f32.mrb[0].mxu0
        %v2039 = vadd.f32 0.0, %v2038
        %2040 = vdwg.mxu0
        %2043 = vrot.lane.b32.xlu0 %v2031, 64
        %v2044 = vpop.permute.xlu0 %2043
        %2045 = vrot.lane.b32.xlu0 %v2037, 64
        %v2046 = vpop.permute.xlu0 %2045
        %v2047 = vsel %vm685, %v2031, 0
        %v2049 = vsel %vm685, %v2037, 0
        %v2051 = vsel %vm685, %v2044, 0
        %v2053 = vsel %vm685, %v2046, 0
        %2055 = vmatprep.subr.mxu0 0.0
        %2056 = vmatpush1.xpose.msra.mxu0 %v2051
        %2057 = vmatprep.subr.mxu0 0.0
        %2058 = vmatpush1.xpose.msra.mxu0 %v2053
        %2059 = vmatprep.subr.mxu0 0.0
        %2060 = vmatpush1.xpose.msra.mxu0 0.0
        %2061 = vmatprep.subr.mxu0 0.0
        %2062 = vmatpush1.xpose.msra.mxu0 0.0
        %2063 = vmatprep.subr.mxu0 0.0
        %2064 = vmatpush1.xpose.msra.mxu0 0.0
        %2065 = vmatprep.subr.mxu0 0.0
        %2066 = vmatpush1.xpose.msra.mxu0 0.0
        %2067 = vmatprep.subr.mxu0 0.0
        %2068 = vmatpush1.xpose.msra.mxu0 0.0
        %2069 = vmatprep.subr.mxu0 0.0
        %2070 = vmatpush1.xpose.msra.mxu0 0.0
        %2071 = vmatprep.subr.mxu0 0.0
        %2072 = vmatpush1.xpose.msra.mxu0 0.0
        %2073 = vmatprep.subr.mxu0 0.0
        %2074 = vmatpush1.xpose.msra.mxu0 0.0
        %2075 = vmatprep.subr.mxu0 0.0
        %2076 = vmatpush1.xpose.msra.mxu0 0.0
        %2077 = vmatprep.subr.mxu0 0.0
        %2078 = vmatpush1.xpose.msra.mxu0 0.0
        %2079 = vmatprep.subr.mxu0 0.0
        %2080 = vmatpush1.xpose.msra.mxu0 0.0
        %2081 = vmatprep.subr.mxu0 0.0
        %2082 = vmatpush1.xpose.msra.mxu0 0.0
        %2083 = vmatprep.subr.mxu0 0.0
        %2084 = vmatpush1.xpose.msra.mxu0 0.0
        %2085 = vmatprep.subr.mxu0 0.0
        %2086 = vmatpush1.xpose.msra.mxu0 0.0
        %2087 = vmatprep.subr.mxu0 0.0
        %2088 = vmatpush1.xpose.msra.mxu0 0.0
        %2089 = vmatprep.subr.mxu0 0.0
        %2090 = vmatpush1.xpose.msra.mxu0 0.0
        %2091 = vmatprep.subr.mxu0 0.0
        %2092 = vmatpush1.xpose.msra.mxu0 0.0
        %2093 = vmatprep.subr.mxu0 0.0
        %2094 = vmatpush1.xpose.msra.mxu0 0.0
        %2095 = vmatprep.subr.mxu0 0.0
        %2096 = vmatpush1.xpose.msra.mxu0 0.0
        %2097 = vmatprep.subr.mxu0 0.0
        %2098 = vmatpush1.xpose.msra.mxu0 0.0
        %2099 = vmatprep.subr.mxu0 0.0
        %2100 = vmatpush1.xpose.msra.mxu0 0.0
        %2101 = vmatprep.subr.mxu0 0.0
        %2102 = vmatpush1.xpose.msra.mxu0 0.0
        %2103 = vmatprep.subr.mxu0 0.0
        %2104 = vmatpush1.xpose.msra.mxu0 0.0
        %2105 = vmatprep.subr.mxu0 0.0
        %2106 = vmatpush1.xpose.msra.mxu0 0.0
        %2107 = vmatprep.subr.mxu0 0.0
        %2108 = vmatpush1.xpose.msra.mxu0 0.0
        %2109 = vmatprep.subr.mxu0 0.0
        %2110 = vmatpush1.xpose.msra.mxu0 0.0
        %2111 = vmatprep.subr.mxu0 0.0
        %2112 = vmatpush1.xpose.msra.mxu0 0.0
        %2113 = vmatprep.subr.mxu0 0.0
        %2114 = vmatpush1.xpose.msra.mxu0 0.0
        %2115 = vmatprep.subr.mxu0 0.0
        %2116 = vmatpush1.xpose.msra.mxu0 0.0
        %2117 = vmatprep.subr.mxu0 0.0
        %2118 = vmatpush1.xpose.msra.mxu0 0.0
        %2119 = vmatprep.mubr.f32.mxu0 0.0
        %2120 = vmatmul.mubr.f32.gmra.mrb[0].mxu0 %v2047
        %v2121 = vpop.f32.mrb[0].mxu0
        %v2122 = vadd.f32 0.0, %v2121
        %v2123 = vpop.f32.mrb[0].mxu0
        %2124 = vmatprep.mubr.f32.mxu0 0.0
        %2125 = vmatmul.mubr.f32.gmra.mrb[0].mxu0 %v2049
        %v2126 = vpop.f32.mrb[0].mxu0
        %v2127 = vadd.f32 0.0, %v2126
        %v2128 = vpop.f32.mrb[0].mxu0
        %2129 = vdwg.mxu0
        %v2130 = vmul.f32 %v2122, 0.125
        %v2131 = vmul.f32 %v2127, 0.125
        %v2132 = vadd.f32 %v2130, %v532
        %v2133 = vadd.f32 %v2131, %v533
        %v2134 = vsel %vm685, %v2132, -inf
        %2135 = vmax.xlane.f32.xlu0 %v2134
        %v2136 = vpop.xlane.xlu0 %2135
        %v2137 = vsel %vm685, %v2133, -inf
        %2138 = vmax.xlane.f32.xlu0 %v2137
        %v2139 = vpop.xlane.xlu0 %2138
        %v2140 = vsub.f32 %v2132, %v2136
        %v2141 = vsub.f32 %v2133, %v2139
        %v2142 = vmul.f32 %v2140, 1.442695
        %v2143 = vpow.pop %v2142
        %v2144 = vmul.f32 %v2141, 1.442695
        %v2145 = vpow.pop %v2144
        %v2146 = vsel %vm685, %v2143, 0.0
        %2147 = vadd.xlane.f32.xlu0 %v2146
        %v2148 = vpop.xlane.xlu0 %2147
        %v2149 = vsel %vm685, %v2145, 0.0
        %2150 = vadd.xlane.f32.xlu0 %v2149
        %v2151 = vpop.xlane.xlu0 %2150
        %v2152 = vrcp.pop %v2148
        %v2153 = vmul.f32 %v2143, %v2152
        %v2154 = vrcp.pop %v2151
        %v2155 = vmul.f32 %v2145, %v2154
        %v2157 = vsel %vm685, %v2153, 0
        %v2160 = vsel %vm685, %v2155, 0
        %2162 = vmatprep.subr.mxu0 0.0
        %2163 = vmatpush1.msra.mxu0 %v2033
        %2164 = vmatprep.subr.mxu0 0.0
        %2165 = vmatpush1.msra.mxu0 %v2039
        %2166 = vmatprep.subr.mxu0 0.0
        %2167 = vmatpush1.msra.mxu0 0.0
        %2168 = vmatprep.subr.mxu0 0.0
        %2169 = vmatpush1.msra.mxu0 0.0
        %2170 = vmatprep.subr.mxu0 0.0
        %2171 = vmatpush1.msra.mxu0 0.0
        %2172 = vmatprep.subr.mxu0 0.0
        %2173 = vmatpush1.msra.mxu0 0.0
        %2174 = vmatprep.subr.mxu0 0.0
        %2175 = vmatpush1.msra.mxu0 0.0
        %2176 = vmatprep.subr.mxu0 0.0
        %2177 = vmatpush1.msra.mxu0 0.0
        %2178 = vmatprep.subr.mxu0 0.0
        %2179 = vmatpush1.msra.mxu0 0.0
        %2180 = vmatprep.subr.mxu0 0.0
        %2181 = vmatpush1.msra.mxu0 0.0
        %2182 = vmatprep.subr.mxu0 0.0
        %2183 = vmatpush1.msra.mxu0 0.0
        %2184 = vmatprep.subr.mxu0 0.0
        %2185 = vmatpush1.msra.mxu0 0.0
        %2186 = vmatprep.subr.mxu0 0.0
        %2187 = vmatpush1.msra.mxu0 0.0
        %2188 = vmatprep.subr.mxu0 0.0
        %2189 = vmatpush1.msra.mxu0 0.0
        %2190 = vmatprep.subr.mxu0 0.0
        %2191 = vmatpush1.msra.mxu0 0.0
        %2192 = vmatprep.subr.mxu0 0.0
        %2193 = vmatpush1.msra.mxu0 0.0
        %2194 = vmatprep.subr.mxu0 0.0
        %2195 = vmatpush1.msra.mxu0 0.0
        %2196 = vmatprep.subr.mxu0 0.0
        %2197 = vmatpush1.msra.mxu0 0.0
        %2198 = vmatprep.subr.mxu0 0.0
        %2199 = vmatpush1.msra.mxu0 0.0
        %2200 = vmatprep.subr.mxu0 0.0
        %2201 = vmatpush1.msra.mxu0 0.0
        %2202 = vmatprep.subr.mxu0 0.0
        %2203 = vmatpush1.msra.mxu0 0.0
        %2204 = vmatprep.subr.mxu0 0.0
        %2205 = vmatpush1.msra.mxu0 0.0
        %2206 = vmatprep.subr.mxu0 0.0
        %2207 = vmatpush1.msra.mxu0 0.0
        %2208 = vmatprep.subr.mxu0 0.0
        %2209 = vmatpush1.msra.mxu0 0.0
        %2210 = vmatprep.subr.mxu0 0.0
        %2211 = vmatpush1.msra.mxu0 0.0
        %2212 = vmatprep.subr.mxu0 0.0
        %2213 = vmatpush1.msra.mxu0 0.0
        %2214 = vmatprep.subr.mxu0 0.0
        %2215 = vmatpush1.msra.mxu0 0.0
        %2216 = vmatprep.subr.mxu0 0.0
        %2217 = vmatpush1.msra.mxu0 0.0
        %2218 = vmatprep.subr.mxu0 0.0
        %2219 = vmatpush1.msra.mxu0 0.0
        %2220 = vmatprep.subr.mxu0 0.0
        %2221 = vmatpush1.msra.mxu0 0.0
        %2222 = vmatprep.subr.mxu0 0.0
        %2223 = vmatpush1.msra.mxu0 0.0
        %2224 = vmatprep.subr.mxu0 0.0
        %2225 = vmatpush1.msra.mxu0 0.0
        %2226 = vmatprep.mubr.f32.mxu0 0.0
        %2227 = vmatmul.mubr.f32.gmra.mrb[0].mxu0 %v2157
        %v2228 = vpop.f32.mrb[0].mxu0
        %v2229 = vadd.f32 0.0, %v2228
        %v2230 = vpop.f32.mrb[0].mxu0
        %2231 = vmatprep.mubr.f32.mxu0 0.0
        %2232 = vmatmul.mubr.f32.gmra.mrb[0].mxu0 %v2160
        %v2233 = vpop.f32.mrb[0].mxu0
        %v2234 = vadd.f32 0.0, %v2233
        %v2235 = vpop.f32.mrb[0].mxu0
        %2236 = vdwg.mxu0
        %2237 = vrot.lane.b32.xlu0 %v2031, 112
        %v2238 = vpop.permute.xlu0 %2237
        %2239 = vrot.lane.b32.xlu0 %v2037, 112
        %v2240 = vpop.permute.xlu0 %2239
        %2241 = vrot.lane.b32.xlu0 %v2031, 48
        %v2242 = vpop.permute.xlu0 %2241
        %2243 = vrot.lane.b32.xlu0 %v2037, 48
        %v2244 = vpop.permute.xlu0 %2243
        %v2245 = vsel %vm685, %v2238, 0
        %v2247 = vsel %vm685, %v2240, 0
        %v2249 = vsel %vm685, %v2242, 0
        %v2251 = vsel %vm685, %v2244, 0
        %2253 = vmatprep.subr.mxu0 0.0
        %2254 = vmatpush1.xpose.msra.mxu0 %v2249
        %2255 = vmatprep.subr.mxu0 0.0
        %2256 = vmatpush1.xpose.msra.mxu0 %v2251
        %2257 = vmatprep.subr.mxu0 0.0
        %2258 = vmatpush1.xpose.msra.mxu0 0.0
        %2259 = vmatprep.subr.mxu0 0.0
        %2260 = vmatpush1.xpose.msra.mxu0 0.0
        %2261 = vmatprep.subr.mxu0 0.0
        %2262 = vmatpush1.xpose.msra.mxu0 0.0
        %2263 = vmatprep.subr.mxu0 0.0
        %2264 = vmatpush1.xpose.msra.mxu0 0.0
        %2265 = vmatprep.subr.mxu0 0.0
        %2266 = vmatpush1.xpose.msra.mxu0 0.0
        %2267 = vmatprep.subr.mxu0 0.0
        %2268 = vmatpush1.xpose.msra.mxu0 0.0
        %2269 = vmatprep.subr.mxu0 0.0
        %2270 = vmatpush1.xpose.msra.mxu0 0.0
        %2271 = vmatprep.subr.mxu0 0.0
        %2272 = vmatpush1.xpose.msra.mxu0 0.0
        %2273 = vmatprep.subr.mxu0 0.0
        %2274 = vmatpush1.xpose.msra.mxu0 0.0
        %2275 = vmatprep.subr.mxu0 0.0
        %2276 = vmatpush1.xpose.msra.mxu0 0.0
        %2277 = vmatprep.subr.mxu0 0.0
        %2278 = vmatpush1.xpose.msra.mxu0 0.0
        %2279 = vmatprep.subr.mxu0 0.0
        %2280 = vmatpush1.xpose.msra.mxu0 0.0
        %2281 = vmatprep.subr.mxu0 0.0
        %2282 = vmatpush1.xpose.msra.mxu0 0.0
        %2283 = vmatprep.subr.mxu0 0.0
        %2284 = vmatpush1.xpose.msra.mxu0 0.0
        %2285 = vmatprep.subr.mxu0 0.0
        %2286 = vmatpush1.xpose.msra.mxu0 0.0
        %2287 = vmatprep.subr.mxu0 0.0
        %2288 = vmatpush1.xpose.msra.mxu0 0.0
        %2289 = vmatprep.subr.mxu0 0.0
        %2290 = vmatpush1.xpose.msra.mxu0 0.0
        %2291 = vmatprep.subr.mxu0 0.0
        %2292 = vmatpush1.xpose.msra.mxu0 0.0
        %2293 = vmatprep.subr.mxu0 0.0
        %2294 = vmatpush1.xpose.msra.mxu0 0.0
        %2295 = vmatprep.subr.mxu0 0.0
        %2296 = vmatpush1.xpose.msra.mxu0 0.0
        %2297 = vmatprep.subr.mxu0 0.0
        %2298 = vmatpush1.xpose.msra.mxu0 0.0
        %2299 = vmatprep.subr.mxu0 0.0
        %2300 = vmatpush1.xpose.msra.mxu0 0.0
        %2301 = vmatprep.subr.mxu0 0.0
        %2302 = vmatpush1.xpose.msra.mxu0 0.0
        %2303 = vmatprep.subr.mxu0 0.0
        %2304 = vmatpush1.xpose.msra.mxu0 0.0
        %2305 = vmatprep.subr.mxu0 0.0
        %2306 = vmatpush1.xpose.msra.mxu0 0.0
        %2307 = vmatprep.subr.mxu0 0.0
        %2308 = vmatpush1.xpose.msra.mxu0 0.0
        %2309 = vmatprep.subr.mxu0 0.0
        %2310 = vmatpush1.xpose.msra.mxu0 0.0
        %2311 = vmatprep.subr.mxu0 0.0
        %2312 = vmatpush1.xpose.msra.mxu0 0.0
        %2313 = vmatprep.subr.mxu0 0.0
        %2314 = vmatpush1.xpose.msra.mxu0 0.0
        %2315 = vmatprep.subr.mxu0 0.0
        %2316 = vmatpush1.xpose.msra.mxu0 0.0
        %2317 = vmatprep.mubr.f32.mxu0 0.0
        %2318 = vmatmul.mubr.f32.gmra.mrb[0].mxu0 %v2245
        %v2319 = vpop.f32.mrb[0].mxu0
        %v2320 = vadd.f32 0.0, %v2319
        %v2321 = vpop.f32.mrb[0].mxu0
        %2322 = vmatprep.mubr.f32.mxu0 0.0
        %2323 = vmatmul.mubr.f32.gmra.mrb[0].mxu0 %v2247
        %v2324 = vpop.f32.mrb[0].mxu0
        %v2325 = vadd.f32 0.0, %v2324
        %v2326 = vpop.f32.mrb[0].mxu0
        %2327 = vdwg.mxu0
        %v2328 = vmul.f32 %v2320, 0.125
        %v2329 = vmul.f32 %v2325, 0.125
        %v2330 = vadd.f32 %v2328, %v532
        %v2331 = vadd.f32 %v2329, %v533
        %v2332 = vsel %vm685, %v2330, -inf
        %2333 = vmax.xlane.f32.xlu0 %v2332
        %v2334 = vpop.xlane.xlu0 %2333
        %v2335 = vsel %vm685, %v2331, -inf
        %2336 = vmax.xlane.f32.xlu0 %v2335
        %v2337 = vpop.xlane.xlu0 %2336
        %v2338 = vsub.f32 %v2330, %v2334
        %v2339 = vsub.f32 %v2331, %v2337
        %v2340 = vmul.f32 %v2338, 1.442695
        %v2341 = vpow.pop %v2340
        %v2342 = vmul.f32 %v2339, 1.442695
        %v2343 = vpow.pop %v2342
        %v2344 = vsel %vm685, %v2341, 0.0
        %2345 = vadd.xlane.f32.xlu0 %v2344
        %v2346 = vpop.xlane.xlu0 %2345
        %v2347 = vsel %vm685, %v2343, 0.0
        %2348 = vadd.xlane.f32.xlu0 %v2347
        %v2349 = vpop.xlane.xlu0 %2348
        %v2350 = vrcp.pop %v2346
        %v2351 = vmul.f32 %v2341, %v2350
        %v2352 = vrcp.pop %v2349
        %v2353 = vmul.f32 %v2343, %v2352
        %2356 = vrot.lane.b32.xlu0 %v2033, 112
        %v2357 = vpop.permute.xlu0 %2356
        %2358 = vrot.lane.b32.xlu0 %v2039, 112
        %v2359 = vpop.permute.xlu0 %2358
        %v2363 = vsel %vm685, %v2351, 0
        %v2366 = vsel %vm685, %v2353, 0
        %2368 = vmatprep.subr.mxu0 0.0
        %2369 = vmatpush1.msra.mxu0 %v2357
        %2370 = vmatprep.subr.mxu0 0.0
        %2371 = vmatpush1.msra.mxu0 %v2359
        %2372 = vmatprep.subr.mxu0 0.0
        %2373 = vmatpush1.msra.mxu0 0.0
        %2374 = vmatprep.subr.mxu0 0.0
        %2375 = vmatpush1.msra.mxu0 0.0
        %2376 = vmatprep.subr.mxu0 0.0
        %2377 = vmatpush1.msra.mxu0 0.0
        %2378 = vmatprep.subr.mxu0 0.0
        %2379 = vmatpush1.msra.mxu0 0.0
        %2380 = vmatprep.subr.mxu0 0.0
        %2381 = vmatpush1.msra.mxu0 0.0
        %2382 = vmatprep.subr.mxu0 0.0
        %2383 = vmatpush1.msra.mxu0 0.0
        %2384 = vmatprep.subr.mxu0 0.0
        %2385 = vmatpush1.msra.mxu0 0.0
        %2386 = vmatprep.subr.mxu0 0.0
        %2387 = vmatpush1.msra.mxu0 0.0
        %2388 = vmatprep.subr.mxu0 0.0
        %2389 = vmatpush1.msra.mxu0 0.0
        %2390 = vmatprep.subr.mxu0 0.0
        %2391 = vmatpush1.msra.mxu0 0.0
        %2392 = vmatprep.subr.mxu0 0.0
        %2393 = vmatpush1.msra.mxu0 0.0
        %2394 = vmatprep.subr.mxu0 0.0
        %2395 = vmatpush1.msra.mxu0 0.0
        %2396 = vmatprep.subr.mxu0 0.0
        %2397 = vmatpush1.msra.mxu0 0.0
        %2398 = vmatprep.subr.mxu0 0.0
        %2399 = vmatpush1.msra.mxu0 0.0
        %2400 = vmatprep.subr.mxu0 0.0
        %2401 = vmatpush1.msra.mxu0 0.0
        %2402 = vmatprep.subr.mxu0 0.0
        %2403 = vmatpush1.msra.mxu0 0.0
        %2404 = vmatprep.subr.mxu0 0.0
        %2405 = vmatpush1.msra.mxu0 0.0
        %2406 = vmatprep.subr.mxu0 0.0
        %2407 = vmatpush1.msra.mxu0 0.0
        %2408 = vmatprep.subr.mxu0 0.0
        %2409 = vmatpush1.msra.mxu0 0.0
        %2410 = vmatprep.subr.mxu0 0.0
        %2411 = vmatpush1.msra.mxu0 0.0
        %2412 = vmatprep.subr.mxu0 0.0
        %2413 = vmatpush1.msra.mxu0 0.0
        %2414 = vmatprep.subr.mxu0 0.0
        %2415 = vmatpush1.msra.mxu0 0.0
        %2416 = vmatprep.subr.mxu0 0.0
        %2417 = vmatpush1.msra.mxu0 0.0
        %2418 = vmatprep.subr.mxu0 0.0
        %2419 = vmatpush1.msra.mxu0 0.0
        %2420 = vmatprep.subr.mxu0 0.0
        %2421 = vmatpush1.msra.mxu0 0.0
        %2422 = vmatprep.subr.mxu0 0.0
        %2423 = vmatpush1.msra.mxu0 0.0
        %2424 = vmatprep.subr.mxu0 0.0
        %2425 = vmatpush1.msra.mxu0 0.0
        %2426 = vmatprep.subr.mxu0 0.0
        %2427 = vmatpush1.msra.mxu0 0.0
        %2428 = vmatprep.subr.mxu0 0.0
        %2429 = vmatpush1.msra.mxu0 0.0
        %2430 = vmatprep.subr.mxu0 0.0
        %2431 = vmatpush1.msra.mxu0 0.0
        %2432 = vmatprep.mubr.f32.mxu0 0.0
        %2433 = vmatmul.mubr.f32.gmra.mrb[0].mxu0 %v2363
        %v2434 = vpop.f32.mrb[0].mxu0
        %v2435 = vadd.f32 0.0, %v2434
        %v2436 = vpop.f32.mrb[0].mxu0
        %2437 = vmatprep.mubr.f32.mxu0 0.0
        %2438 = vmatmul.mubr.f32.gmra.mrb[0].mxu0 %v2366
        %v2439 = vpop.f32.mrb[0].mxu0
        %v2440 = vadd.f32 0.0, %v2439
        %v2441 = vpop.f32.mrb[0].mxu0
        %2442 = vdwg.mxu0
        %2443 = vrot.lane.b32.xlu0 %v2031, 96
        %v2444 = vpop.permute.xlu0 %2443
        %2445 = vrot.lane.b32.xlu0 %v2037, 96
        %v2446 = vpop.permute.xlu0 %2445
        %2447 = vrot.lane.b32.xlu0 %v2031, 32
        %v2448 = vpop.permute.xlu0 %2447
        %2449 = vrot.lane.b32.xlu0 %v2037, 32
        %v2450 = vpop.permute.xlu0 %2449
        %v2451 = vsel %vm685, %v2444, 0
        %v2453 = vsel %vm685, %v2446, 0
        %v2455 = vsel %vm685, %v2448, 0
        %v2457 = vsel %vm685, %v2450, 0
        %2459 = vmatprep.subr.mxu0 0.0
        %2460 = vmatpush1.xpose.msra.mxu0 %v2455
        %2461 = vmatprep.subr.mxu0 0.0
        %2462 = vmatpush1.xpose.msra.mxu0 %v2457
        %2463 = vmatprep.subr.mxu0 0.0
        %2464 = vmatpush1.xpose.msra.mxu0 0.0
        %2465 = vmatprep.subr.mxu0 0.0
        %2466 = vmatpush1.xpose.msra.mxu0 0.0
        %2467 = vmatprep.subr.mxu0 0.0
        %2468 = vmatpush1.xpose.msra.mxu0 0.0
        %2469 = vmatprep.subr.mxu0 0.0
        %2470 = vmatpush1.xpose.msra.mxu0 0.0
        %2471 = vmatprep.subr.mxu0 0.0
        %2472 = vmatpush1.xpose.msra.mxu0 0.0
        %2473 = vmatprep.subr.mxu0 0.0
        %2474 = vmatpush1.xpose.msra.mxu0 0.0
        %2475 = vmatprep.subr.mxu0 0.0
        %2476 = vmatpush1.xpose.msra.mxu0 0.0
        %2477 = vmatprep.subr.mxu0 0.0
        %2478 = vmatpush1.xpose.msra.mxu0 0.0
        %2479 = vmatprep.subr.mxu0 0.0
        %2480 = vmatpush1.xpose.msra.mxu0 0.0
        %2481 = vmatprep.subr.mxu0 0.0
        %2482 = vmatpush1.xpose.msra.mxu0 0.0
        %2483 = vmatprep.subr.mxu0 0.0
        %2484 = vmatpush1.xpose.msra.mxu0 0.0
        %2485 = vmatprep.subr.mxu0 0.0
        %2486 = vmatpush1.xpose.msra.mxu0 0.0
        %2487 = vmatprep.subr.mxu0 0.0
        %2488 = vmatpush1.xpose.msra.mxu0 0.0
        %2489 = vmatprep.subr.mxu0 0.0
        %2490 = vmatpush1.xpose.msra.mxu0 0.0
        %2491 = vmatprep.subr.mxu0 0.0
        %2492 = vmatpush1.xpose.msra.mxu0 0.0
        %2493 = vmatprep.subr.mxu0 0.0
        %2494 = vmatpush1.xpose.msra.mxu0 0.0
        %2495 = vmatprep.subr.mxu0 0.0
        %2496 = vmatpush1.xpose.msra.mxu0 0.0
        %2497 = vmatprep.subr.mxu0 0.0
        %2498 = vmatpush1.xpose.msra.mxu0 0.0
        %2499 = vmatprep.subr.mxu0 0.0
        %2500 = vmatpush1.xpose.msra.mxu0 0.0
        %2501 = vmatprep.subr.mxu0 0.0
        %2502 = vmatpush1.xpose.msra.mxu0 0.0
        %2503 = vmatprep.subr.mxu0 0.0
        %2504 = vmatpush1.xpose.msra.mxu0 0.0
        %2505 = vmatprep.subr.mxu0 0.0
        %2506 = vmatpush1.xpose.msra.mxu0 0.0
        %2507 = vmatprep.subr.mxu0 0.0
        %2508 = vmatpush1.xpose.msra.mxu0 0.0
        %2509 = vmatprep.subr.mxu0 0.0
        %2510 = vmatpush1.xpose.msra.mxu0 0.0
        %2511 = vmatprep.subr.mxu0 0.0
        %2512 = vmatpush1.xpose.msra.mxu0 0.0
        %2513 = vmatprep.subr.mxu0 0.0
        %2514 = vmatpush1.xpose.msra.mxu0 0.0
        %2515 = vmatprep.subr.mxu0 0.0
        %2516 = vmatpush1.xpose.msra.mxu0 0.0
        %2517 = vmatprep.subr.mxu0 0.0
        %2518 = vmatpush1.xpose.msra.mxu0 0.0
        %2519 = vmatprep.subr.mxu0 0.0
        %2520 = vmatpush1.xpose.msra.mxu0 0.0
        %2521 = vmatprep.subr.mxu0 0.0
        %2522 = vmatpush1.xpose.msra.mxu0 0.0
        %2523 = vmatprep.mubr.f32.mxu0 0.0
        %2524 = vmatmul.mubr.f32.gmra.mrb[0].mxu0 %v2451
        %v2525 = vpop.f32.mrb[0].mxu0
        %v2526 = vadd.f32 0.0, %v2525
        %v2527 = vpop.f32.mrb[0].mxu0
        %2528 = vmatprep.mubr.f32.mxu0 0.0
        %2529 = vmatmul.mubr.f32.gmra.mrb[0].mxu0 %v2453
        %v2530 = vpop.f32.mrb[0].mxu0
        %v2531 = vadd.f32 0.0, %v2530
        %v2532 = vpop.f32.mrb[0].mxu0
        %2533 = vdwg.mxu0
        %v2534 = vmul.f32 %v2526, 0.125
        %v2535 = vmul.f32 %v2531, 0.125
        %v2536 = vadd.f32 %v2534, %v532
        %v2537 = vadd.f32 %v2535, %v533
        %v2538 = vsel %vm685, %v2536, -inf
        %2539 = vmax.xlane.f32.xlu0 %v2538
        %v2540 = vpop.xlane.xlu0 %2539
        %v2541 = vsel %vm685, %v2537, -inf
        %2542 = vmax.xlane.f32.xlu0 %v2541
        %v2543 = vpop.xlane.xlu0 %2542
        %v2544 = vsub.f32 %v2536, %v2540
        %v2545 = vsub.f32 %v2537, %v2543
        %v2546 = vmul.f32 %v2544, 1.442695
        %v2547 = vpow.pop %v2546
        %v2548 = vmul.f32 %v2545, 1.442695
        %v2549 = vpow.pop %v2548
        %v2550 = vsel %vm685, %v2547, 0.0
        %2551 = vadd.xlane.f32.xlu0 %v2550
        %v2552 = vpop.xlane.xlu0 %2551
        %v2553 = vsel %vm685, %v2549, 0.0
        %2554 = vadd.xlane.f32.xlu0 %v2553
        %v2555 = vpop.xlane.xlu0 %2554
        %v2556 = vrcp.pop %v2552
        %v2557 = vmul.f32 %v2547, %v2556
        %v2558 = vrcp.pop %v2555
        %v2559 = vmul.f32 %v2549, %v2558
        %2560 = vrot.lane.b32.xlu0 %v2033, 96
        %v2561 = vpop.permute.xlu0 %2560
        %2562 = vrot.lane.b32.xlu0 %v2039, 96
        %v2563 = vpop.permute.xlu0 %2562
        %v2567 = vsel %vm685, %v2557, 0
        %v2570 = vsel %vm685, %v2559, 0
        %2572 = vmatprep.subr.mxu0 0.0
        %2573 = vmatpush1.msra.mxu0 %v2561
        %2574 = vmatprep.subr.mxu0 0.0
        %2575 = vmatpush1.msra.mxu0 %v2563
        %2576 = vmatprep.subr.mxu0 0.0
        %2577 = vmatpush1.msra.mxu0 0.0
        %2578 = vmatprep.subr.mxu0 0.0
        %2579 = vmatpush1.msra.mxu0 0.0
        %2580 = vmatprep.subr.mxu0 0.0
        %2581 = vmatpush1.msra.mxu0 0.0
        %2582 = vmatprep.subr.mxu0 0.0
        %2583 = vmatpush1.msra.mxu0 0.0
        %2584 = vmatprep.subr.mxu0 0.0
        %2585 = vmatpush1.msra.mxu0 0.0
        %2586 = vmatprep.subr.mxu0 0.0
        %2587 = vmatpush1.msra.mxu0 0.0
        %2588 = vmatprep.subr.mxu0 0.0
        %2589 = vmatpush1.msra.mxu0 0.0
        %2590 = vmatprep.subr.mxu0 0.0
        %2591 = vmatpush1.msra.mxu0 0.0
        %2592 = vmatprep.subr.mxu0 0.0
        %2593 = vmatpush1.msra.mxu0 0.0
        %2594 = vmatprep.subr.mxu0 0.0
        %2595 = vmatpush1.msra.mxu0 0.0
        %2596 = vmatprep.subr.mxu0 0.0
        %2597 = vmatpush1.msra.mxu0 0.0
        %2598 = vmatprep.subr.mxu0 0.0
        %2599 = vmatpush1.msra.mxu0 0.0
        %2600 = vmatprep.subr.mxu0 0.0
        %2601 = vmatpush1.msra.mxu0 0.0
        %2602 = vmatprep.subr.mxu0 0.0
        %2603 = vmatpush1.msra.mxu0 0.0
        %2604 = vmatprep.subr.mxu0 0.0
        %2605 = vmatpush1.msra.mxu0 0.0
        %2606 = vmatprep.subr.mxu0 0.0
        %2607 = vmatpush1.msra.mxu0 0.0
        %2608 = vmatprep.subr.mxu0 0.0
        %2609 = vmatpush1.msra.mxu0 0.0
        %2610 = vmatprep.subr.mxu0 0.0
        %2611 = vmatpush1.msra.mxu0 0.0
        %2612 = vmatprep.subr.mxu0 0.0
        %2613 = vmatpush1.msra.mxu0 0.0
        %2614 = vmatprep.subr.mxu0 0.0
        %2615 = vmatpush1.msra.mxu0 0.0
        %2616 = vmatprep.subr.mxu0 0.0
        %2617 = vmatpush1.msra.mxu0 0.0
        %2618 = vmatprep.subr.mxu0 0.0
        %2619 = vmatpush1.msra.mxu0 0.0
        %2620 = vmatprep.subr.mxu0 0.0
        %2621 = vmatpush1.msra.mxu0 0.0
        %2622 = vmatprep.subr.mxu0 0.0
        %2623 = vmatpush1.msra.mxu0 0.0
        %2624 = vmatprep.subr.mxu0 0.0
        %2625 = vmatpush1.msra.mxu0 0.0
        %2626 = vmatprep.subr.mxu0 0.0
        %2627 = vmatpush1.msra.mxu0 0.0
        %2628 = vmatprep.subr.mxu0 0.0
        %2629 = vmatpush1.msra.mxu0 0.0
        %2630 = vmatprep.subr.mxu0 0.0
        %2631 = vmatpush1.msra.mxu0 0.0
        %2632 = vmatprep.subr.mxu0 0.0
        %2633 = vmatpush1.msra.mxu0 0.0
        %2634 = vmatprep.subr.mxu0 0.0
        %2635 = vmatpush1.msra.mxu0 0.0
        %2636 = vmatprep.mubr.f32.mxu0 0.0
        %2637 = vmatmul.mubr.f32.gmra.mrb[0].mxu0 %v2567
        %v2638 = vpop.f32.mrb[0].mxu0
        %v2639 = vadd.f32 0.0, %v2638
        %v2640 = vpop.f32.mrb[0].mxu0
        %2641 = vmatprep.mubr.f32.mxu0 0.0
        %2642 = vmatmul.mubr.f32.gmra.mrb[0].mxu0 %v2570
        %v2643 = vpop.f32.mrb[0].mxu0
        %v2644 = vadd.f32 0.0, %v2643
        %v2645 = vpop.f32.mrb[0].mxu0
        %2646 = vdwg.mxu0
        %2647 = vrot.lane.b32.xlu0 %v2031, 80
        %v2648 = vpop.permute.xlu0 %2647
        %2649 = vrot.lane.b32.xlu0 %v2037, 80
        %v2650 = vpop.permute.xlu0 %2649
        %2651 = vrot.lane.b32.xlu0 %v2031, 16
        %v2652 = vpop.permute.xlu0 %2651
        %2653 = vrot.lane.b32.xlu0 %v2037, 16
        %v2654 = vpop.permute.xlu0 %2653
        %v2655 = vsel %vm685, %v2648, 0
        %v2657 = vsel %vm685, %v2650, 0
        %v2659 = vsel %vm685, %v2652, 0
        %v2661 = vsel %vm685, %v2654, 0
        %2663 = vmatprep.subr.mxu0 0.0
        %2664 = vmatpush1.xpose.msra.mxu0 %v2659
        %2665 = vmatprep.subr.mxu0 0.0
        %2666 = vmatpush1.xpose.msra.mxu0 %v2661
        %2667 = vmatprep.subr.mxu0 0.0
        %2668 = vmatpush1.xpose.msra.mxu0 0.0
        %2669 = vmatprep.subr.mxu0 0.0
        %2670 = vmatpush1.xpose.msra.mxu0 0.0
        %2671 = vmatprep.subr.mxu0 0.0
        %2672 = vmatpush1.xpose.msra.mxu0 0.0
        %2673 = vmatprep.subr.mxu0 0.0
        %2674 = vmatpush1.xpose.msra.mxu0 0.0
        %2675 = vmatprep.subr.mxu0 0.0
        %2676 = vmatpush1.xpose.msra.mxu0 0.0
        %2677 = vmatprep.subr.mxu0 0.0
        %2678 = vmatpush1.xpose.msra.mxu0 0.0
        %2679 = vmatprep.subr.mxu0 0.0
        %2680 = vmatpush1.xpose.msra.mxu0 0.0
        %2681 = vmatprep.subr.mxu0 0.0
        %2682 = vmatpush1.xpose.msra.mxu0 0.0
        %2683 = vmatprep.subr.mxu0 0.0
        %2684 = vmatpush1.xpose.msra.mxu0 0.0
        %2685 = vmatprep.subr.mxu0 0.0
        %2686 = vmatpush1.xpose.msra.mxu0 0.0
        %2687 = vmatprep.subr.mxu0 0.0
        %2688 = vmatpush1.xpose.msra.mxu0 0.0
        %2689 = vmatprep.subr.mxu0 0.0
        %2690 = vmatpush1.xpose.msra.mxu0 0.0
        %2691 = vmatprep.subr.mxu0 0.0
        %2692 = vmatpush1.xpose.msra.mxu0 0.0
        %2693 = vmatprep.subr.mxu0 0.0
        %2694 = vmatpush1.xpose.msra.mxu0 0.0
        %2695 = vmatprep.subr.mxu0 0.0
        %2696 = vmatpush1.xpose.msra.mxu0 0.0
        %2697 = vmatprep.subr.mxu0 0.0
        %2698 = vmatpush1.xpose.msra.mxu0 0.0
        %2699 = vmatprep.subr.mxu0 0.0
        %2700 = vmatpush1.xpose.msra.mxu0 0.0
        %2701 = vmatprep.subr.mxu0 0.0
        %2702 = vmatpush1.xpose.msra.mxu0 0.0
        %2703 = vmatprep.subr.mxu0 0.0
        %2704 = vmatpush1.xpose.msra.mxu0 0.0
        %2705 = vmatprep.subr.mxu0 0.0
        %2706 = vmatpush1.xpose.msra.mxu0 0.0
        %2707 = vmatprep.subr.mxu0 0.0
        %2708 = vmatpush1.xpose.msra.mxu0 0.0
        %2709 = vmatprep.subr.mxu0 0.0
        %2710 = vmatpush1.xpose.msra.mxu0 0.0
        %2711 = vmatprep.subr.mxu0 0.0
        %2712 = vmatpush1.xpose.msra.mxu0 0.0
        %2713 = vmatprep.subr.mxu0 0.0
        %2714 = vmatpush1.xpose.msra.mxu0 0.0
        %2715 = vmatprep.subr.mxu0 0.0
        %2716 = vmatpush1.xpose.msra.mxu0 0.0
        %2717 = vmatprep.subr.mxu0 0.0
        %2718 = vmatpush1.xpose.msra.mxu0 0.0
        %2719 = vmatprep.subr.mxu0 0.0
        %2720 = vmatpush1.xpose.msra.mxu0 0.0
        %2721 = vmatprep.subr.mxu0 0.0
        %2722 = vmatpush1.xpose.msra.mxu0 0.0
        %2723 = vmatprep.subr.mxu0 0.0
        %2724 = vmatpush1.xpose.msra.mxu0 0.0
        %2725 = vmatprep.subr.mxu0 0.0
        %2726 = vmatpush1.xpose.msra.mxu0 0.0
        %2727 = vmatprep.mubr.f32.mxu0 0.0
        %2728 = vmatmul.mubr.f32.gmra.mrb[0].mxu0 %v2655
        %v2729 = vpop.f32.mrb[0].mxu0
        %v2730 = vadd.f32 0.0, %v2729
        %v2731 = vpop.f32.mrb[0].mxu0
        %2732 = vmatprep.mubr.f32.mxu0 0.0
        %2733 = vmatmul.mubr.f32.gmra.mrb[0].mxu0 %v2657
        %v2734 = vpop.f32.mrb[0].mxu0
        %v2735 = vadd.f32 0.0, %v2734
        %v2736 = vpop.f32.mrb[0].mxu0
        %2737 = vdwg.mxu0
        %v2738 = vmul.f32 %v2730, 0.125
        %v2739 = vmul.f32 %v2735, 0.125
        %v2740 = vadd.f32 %v2738, %v532
        %v2741 = vadd.f32 %v2739, %v533
        %v2742 = vsel %vm685, %v2740, -inf
        %2743 = vmax.xlane.f32.xlu0 %v2742
        %v2744 = vpop.xlane.xlu0 %2743
        %v2745 = vsel %vm685, %v2741, -inf
        %2746 = vmax.xlane.f32.xlu0 %v2745
        %v2747 = vpop.xlane.xlu0 %2746
        %v2748 = vsub.f32 %v2740, %v2744
        %v2749 = vsub.f32 %v2741, %v2747
        %v2750 = vmul.f32 %v2748, 1.442695
        %v2751 = vpow.pop %v2750
        %v2752 = vmul.f32 %v2749, 1.442695
        %v2753 = vpow.pop %v2752
        %v2754 = vsel %vm685, %v2751, 0.0
        %2755 = vadd.xlane.f32.xlu0 %v2754
        %v2756 = vpop.xlane.xlu0 %2755
        %v2757 = vsel %vm685, %v2753, 0.0
        %2758 = vadd.xlane.f32.xlu0 %v2757
        %v2759 = vpop.xlane.xlu0 %2758
        %v2760 = vrcp.pop %v2756
        %v2761 = vmul.f32 %v2751, %v2760
        %v2762 = vrcp.pop %v2759
        %v2763 = vmul.f32 %v2753, %v2762
        %2764 = vrot.lane.b32.xlu0 %v2033, 80
        %v2765 = vpop.permute.xlu0 %2764
        %2766 = vrot.lane.b32.xlu0 %v2039, 80
        %v2767 = vpop.permute.xlu0 %2766
        %v2771 = vsel %vm685, %v2761, 0
        %v2774 = vsel %vm685, %v2763, 0
        %2776 = vmatprep.subr.mxu0 0.0
        %2777 = vmatpush1.msra.mxu0 %v2765
        %2778 = vmatprep.subr.mxu0 0.0
        %2779 = vmatpush1.msra.mxu0 %v2767
        %2780 = vmatprep.subr.mxu0 0.0
        %2781 = vmatpush1.msra.mxu0 0.0
        %2782 = vmatprep.subr.mxu0 0.0
        %2783 = vmatpush1.msra.mxu0 0.0
        %2784 = vmatprep.subr.mxu0 0.0
        %2785 = vmatpush1.msra.mxu0 0.0
        %2786 = vmatprep.subr.mxu0 0.0
        %2787 = vmatpush1.msra.mxu0 0.0
        %2788 = vmatprep.subr.mxu0 0.0
        %2789 = vmatpush1.msra.mxu0 0.0
        %2790 = vmatprep.subr.mxu0 0.0
        %2791 = vmatpush1.msra.mxu0 0.0
        %2792 = vmatprep.subr.mxu0 0.0
        %2793 = vmatpush1.msra.mxu0 0.0
        %2794 = vmatprep.subr.mxu0 0.0
        %2795 = vmatpush1.msra.mxu0 0.0
        %2796 = vmatprep.subr.mxu0 0.0
        %2797 = vmatpush1.msra.mxu0 0.0
        %2798 = vmatprep.subr.mxu0 0.0
        %2799 = vmatpush1.msra.mxu0 0.0
        %2800 = vmatprep.subr.mxu0 0.0
        %2801 = vmatpush1.msra.mxu0 0.0
        %2802 = vmatprep.subr.mxu0 0.0
        %2803 = vmatpush1.msra.mxu0 0.0
        %2804 = vmatprep.subr.mxu0 0.0
        %2805 = vmatpush1.msra.mxu0 0.0
        %2806 = vmatprep.subr.mxu0 0.0
        %2807 = vmatpush1.msra.mxu0 0.0
        %2808 = vmatprep.subr.mxu0 0.0
        %2809 = vmatpush1.msra.mxu0 0.0
        %2810 = vmatprep.subr.mxu0 0.0
        %2811 = vmatpush1.msra.mxu0 0.0
        %2812 = vmatprep.subr.mxu0 0.0
        %2813 = vmatpush1.msra.mxu0 0.0
        %2814 = vmatprep.subr.mxu0 0.0
        %2815 = vmatpush1.msra.mxu0 0.0
        %2816 = vmatprep.subr.mxu0 0.0
        %2817 = vmatpush1.msra.mxu0 0.0
        %2818 = vmatprep.subr.mxu0 0.0
        %2819 = vmatpush1.msra.mxu0 0.0
        %2820 = vmatprep.subr.mxu0 0.0
        %2821 = vmatpush1.msra.mxu0 0.0
        %2822 = vmatprep.subr.mxu0 0.0
        %2823 = vmatpush1.msra.mxu0 0.0
        %2824 = vmatprep.subr.mxu0 0.0
        %2825 = vmatpush1.msra.mxu0 0.0
        %2826 = vmatprep.subr.mxu0 0.0
        %2827 = vmatpush1.msra.mxu0 0.0
        %2828 = vmatprep.subr.mxu0 0.0
        %2829 = vmatpush1.msra.mxu0 0.0
        %2830 = vmatprep.subr.mxu0 0.0
        %2831 = vmatpush1.msra.mxu0 0.0
        %2832 = vmatprep.subr.mxu0 0.0
        %2833 = vmatpush1.msra.mxu0 0.0
        %2834 = vmatprep.subr.mxu0 0.0
        %2835 = vmatpush1.msra.mxu0 0.0
        %2836 = vmatprep.subr.mxu0 0.0
        %2837 = vmatpush1.msra.mxu0 0.0
        %2838 = vmatprep.subr.mxu0 0.0
        %2839 = vmatpush1.msra.mxu0 0.0
        %2840 = vmatprep.mubr.f32.mxu0 0.0
        %2841 = vmatmul.mubr.f32.gmra.mrb[0].mxu0 %v2771
        %v2842 = vpop.f32.mrb[0].mxu0
        %v2843 = vadd.f32 0.0, %v2842
        %v2844 = vpop.f32.mrb[0].mxu0
        %2845 = vmatprep.mubr.f32.mxu0 0.0
        %2846 = vmatmul.mubr.f32.gmra.mrb[0].mxu0 %v2774
        %v2847 = vpop.f32.mrb[0].mxu0
        %v2848 = vadd.f32 0.0, %v2847
        %v2849 = vpop.f32.mrb[0].mxu0
        %2850 = vdwg.mxu0
        %2853 = vrot.lane.b32.xlu0 %v2435, 16
        %v2854 = vpop.permute.xlu0 %2853
        %2855 = vrot.lane.b32.xlu0 %v2440, 16
        %v2856 = vpop.permute.xlu0 %2855
        %2861 = vrot.lane.b32.xlu0 %v2639, 32
        %v2862 = vpop.permute.xlu0 %2861
        %2863 = vrot.lane.b32.xlu0 %v2644, 32
        %v2864 = vpop.permute.xlu0 %2863
        %2869 = vrot.lane.b32.xlu0 %v2843, 48
        %v2870 = vpop.permute.xlu0 %2869
        %2871 = vrot.lane.b32.xlu0 %v2848, 48
        %v2872 = vpop.permute.xlu0 %2871
        %v2875 = vsel %vm685, %v2229, %v2854
        %v2876 = vsel %vm685, %v2234, %v2856
        %v2877 = vsel %vm1516, %v2875, %v2862
        %v2878 = vsel %vm1516, %v2876, %v2864
        %v2879 = vsel %vm1519, %v2877, %v2870
        %v2880 = vsel %vm1519, %v2878, %v2872
        %s2881 = scalar_lea.vmem %s4, 64
        %v2882 = vld [vmem:[%s2881] sm:$0xff]
        %v2883 = vld [vmem:[%s2881 + $0x8] sm:$0xff]
        %v2884 = vld [vmem:[%s2881 + $0x10] sm:$0xff]
        %v2885 = vld [vmem:[%s2881 + $0x18] sm:$0xff]
        %v2886 = vld [vmem:[%s2881 + $0x20] sm:$0xff]
        %v2887 = vld [vmem:[%s2881 + $0x28] sm:$0xff]
        %v2888 = vld [vmem:[%s2881 + $0x30] sm:$0xff]
        %v2889 = vld [vmem:[%s2881 + $0x38] sm:$0xff]
        %s2890 = scalar_lea.vmem %s5, 1
        %v2891 = vld [vmem:[%s2890] sm:$0x1]
        %v2893 = vlaneseq
        %v2894 = vshrl.u32 %v2893, 7
        %v2895 = vsub.s32 0, %v2894
        %v2896 = vrot.slane %v2891, %v2895
        %v2899 = vsel %vm536, %v2879, 0
        %v2902 = vsel %vm536, %v2880, 0
        %2904 = vmatprep.subr.mxu0 0.0
        %2905 = vmatpush1.msra.mxu0 %v2882
        %2906 = vmatprep.subr.mxu0 0.0
        %2907 = vmatpush1.msra.mxu0 %v2883
        %2908 = vmatprep.subr.mxu0 0.0
        %2909 = vmatpush1.msra.mxu0 %v2884
        %2910 = vmatprep.subr.mxu0 0.0
        %2911 = vmatpush1.msra.mxu0 %v2885
        %2912 = vmatprep.subr.mxu0 0.0
        %2913 = vmatpush1.msra.mxu0 %v2886
        %2914 = vmatprep.subr.mxu0 0.0
        %2915 = vmatpush1.msra.mxu0 %v2887
        %2916 = vmatprep.subr.mxu0 0.0
        %2917 = vmatpush1.msra.mxu0 %v2888
        %2918 = vmatprep.subr.mxu0 0.0
        %2919 = vmatpush1.msra.mxu0 %v2889
        %2920 = vmatprep.subr.mxu0 0.0
        %2921 = vmatpush1.msra.mxu0 0.0
        %2922 = vmatprep.subr.mxu0 0.0
        %2923 = vmatpush1.msra.mxu0 0.0
        %2924 = vmatprep.subr.mxu0 0.0
        %2925 = vmatpush1.msra.mxu0 0.0
        %2926 = vmatprep.subr.mxu0 0.0
        %2927 = vmatpush1.msra.mxu0 0.0
        %2928 = vmatprep.subr.mxu0 0.0
        %2929 = vmatpush1.msra.mxu0 0.0
        %2930 = vmatprep.subr.mxu0 0.0
        %2931 = vmatpush1.msra.mxu0 0.0
        %2932 = vmatprep.subr.mxu0 0.0
        %2933 = vmatpush1.msra.mxu0 0.0
        %2934 = vmatprep.subr.mxu0 0.0
        %2935 = vmatpush1.msra.mxu0 0.0
        %2936 = vmatprep.subr.mxu0 0.0
        %2937 = vmatpush1.msra.mxu0 0.0
        %2938 = vmatprep.subr.mxu0 0.0
        %2939 = vmatpush1.msra.mxu0 0.0
        %2940 = vmatprep.subr.mxu0 0.0
        %2941 = vmatpush1.msra.mxu0 0.0
        %2942 = vmatprep.subr.mxu0 0.0
        %2943 = vmatpush1.msra.mxu0 0.0
        %2944 = vmatprep.subr.mxu0 0.0
        %2945 = vmatpush1.msra.mxu0 0.0
        %2946 = vmatprep.subr.mxu0 0.0
        %2947 = vmatpush1.msra.mxu0 0.0
        %2948 = vmatprep.subr.mxu0 0.0
        %2949 = vmatpush1.msra.mxu0 0.0
        %2950 = vmatprep.subr.mxu0 0.0
        %2951 = vmatpush1.msra.mxu0 0.0
        %2952 = vmatprep.subr.mxu0 0.0
        %2953 = vmatpush1.msra.mxu0 0.0
        %2954 = vmatprep.subr.mxu0 0.0
        %2955 = vmatpush1.msra.mxu0 0.0
        %2956 = vmatprep.subr.mxu0 0.0
        %2957 = vmatpush1.msra.mxu0 0.0
        %2958 = vmatprep.subr.mxu0 0.0
        %2959 = vmatpush1.msra.mxu0 0.0
        %2960 = vmatprep.subr.mxu0 0.0
        %2961 = vmatpush1.msra.mxu0 0.0
        %2962 = vmatprep.subr.mxu0 0.0
        %2963 = vmatpush1.msra.mxu0 0.0
        %2964 = vmatprep.subr.mxu0 0.0
        %2965 = vmatpush1.msra.mxu0 0.0
        %2966 = vmatprep.subr.mxu0 0.0
        %2967 = vmatpush1.msra.mxu0 0.0
        %2968 = vmatprep.mubr.f32.mxu0 0.0
        %2969 = vmatmul.mubr.f32.gmra.mrb[0].mxu0 %v2899
        %v2970 = vpop.f32.mrb[0].mxu0
        %v2971 = vadd.f32 %v2896, %v2970
        %v2972 = vpop.f32.mrb[0].mxu0
        %2973 = vmatprep.mubr.f32.mxu0 0.0
        %2974 = vmatmul.mubr.f32.gmra.mrb[0].mxu0 %v2902
        %v2975 = vpop.f32.mrb[0].mxu0
        %v2976 = vadd.f32 %v2896, %v2975
        %v2977 = vpop.f32.mrb[0].mxu0
        %2978 = vdwg.mxu0
        %v2979 = vadd.f32 %v1893, %v2971
        %v2980 = vadd.f32 %v1894, %v2976
        %s2981 = scalar_lea.vmem %s6, 1
        %v2982 = vld [vmem:[%s2981] sm:$0x1]
        %s2983 = scalar_lea.vmem %s7, 1
        %v2984 = vld [vmem:[%s2983] sm:$0x1]
        %v2985 = vsel %vm536, %v2979, 0.0
        %2986 = vadd.xlane.f32.xlu0 %v2985
        %v2987 = vpop.xlane.xlu0 %2986
        %v2988 = vsel %vm536, %v2980, 0.0
        %2989 = vadd.xlane.f32.xlu0 %v2988
        %v2990 = vpop.xlane.xlu0 %2989
        %v2991 = vmul.f32 %v2987, %v543
        %v2992 = vmul.f32 %v2990, %v543
        %v2993 = vsub.f32 %v2979, %v2991
        %v2994 = vsub.f32 %v2980, %v2992
        %v2995 = vmul.f32 %v2993, %v2993
        %v2996 = vmul.f32 %v2994, %v2994
        %v2997 = vsel %vm536, %v2995, 0.0
        %2998 = vadd.xlane.f32.xlu0 %v2997
        %v2999 = vpop.xlane.xlu0 %2998
        %v3000 = vsel %vm536, %v2996, 0.0
        %3001 = vadd.xlane.f32.xlu0 %v3000
        %v3002 = vpop.xlane.xlu0 %3001
        %v3003 = vmul.f32 %v2999, %v543
        %v3004 = vmul.f32 %v3002, %v543
        %v3005 = vadd.f32 %v3003, 1e-05
        %v3006 = vadd.f32 %v3004, 1e-05
        %v3007 = vrsqrt.pop %v3005
        %v3008 = vrsqrt.pop %v3006
        %v3009 = vmul.f32 %v2993, %v3007
        %v3010 = vmul.f32 %v2994, %v3008
        %v3012 = vlaneseq
        %v3013 = vshrl.u32 %v3012, 7
        %v3014 = vsub.s32 0, %v3013
        %v3015 = vrot.slane %v2982, %v3014
        %v3017 = vmul.f32 %v3009, %v3015
        %v3018 = vmul.f32 %v3010, %v3015
        %v3020 = vlaneseq
        %v3021 = vshrl.u32 %v3020, 7
        %v3022 = vsub.s32 0, %v3021
        %v3023 = vrot.slane %v2984, %v3022
        %v3025 = vadd.f32 %v3017, %v3023
        %v3026 = vadd.f32 %v3018, %v3023
        %s3027 = scalar_lea.vmem %s8, 128
        %v3028 = vld [vmem:[%s3027] sm:$0xff]
        %v3029 = vld [vmem:[%s3027 + $0x8] sm:$0xff]
        %v3030 = vld [vmem:[%s3027 + $0x10] sm:$0xff]
        %v3031 = vld [vmem:[%s3027 + $0x18] sm:$0xff]
        %v3032 = vld [vmem:[%s3027 + $0x20] sm:$0xff]
        %v3033 = vld [vmem:[%s3027 + $0x28] sm:$0xff]
        %v3034 = vld [vmem:[%s3027 + $0x30] sm:$0xff]
        %v3035 = vld [vmem:[%s3027 + $0x38] sm:$0xff]
        %v3036 = vld [vmem:[%s3027 + $0x40] sm:$0xff]
        %v3037 = vld [vmem:[%s3027 + $0x48] sm:$0xff]
        %v3038 = vld [vmem:[%s3027 + $0x50] sm:$0xff]
        %v3039 = vld [vmem:[%s3027 + $0x58] sm:$0xff]
        %v3040 = vld [vmem:[%s3027 + $0x60] sm:$0xff]
        %v3041 = vld [vmem:[%s3027 + $0x68] sm:$0xff]
        %v3042 = vld [vmem:[%s3027 + $0x70] sm:$0xff]
        %v3043 = vld [vmem:[%s3027 + $0x78] sm:$0xff]
        %s3044 = scalar_lea.vmem %s9, 2
        %v3045 = vld [vmem:[%s3044] sm:$0x3]
        %v3047 = vlaneseq
        %v3048 = vshrl.u32 %v3047, 7
        %v3049 = vsub.s32 0, %v3048
        %v3050 = vrot.slane %v3045, %v3049
        %v3051 = vlaneseq
        %v3052 = vshrl.u32 %v3051, 7
        %v3053 = vsub.s32 1, %v3052
        %v3054 = vrot.slane %v3045, %v3053
        %v3058 = vsel %vm536, %v3025, 0
        %v3061 = vsel %vm536, %v3026, 0
        %3063 = vmatprep.subr.mxu0 %v3029
        %3064 = vmatpush1.msra.mxu0 %v3028
        %3065 = vmatprep.subr.mxu0 %v3031
        %3066 = vmatpush1.msra.mxu0 %v3030
        %3067 = vmatprep.subr.mxu0 %v3033
        %3068 = vmatpush1.msra.mxu0 %v3032
        %3069 = vmatprep.subr.mxu0 %v3035
        %3070 = vmatpush1.msra.mxu0 %v3034
        %3071 = vmatprep.subr.mxu0 %v3037
        %3072 = vmatpush1.msra.mxu0 %v3036
        %3073 = vmatprep.subr.mxu0 %v3039
        %3074 = vmatpush1.msra.mxu0 %v3038
        %3075 = vmatprep.subr.mxu0 %v3041
        %3076 = vmatpush1.msra.mxu0 %v3040
        %3077 = vmatprep.subr.mxu0 %v3043
        %3078 = vmatpush1.msra.mxu0 %v3042
        %3079 = vmatprep.subr.mxu0 0.0
        %3080 = vmatpush1.msra.mxu0 0.0
        %3081 = vmatprep.subr.mxu0 0.0
        %3082 = vmatpush1.msra.mxu0 0.0
        %3083 = vmatprep.subr.mxu0 0.0
        %3084 = vmatpush1.msra.mxu0 0.0
        %3085 = vmatprep.subr.mxu0 0.0
        %3086 = vmatpush1.msra.mxu0 0.0
        %3087 = vmatprep.subr.mxu0 0.0
        %3088 = vmatpush1.msra.mxu0 0.0
        %3089 = vmatprep.subr.mxu0 0.0
        %3090 = vmatpush1.msra.mxu0 0.0
        %3091 = vmatprep.subr.mxu0 0.0
        %3092 = vmatpush1.msra.mxu0 0.0
        %3093 = vmatprep.subr.mxu0 0.0
        %3094 = vmatpush1.msra.mxu0 0.0
        %3095 = vmatprep.subr.mxu0 0.0
        %3096 = vmatpush1.msra.mxu0 0.0
        %3097 = vmatprep.subr.mxu0 0.0
        %3098 = vmatpush1.msra.mxu0 0.0
        %3099 = vmatprep.subr.mxu0 0.0
        %3100 = vmatpush1.msra.mxu0 0.0
        %3101 = vmatprep.subr.mxu0 0.0
        %3102 = vmatpush1.msra.mxu0 0.0
        %3103 = vmatprep.subr.mxu0 0.0
        %3104 = vmatpush1.msra.mxu0 0.0
        %3105 = vmatprep.subr.mxu0 0.0
        %3106 = vmatpush1.msra.mxu0 0.0
        %3107 = vmatprep.subr.mxu0 0.0
        %3108 = vmatpush1.msra.mxu0 0.0
        %3109 = vmatprep.subr.mxu0 0.0
        %3110 = vmatpush1.msra.mxu0 0.0
        %3111 = vmatprep.subr.mxu0 0.0
        %3112 = vmatpush1.msra.mxu0 0.0
        %3113 = vmatprep.subr.mxu0 0.0
        %3114 = vmatpush1.msra.mxu0 0.0
        %3115 = vmatprep.subr.mxu0 0.0
        %3116 = vmatpush1.msra.mxu0 0.0
        %3117 = vmatprep.subr.mxu0 0.0
        %3118 = vmatpush1.msra.mxu0 0.0
        %3119 = vmatprep.subr.mxu0 0.0
        %3120 = vmatpush1.msra.mxu0 0.0
        %3121 = vmatprep.subr.mxu0 0.0
        %3122 = vmatpush1.msra.mxu0 0.0
        %3123 = vmatprep.subr.mxu0 0.0
        %3124 = vmatpush1.msra.mxu0 0.0
        %3125 = vmatprep.subr.mxu0 0.0
        %3126 = vmatpush1.msra.mxu0 0.0
        %3127 = vmatprep.mubr.f32.mxu0 0.0
        %3128 = vmatmul.mubr.f32.gmra.mrb[0].mxu0 %v3058
        %v3129 = vpop.f32.mrb[0].mxu0
        %v3130 = vadd.f32 %v3050, %v3129
        %v3131 = vpop.f32.mrb[0].mxu0
        %v3132 = vadd.f32 %v3054, %v3131
        %3133 = vmatprep.mubr.f32.mxu0 0.0
        %3134 = vmatmul.mubr.f32.gmra.mrb[0].mxu0 %v3061
        %v3135 = vpop.f32.mrb[0].mxu0
        %v3136 = vadd.f32 %v3050, %v3135
        %v3137 = vpop.f32.mrb[0].mxu0
        %v3138 = vadd.f32 %v3054, %v3137
        %3139 = vdwg.mxu0
        %v3140 = vmax.f32 %v3130, 0.0
        %v3141 = vmax.f32 %v3132, 0.0
        %v3142 = vmax.f32 %v3136, 0.0
        %v3143 = vmax.f32 %v3138, 0.0
        %s3144 = scalar_lea.vmem %s10, 256
        %v3145 = vld [vmem:[%s3144] sm:$0xff]
        %v3146 = vld [vmem:[%s3144 + $0x8] sm:$0xff]
        %v3147 = vld [vmem:[%s3144 + $0x10] sm:$0xff]
        %v3148 = vld [vmem:[%s3144 + $0x18] sm:$0xff]
        %v3149 = vld [vmem:[%s3144 + $0x20] sm:$0xff]
        %v3150 = vld [vmem:[%s3144 + $0x28] sm:$0xff]
        %v3151 = vld [vmem:[%s3144 + $0x30] sm:$0xff]
        %v3152 = vld [vmem:[%s3144 + $0x38] sm:$0xff]
        %v3153 = vld [vmem:[%s3144 + $0x40] sm:$0xff]
        %v3154 = vld [vmem:[%s3144 + $0x48] sm:$0xff]
        %v3155 = vld [vmem:[%s3144 + $0x50] sm:$0xff]
        %v3156 = vld [vmem:[%s3144 + $0x58] sm:$0xff]
        %v3157 = vld [vmem:[%s3144 + $0x60] sm:$0xff]
        %v3158 = vld [vmem:[%s3144 + $0x68] sm:$0xff]
        %v3159 = vld [vmem:[%s3144 + $0x70] sm:$0xff]
        %v3160 = vld [vmem:[%s3144 + $0x78] sm:$0xff]
        %v3161 = vld [vmem:[%s3144 + $0x80] sm:$0xff]
        %v3162 = vld [vmem:[%s3144 + $0x88] sm:$0xff]
        %v3163 = vld [vmem:[%s3144 + $0x90] sm:$0xff]
        %v3164 = vld [vmem:[%s3144 + $0x98] sm:$0xff]
        %v3165 = vld [vmem:[%s3144 + $0xa0] sm:$0xff]
        %v3166 = vld [vmem:[%s3144 + $0xa8] sm:$0xff]
        %v3167 = vld [vmem:[%s3144 + $0xb0] sm:$0xff]
        %v3168 = vld [vmem:[%s3144 + $0xb8] sm:$0xff]
        %v3169 = vld [vmem:[%s3144 + $0xc0] sm:$0xff]
        %v3170 = vld [vmem:[%s3144 + $0xc8] sm:$0xff]
        %v3171 = vld [vmem:[%s3144 + $0xd0] sm:$0xff]
        %v3172 = vld [vmem:[%s3144 + $0xd8] sm:$0xff]
        %v3173 = vld [vmem:[%s3144 + $0xe0] sm:$0xff]
        %v3174 = vld [vmem:[%s3144 + $0xe8] sm:$0xff]
        %v3175 = vld [vmem:[%s3144 + $0xf0] sm:$0xff]
        %v3176 = vld [vmem:[%s3144 + $0xf8] sm:$0xff]
        %s3177 = scalar_lea.vmem %s11, 1
        %v3178 = vld [vmem:[%s3177] sm:$0x1]
        %v3180 = vlaneseq
        %v3181 = vshrl.u32 %v3180, 7
        %v3182 = vsub.s32 0, %v3181
        %v3183 = vrot.slane %v3178, %v3182
        %3185 = vmatprep.subr.mxu0 0.0
        %3186 = vmatpush1.msra.mxu0 %v3145
        %3187 = vmatprep.subr.mxu0 0.0
        %3188 = vmatpush1.msra.mxu0 %v3146
        %3189 = vmatprep.subr.mxu0 0.0
        %3190 = vmatpush1.msra.mxu0 %v3147
        %3191 = vmatprep.subr.mxu0 0.0
        %3192 = vmatpush1.msra.mxu0 %v3148
        %3193 = vmatprep.subr.mxu0 0.0
        %3194 = vmatpush1.msra.mxu0 %v3149
        %3195 = vmatprep.subr.mxu0 0.0
        %3196 = vmatpush1.msra.mxu0 %v3150
        %3197 = vmatprep.subr.mxu0 0.0
        %3198 = vmatpush1.msra.mxu0 %v3151
        %3199 = vmatprep.subr.mxu0 0.0
        %3200 = vmatpush1.msra.mxu0 %v3152
        %3201 = vmatprep.subr.mxu0 0.0
        %3202 = vmatpush1.msra.mxu0 %v3153
        %3203 = vmatprep.subr.mxu0 0.0
        %3204 = vmatpush1.msra.mxu0 %v3154
        %3205 = vmatprep.subr.mxu0 0.0
        %3206 = vmatpush1.msra.mxu0 %v3155
        %3207 = vmatprep.subr.mxu0 0.0
        %3208 = vmatpush1.msra.mxu0 %v3156
        %3209 = vmatprep.subr.mxu0 0.0
        %3210 = vmatpush1.msra.mxu0 %v3157
        %3211 = vmatprep.subr.mxu0 0.0
        %3212 = vmatpush1.msra.mxu0 %v3158
        %3213 = vmatprep.subr.mxu0 0.0
        %3214 = vmatpush1.msra.mxu0 %v3159
        %3215 = vmatprep.subr.mxu0 0.0
        %3216 = vmatpush1.msra.mxu0 %v3160
        %3217 = vmatprep.subr.mxu0 0.0
        %3218 = vmatpush1.msra.mxu0 %v3161
        %3219 = vmatprep.subr.mxu0 0.0
        %3220 = vmatpush1.msra.mxu0 %v3162
        %3221 = vmatprep.subr.mxu0 0.0
        %3222 = vmatpush1.msra.mxu0 %v3163
        %3223 = vmatprep.subr.mxu0 0.0
        %3224 = vmatpush1.msra.mxu0 %v3164
        %3225 = vmatprep.subr.mxu0 0.0
        %3226 = vmatpush1.msra.mxu0 %v3165
        %3227 = vmatprep.subr.mxu0 0.0
        %3228 = vmatpush1.msra.mxu0 %v3166
        %3229 = vmatprep.subr.mxu0 0.0
        %3230 = vmatpush1.msra.mxu0 %v3167
        %3231 = vmatprep.subr.mxu0 0.0
        %3232 = vmatpush1.msra.mxu0 %v3168
        %3233 = vmatprep.subr.mxu0 0.0
        %3234 = vmatpush1.msra.mxu0 %v3169
        %3235 = vmatprep.subr.mxu0 0.0
        %3236 = vmatpush1.msra.mxu0 %v3170
        %3237 = vmatprep.subr.mxu0 0.0
        %3238 = vmatpush1.msra.mxu0 %v3171
        %3239 = vmatprep.subr.mxu0 0.0
        %3240 = vmatpush1.msra.mxu0 %v3172
        %3241 = vmatprep.subr.mxu0 0.0
        %3242 = vmatpush1.msra.mxu0 %v3173
        %3243 = vmatprep.subr.mxu0 0.0
        %3244 = vmatpush1.msra.mxu0 %v3174
        %3245 = vmatprep.subr.mxu0 0.0
        %3246 = vmatpush1.msra.mxu0 %v3175
        %3247 = vmatprep.subr.mxu0 0.0
        %3248 = vmatpush1.msra.mxu0 %v3176
        %3249 = vmatprep.mubr.f32.mxu0 %v3141
        %3250 = vmatmul.mubr.f32.gmra.mrb[0].mxu0 %v3140
        %v3251 = vpop.f32.mrb[0].mxu0
        %v3252 = vadd.f32 %v3183, %v3251
        %v3253 = vpop.f32.mrb[0].mxu0
        %3254 = vmatprep.mubr.f32.mxu0 %v3143
        %3255 = vmatmul.mubr.f32.gmra.mrb[0].mxu0 %v3142
        %v3256 = vpop.f32.mrb[0].mxu0
        %v3257 = vadd.f32 %v3183, %v3256
        %v3258 = vpop.f32.mrb[0].mxu0
        %3259 = vdwg.mxu0
        %v3260 = vadd.f32 %v2979, %v3252
        %v3261 = vadd.f32 %v2980, %v3257
        %v3262 = vld [vmem:[%s12] sm:$0x1]
        %v3263 = vld [vmem:[%s13] sm:$0x1]
        %v3264 = vsel %vm536, %v3260, 0.0
        %3265 = vadd.xlane.f32.xlu0 %v3264
        %v3266 = vpop.xlane.xlu0 %3265
        %v3267 = vsel %vm536, %v3261, 0.0
        %3268 = vadd.xlane.f32.xlu0 %v3267
        %v3269 = vpop.xlane.xlu0 %3268
        %v3270 = vmul.f32 %v3266, %v543
        %v3271 = vmul.f32 %v3269, %v543
        %v3272 = vsub.f32 %v3260, %v3270
        %v3273 = vsub.f32 %v3261, %v3271
        %v3274 = vmul.f32 %v3272, %v3272
        %v3275 = vmul.f32 %v3273, %v3273
        %v3276 = vsel %vm536, %v3274, 0.0
        %3277 = vadd.xlane.f32.xlu0 %v3276
        %v3278 = vpop.xlane.xlu0 %3277
        %v3279 = vsel %vm536, %v3275, 0.0
        %3280 = vadd.xlane.f32.xlu0 %v3279
        %v3281 = vpop.xlane.xlu0 %3280
        %v3282 = vmul.f32 %v3278, %v543
        %v3283 = vmul.f32 %v3281, %v543
        %v3284 = vadd.f32 %v3282, 1e-05
        %v3285 = vadd.f32 %v3283, 1e-05
        %v3286 = vrsqrt.pop %v3284
        %v3287 = vrsqrt.pop %v3285
        %v3288 = vmul.f32 %v3272, %v3286
        %v3289 = vmul.f32 %v3273, %v3287
        %v3291 = vlaneseq
        %v3292 = vshrl.u32 %v3291, 7
        %v3293 = vsub.s32 0, %v3292
        %v3294 = vrot.slane %v3262, %v3293
        %v3296 = vmul.f32 %v3288, %v3294
        %v3297 = vmul.f32 %v3289, %v3294
        %v3299 = vlaneseq
        %v3300 = vshrl.u32 %v3299, 7
        %v3301 = vsub.s32 0, %v3300
        %v3302 = vrot.slane %v3263, %v3301
        %v3304 = vadd.f32 %v3296, %v3302
        %v3305 = vadd.f32 %v3297, %v3302
        %v3306 = vld [vmem:[%s14] sm:$0xff]
        %v3307 = vld [vmem:[%s14 + $0x8] sm:$0xff]
        %v3308 = vld [vmem:[%s14 + $0x10] sm:$0xff]
        %v3309 = vld [vmem:[%s14 + $0x18] sm:$0xff]
        %v3310 = vld [vmem:[%s14 + $0x20] sm:$0xff]
        %v3311 = vld [vmem:[%s14 + $0x28] sm:$0xff]
        %v3312 = vld [vmem:[%s14 + $0x30] sm:$0xff]
        %v3313 = vld [vmem:[%s14 + $0x38] sm:$0xff]
        %v3314 = vld [vmem:[%s15] sm:$0x1]
        %v3316 = vlaneseq
        %v3317 = vshrl.u32 %v3316, 7
        %v3318 = vsub.s32 0, %v3317
        %v3319 = vrot.slane %v3314, %v3318
        %v3322 = vsel %vm536, %v3304, 0
        %v3325 = vsel %vm536, %v3305, 0
        %3327 = vmatprep.subr.mxu0 0.0
        %3328 = vmatpush1.msra.mxu0 %v3306
        %3329 = vmatprep.subr.mxu0 0.0
        %3330 = vmatpush1.msra.mxu0 %v3307
        %3331 = vmatprep.subr.mxu0 0.0
        %3332 = vmatpush1.msra.mxu0 %v3308
        %3333 = vmatprep.subr.mxu0 0.0
        %3334 = vmatpush1.msra.mxu0 %v3309
        %3335 = vmatprep.subr.mxu0 0.0
        %3336 = vmatpush1.msra.mxu0 %v3310
        %3337 = vmatprep.subr.mxu0 0.0
        %3338 = vmatpush1.msra.mxu0 %v3311
        %3339 = vmatprep.subr.mxu0 0.0
        %3340 = vmatpush1.msra.mxu0 %v3312
        %3341 = vmatprep.subr.mxu0 0.0
        %3342 = vmatpush1.msra.mxu0 %v3313
        %3343 = vmatprep.subr.mxu0 0.0
        %3344 = vmatpush1.msra.mxu0 0.0
        %3345 = vmatprep.subr.mxu0 0.0
        %3346 = vmatpush1.msra.mxu0 0.0
        %3347 = vmatprep.subr.mxu0 0.0
        %3348 = vmatpush1.msra.mxu0 0.0
        %3349 = vmatprep.subr.mxu0 0.0
        %3350 = vmatpush1.msra.mxu0 0.0
        %3351 = vmatprep.subr.mxu0 0.0
        %3352 = vmatpush1.msra.mxu0 0.0
        %3353 = vmatprep.subr.mxu0 0.0
        %3354 = vmatpush1.msra.mxu0 0.0
        %3355 = vmatprep.subr.mxu0 0.0
        %3356 = vmatpush1.msra.mxu0 0.0
        %3357 = vmatprep.subr.mxu0 0.0
        %3358 = vmatpush1.msra.mxu0 0.0
        %3359 = vmatprep.subr.mxu0 0.0
        %3360 = vmatpush1.msra.mxu0 0.0
        %3361 = vmatprep.subr.mxu0 0.0
        %3362 = vmatpush1.msra.mxu0 0.0
        %3363 = vmatprep.subr.mxu0 0.0
        %3364 = vmatpush1.msra.mxu0 0.0
        %3365 = vmatprep.subr.mxu0 0.0
        %3366 = vmatpush1.msra.mxu0 0.0
        %3367 = vmatprep.subr.mxu0 0.0
        %3368 = vmatpush1.msra.mxu0 0.0
        %3369 = vmatprep.subr.mxu0 0.0
        %3370 = vmatpush1.msra.mxu0 0.0
        %3371 = vmatprep.subr.mxu0 0.0
        %3372 = vmatpush1.msra.mxu0 0.0
        %3373 = vmatprep.subr.mxu0 0.0
        %3374 = vmatpush1.msra.mxu0 0.0
        %3375 = vmatprep.subr.mxu0 0.0
        %3376 = vmatpush1.msra.mxu0 0.0
        %3377 = vmatprep.subr.mxu0 0.0
        %3378 = vmatpush1.msra.mxu0 0.0
        %3379 = vmatprep.subr.mxu0 0.0
        %3380 = vmatpush1.msra.mxu0 0.0
        %3381 = vmatprep.subr.mxu0 0.0
        %3382 = vmatpush1.msra.mxu0 0.0
        %3383 = vmatprep.subr.mxu0 0.0
        %3384 = vmatpush1.msra.mxu0 0.0
        %3385 = vmatprep.subr.mxu0 0.0
        %3386 = vmatpush1.msra.mxu0 0.0
        %3387 = vmatprep.subr.mxu0 0.0
        %3388 = vmatpush1.msra.mxu0 0.0
        %3389 = vmatprep.subr.mxu0 0.0
        %3390 = vmatpush1.msra.mxu0 0.0
        %3391 = vmatprep.mubr.f32.mxu0 0.0
        %3392 = vmatmul.mubr.f32.gmra.mrb[0].mxu0 %v3322
        %v3393 = vpop.f32.mrb[0].mxu0
        %v3394 = vadd.f32 %v3319, %v3393
        %v3395 = vpop.f32.mrb[0].mxu0
        %3396 = vmatprep.mubr.f32.mxu0 0.0
        %3397 = vmatmul.mubr.f32.gmra.mrb[0].mxu0 %v3325
        %v3398 = vpop.f32.mrb[0].mxu0
        %v3399 = vadd.f32 %v3319, %v3398
        %v3400 = vpop.f32.mrb[0].mxu0
        %3401 = vdwg.mxu0
        %3402 = vst [vmem:[%s515] sm:$0xff] %v3394
        %3403 = vst [vmem:[%s515 + $0x8] sm:$0xff] %v3399
        %s3404 = sand.u32 %s379, 1
        %s3405 = scalar_lea.sflag [#allocation3], %s3404
        %s3406 = sand.u32 %s379, 1
        %s3407 = smul.addr %s3406, 16
        %s3408 = scalar_lea.vmem [#allocation2], %s3407
        // Predicated region
        $region85: #{bigram_forward.1} parent=83 // pred_check
          %p3409 = pneg %p389
        $region86: #{bigram_forward.1} parent=83 // pred_check_branch
          %3411 = sbr.rel (%p3409) target = $region88
        $region87: #{bigram_forward.1} parent=83 // pred_region
          %s3412 = smul.u32 2, %s30
          %s3414 = ssub.s32 256, 256
          %3415 = vsyncadd %s3405, %s3414
          %s3416 = smul.addr %s3412, 128
          %s3417 = scalar_lea.hbm %s16, %s3416
          %s3418 = sshll.u32 %s3408, 4
          %s3419 = int_to_ptr.vmem [resolvable:$true] %s3418
          %3424 = dma.vmem_to_hbm [thread:$0]  %s3419, 256, %s3417, %s3405, 128, 128, 8
        $region88: #{bigram_forward.1} parent=83 // pred_fallthru
          _
      $region84: #{bigram_forward.1} parent=5 // pred_fallthru
        _
      %p3425 = scmp.le.s32.totalorder 2, %s25
      // Predicated region
      $region89: #{bigram_forward.1} parent=5 // pred_check
        %p3426 = pneg %p3425
      $region90: #{bigram_forward.1} parent=5 // pred_check_branch
        %3428 = sbr.rel (%p3426) target = $region92
      $region91: #{bigram_forward.1} parent=5 // pred_region
        %s3429 = ssub.s32 %s25, 2
        // Predicated region
        $region93: #{bigram_forward.1} parent=91 // pred_check
          %p3430 = pneg %p395
        $region94: #{bigram_forward.1} parent=91 // pred_check_branch
          %3432 = sbr.rel (%p3430) target = $region96
        $region95: #{bigram_forward.1} parent=91 // pred_region
          %s3433 = sand.u32 %s380, 1
          %s3434 = scalar_lea.sflag [#allocation3], %s3433
          %s3435 = sand.u32 %s380, 1
          %s3436 = smul.addr %s3435, 16
          %s3437 = scalar_lea.vmem [#allocation2], %s3436
          %3438 = dma.done %s3434, 256
        $region96: #{bigram_forward.1} parent=91 // pred_fallthru
          _
      $region92: #{bigram_forward.1} parent=5 // pred_fallthru
        _
    $region6: #{bigram_forward.1} parent=1 // loop_footer
      %s29 = sadd.s32 1, %s25
    $region7: #{bigram_forward.1} parent=1 // loop_footer_branch
      %24 = sbr.rel target = $region3
    $region8: #{bigram_forward.1} parent=1 // loop_exit
      _
    %3439 = vsyncpa [#allocation3], 1
    %s3440 = scalar_lea.sflag [#allocation3], 1
    %3441 = vsyncpa %s3440, 1

</llo_original>
